<compile_context>
chip_gen: v5e
topology: v5e:2x2
jax: 0.10.0
libtpu: 0.0.40
codegen_flags: <defaults>
</compile_context>

<pallas_src>
import numpy as np
import jax
import jax.numpy as jnp
from jax import lax
from jax.experimental import pallas as pl
from jax.experimental.pallas import tpu as pltpu

# ----- model hyper-parameters: RetNet(Lx=4, Ly=4) with the module defaults -----
LX, LY = 4, 4
N = LX * LY                # sequence length
BATCH = 2
VOCAB = 2
D = 12                     # decoder_embed_dim
HEADS = 3                  # decoder_retention_heads
KD = D // HEADS            # per-head key dim = 4
VDIM = 2 * D               # value embed dim  # TODO(synk): torchscale-version-dependent (2x embed assumed)
HD = VDIM // HEADS         # per-head value dim = 8
FFN = 300                  # decoder_ffn_embed_dim
FFN_PAD = 384              # lane-padded FFN dim (3 x 128)
PROJ_W = 4 * D + 2 * VDIM  # fused [q | q_rot | k | k_rot | v | g] width = 96
LAYERS = 3
EPS = 1e-5
SCALING = KD ** -0.5       # 0.5 (exact power of two)


# ----------------------------- shared math -------------------------------------
def _rms_norm(x, w):
    return x * lax.rsqrt(jnp.mean(x * x, axis=-1, keepdims=True) + EPS) * w


def _layer_norm(x, w, b):
    mu = jnp.mean(x, axis=-1, keepdims=True)
    var = jnp.mean((x - mu) ** 2, axis=-1, keepdims=True)
    return (x - mu) * lax.rsqrt(var + EPS) * w + b


def _gelu(x):
    # TODO(synk): torch F.gelu defaults to exact erf; tanh approximation used here.
    c = np.float32(np.sqrt(2.0 / np.pi))
    return 0.5 * x * (1.0 + jnp.tanh(c * (x + 0.044715 * x * x * x)))


# ----------------------------- Pallas kernel -----------------------------------
def _retnet_kernel(tok_ref, sincos_ref, mask_ref, cvec_ref, wout_ref,
                   lin_ref, lout_ref, lvec_ref, out_ref):
    rows = tok_ref.shape[0]                          # B * N fused rows

    cvec = cvec_ref[...]                             # (3, D): [emb0, emb1-emb0, final_ln_w]
    emb0, embd, final_w = cvec[0:1, :], cvec[1:2, :], cvec[2:3, :]

    # embedding as a VPU select (VOCAB == 2): x = emb[0] + tok * (emb[1] - emb[0])
    x = emb0 + tok_ref[...] * embd                   # (rows, D)

    # constant lane masks (hoisted out of the layer loop)
    dlane = lax.broadcasted_iota(jnp.int32, (1, D), 1)
    vlane = lax.broadcasted_iota(jnp.int32, (1, VDIM), 1)
    flane = lax.broadcasted_iota(jnp.int32, (1, FFN_PAD), 1)
    qmask = [jnp.logical_and(dlane >= h * KD, dlane < (h + 1) * KD).astype(jnp.float32)
             for h in range(HEADS)]
    vmask = [jnp.logical_and(vlane >= h * HD, vlane < (h + 1) * HD).astype(jnp.float32)
             for h in range(HEADS)]
    ffn_mask = (flane < FFN).astype(jnp.float32)     # real (non-padded) FFN lanes

    for l in range(LAYERS):
        lvec = lvec_ref[l]                           # (6, FFN_PAD) packed per-layer vectors
        ln1_w, ln2_w, fc2_b = lvec[0:1, :D], lvec[1:2, :D], lvec[2:3, :D]
        fc1_b, ffn_ln_w, ffn_ln_b = lvec[3:4, :], lvec[4:5, :], lvec[5:6, :]

        # ------------- multi-scale retention block (pre-RMSNorm + residual) -------------
        res = x
        h = _rms_norm(x, ln1_w)
        w_big = lin_ref[l, :, pl.ds(FFN_PAD, PROJ_W)]                    # (D, 96)
        proj = jnp.dot(h, w_big, preferred_element_type=jnp.float32)     # (rows, 96)
        sc = sincos_ref[...]
        sin, cos = sc[:, :D], sc[:, D:]
        qr = proj[:, 0 * D:1 * D] * cos + proj[:, 1 * D:2 * D] * sin     # rotated q
        kr = proj[:, 2 * D:3 * D] * cos + proj[:, 3 * D:4 * D] * sin     # rotated, scaled k
        v = proj[:, 4 * D:4 * D + VDIM]
        g = proj[:, 4 * D + VDIM:4 * D + 2 * VDIM]

        # per-head retention with lane-masked full-width operands: each head's output
        # lands exactly in its own HD lanes of `oh`, cross-head lanes are exact zeros.
        oh = jnp.zeros((rows, VDIM), jnp.float32)
        for hh in range(HEADS):
            qk = lax.dot_general(qr * qmask[hh], kr, (((1,), (1,)), ((), ())),
                                 preferred_element_type=jnp.float32)     # (rows, rows)
            qk = qk * mask_ref[hh]                                       # block-diag decay
            denom = jnp.clip(jnp.sum(jnp.abs(qk), axis=-1, keepdims=True), 1.0, 5e4)
            qk = qk * pl.reciprocal(denom, approx=True)
            oh = oh + jnp.dot(qk, v * vmask[hh], preferred_element_type=jnp.float32)

        # per-head group norm (RMSNorm over each head's HD lanes, no affine)
        sq = oh * oh
        scale = jnp.zeros((rows, VDIM), jnp.float32)
        for hh in range(HEADS):
            mean_h = jnp.sum(sq * vmask[hh], axis=-1, keepdims=True) * (1.0 / HD)
            scale = scale + vmask[hh] * lax.rsqrt(mean_h + EPS)
        gated = (g * jax.nn.sigmoid(g)) * (oh * scale)                   # swish gate
        wo = lout_ref[l, pl.ds(0, VDIM), :]                              # (VDIM, D)
        x = res + jnp.dot(gated, wo, preferred_element_type=jnp.float32)

        # ------------- FFN block (pre-RMSNorm -> fc1 -> gelu -> sub-LN -> fc2) ----------
        res = x
        h2 = _rms_norm(x, ln2_w)
        fc1_w = lin_ref[l, :, pl.ds(0, FFN_PAD)]                         # (D, FFN_PAD)
        h2 = jnp.dot(h2, fc1_w, preferred_element_type=jnp.float32) + fc1_b
        h2 = _gelu(h2)                                                   # padded lanes stay 0
        # sub-LayerNorm over the 300 real lanes (divisor 300, padded lanes masked)
        mu = jnp.sum(h2, axis=-1, keepdims=True) * (1.0 / FFN)
        dv = (h2 - mu) * ffn_mask
        var = jnp.sum(dv * dv, axis=-1, keepdims=True) * (1.0 / FFN)
        h2 = (h2 - mu) * lax.rsqrt(var + EPS) * ffn_ln_w + ffn_ln_b      # padded lanes -> 0
        fc2_w = lout_ref[l, pl.ds(VDIM, FFN_PAD), :]                     # (FFN_PAD, D)
        x = res + jnp.dot(h2, fc2_w, preferred_element_type=jnp.float32) + fc2_b

    # final RMSNorm, output projection, log_softmax
    x = _rms_norm(x, final_w)
    logits = jnp.dot(x, wout_ref[...], preferred_element_type=jnp.float32)  # (rows, VOCAB)
    m = jnp.max(logits, axis=-1, keepdims=True)
    lse = jnp.log(jnp.sum(jnp.exp(logits - m), axis=-1, keepdims=True)) + m
    out_ref[...] = logits - lse


# ----------------------------- parameter packing (wrapper side) ----------------
def _rotate_every_two_cols(w):
    """Fold rotate_every_two into a weight's output features: W_rot = W @ rrot (exact)."""
    a = w[..., 0::2]
    b = w[..., 1::2]
    return jnp.stack([-b, a], axis=-1).reshape(w.shape)


def pack_params(p):
    wq = p["wq"]
    wk = p["wk"] * SCALING                                   # fold key scaling (exact, 0.5)
    w_big = jnp.concatenate(
        [wq, _rotate_every_two_cols(wq), wk, _rotate_every_two_cols(wk),
         p["wv"], p["wg"]], axis=-1)                         # (L, D, 96)
    fc1_pad = jnp.pad(p["fc1_w"], ((0, 0), (0, 0), (0, FFN_PAD - FFN)))
    lin = jnp.concatenate([fc1_pad, w_big], axis=-1)         # (L, D, FFN_PAD + 96)
    fc2_pad = jnp.pad(p["fc2_w"], ((0, 0), (0, FFN_PAD - FFN), (0, 0)))
    lout = jnp.concatenate([p["wo"], fc2_pad], axis=1)       # (L, VDIM + FFN_PAD, D)

    def padv(v):                                             # (L, 1, n) -> (L, 1, FFN_PAD)
        return jnp.pad(v, ((0, 0), (0, 0), (0, FFN_PAD - v.shape[-1])))

    lvec = jnp.concatenate(
        [padv(p["ln1_w"]), padv(p["ln2_w"]), padv(p["fc2_b"]),
         padv(p["fc1_b"]), padv(p["ffn_ln_w"]), padv(p["ffn_ln_b"])], axis=1)  # (L, 6, FFN_PAD)

    sincos = jnp.concatenate([jnp.tile(p["sin"], (BATCH, 1)),
                              jnp.tile(p["cos"], (BATCH, 1))], axis=-1)        # (B*N, 2D)
    mask_bd = jnp.zeros((HEADS, BATCH * N, BATCH * N), jnp.float32)
    for b in range(BATCH):
        mask_bd = mask_bd.at[:, b * N:(b + 1) * N, b * N:(b + 1) * N].set(p["mask"])
    cvec = jnp.concatenate([p["emb"][0:1], p["emb"][1:2] - p["emb"][0:1],
                            p["final_ln_w"]], axis=0)                          # (3, D)
    return dict(sincos=sincos, mask=mask_bd, cvec=cvec, w_out=p["w_out"],
                lin=lin, lout=lout, lvec=lvec)


def retnet_forward(tokens, packed):
    """tokens: (B, N) int -> (B, N, VOCAB) log-probs."""
    b = tokens.shape[0]
    shifted = jnp.concatenate(
        [jnp.zeros((b, 1), tokens.dtype), tokens[:, :-1]], axis=1)
    tok = shifted.reshape(b * N, 1).astype(jnp.float32)
    inputs = [tok, packed["sincos"], packed["mask"], packed["cvec"],
              packed["w_out"], packed["lin"], packed["lout"], packed["lvec"]]
    vmem = pltpu.MemorySpace.VMEM
    out = pl.pallas_call(
        _retnet_kernel,
        out_shape=jax.ShapeDtypeStruct((b * N, VOCAB), jnp.float32),
        in_specs=[pl.BlockSpec(memory_space=vmem)] * len(inputs),
        out_specs=pl.BlockSpec(memory_space=vmem),
    )(*inputs)
    return out.reshape(b, N, VOCAB)


# ----------------------------- deterministic parameter init --------------------
def init_params(key):
    ks = jax.random.split(key, 10)

    def nrm(k, shape, std=0.02):
        return (std * jax.random.normal(k, shape)).astype(jnp.float32)

    params = {}
    params["emb"] = nrm(ks[0], (VOCAB, D), 1.0)          # nn.Embedding(2, 12)

    # --- RetNetRelPos constants (not learned) ---
    angle = 1.0 / (10000.0 ** np.linspace(0.0, 1.0, KD // 2))
    angle = np.repeat(angle, 2)                           # (KD,)
    idx = np.arange(N)[:, None] * angle[None, :]          # (N, KD)
    params["sin"] = jnp.asarray(np.tile(np.sin(idx), (1, HEADS)), jnp.float32)  # (N, D)
    params["cos"] = jnp.asarray(np.tile(np.cos(idx), (1, HEADS)), jnp.float32)
    rrot = np.zeros((D, D), np.float32)                   # rotate_every_two as matmul
    for pix in range(D // 2):
        rrot[2 * pix + 1, 2 * pix] = -1.0                 # out[2p]   = -in[2p+1]
        rrot[2 * pix, 2 * pix + 1] = 1.0                  # out[2p+1] =  in[2p]
    params["rrot"] = jnp.asarray(rrot)
    decay = np.log(1.0 - 2.0 ** (-5.0 - np.arange(HEADS, dtype=np.float64)))
    diff = np.arange(N)[:, None] - np.arange(N)[None, :]
    dmask = np.where(diff[None] >= 0, np.exp(decay[:, None, None] * diff[None]), 0.0)
    dmask = dmask / np.sqrt(dmask.sum(-1, keepdims=True))
    params["mask"] = jnp.asarray(dmask, jnp.float32)      # (H, N, N)

    # --- per-layer learned weights (stacked over layers, stored as (in, out)) ---
    params["wq"] = nrm(ks[1], (LAYERS, D, D))
    params["wk"] = nrm(ks[2], (LAYERS, D, D))
    params["wv"] = nrm(ks[3], (LAYERS, D, VDIM))
    params["wg"] = nrm(ks[4], (LAYERS, D, VDIM))
    params["wo"] = nrm(ks[5], (LAYERS, VDIM, D))
    params["ln1_w"] = jnp.ones((LAYERS, 1, D), jnp.float32)
    params["ln2_w"] = jnp.ones((LAYERS, 1, D), jnp.float32)
    params["fc1_w"] = nrm(ks[6], (LAYERS, D, FFN))
    params["fc1_b"] = jnp.zeros((LAYERS, 1, FFN), jnp.float32)
    params["ffn_ln_w"] = jnp.ones((LAYERS, 1, FFN), jnp.float32)
    params["ffn_ln_b"] = jnp.zeros((LAYERS, 1, FFN), jnp.float32)
    params["fc2_w"] = nrm(ks[7], (LAYERS, FFN, D))
    params["fc2_b"] = jnp.zeros((LAYERS, 1, D), jnp.float32)
    params["final_ln_w"] = jnp.ones((1, D), jnp.float32)
    params["w_out"] = nrm(ks[8], (D, VOCAB), D ** -0.5)   # output proj, bias=False
    return params


# ----------------------------- pure-JAX reference (unfused / unpadded params) --
def _shift_and_onehot(tokens):
    b = tokens.shape[0]
    shifted = jnp.concatenate(
        [jnp.zeros((b, 1), tokens.dtype), tokens[:, :-1]], axis=1).astype(jnp.int32)
    return jax.nn.one_hot(shifted, VOCAB, dtype=jnp.float32)


def _seq_forward_ref(onehot, p):
    x = jnp.dot(onehot, p["emb"], preferred_element_type=jnp.float32)
    sin, cos, rrot = p["sin"], p["cos"], p["rrot"]
    for l in range(LAYERS):
        res = x
        h = _rms_norm(x, p["ln1_w"][l])
        q = jnp.dot(h, p["wq"][l], preferred_element_type=jnp.float32)
        k = jnp.dot(h, p["wk"][l], preferred_element_type=jnp.float32) * SCALING
        v = jnp.dot(h, p["wv"][l], preferred_element_type=jnp.float32)
        g = jnp.dot(h, p["wg"][l], preferred_element_type=jnp.float32)
        qr = q * cos + jnp.dot(q, rrot, preferred_element_type=jnp.float32) * sin
        kr = k * cos + jnp.dot(k, rrot, preferred_element_type=jnp.float32) * sin
        o_proj = jnp.zeros((x.shape[0], D), jnp.float32)
        for hh in range(HEADS):
            qh = qr[:, hh * KD:(hh + 1) * KD]
            kh = kr[:, hh * KD:(hh + 1) * KD]
            vh = v[:, hh * HD:(hh + 1) * HD]
            qk = jnp.dot(qh, kh.T, preferred_element_type=jnp.float32) * p["mask"][hh]
            denom = jnp.clip(jnp.sum(jnp.abs(qk), axis=-1, keepdims=True), 1.0, 5e4)
            qk = qk / denom
            oh = jnp.dot(qk, vh, preferred_element_type=jnp.float32)
            oh = oh * lax.rsqrt(jnp.mean(oh * oh, axis=-1, keepdims=True) + EPS)
            gh = g[:, hh * HD:(hh + 1) * HD]
            gated = gh * jax.nn.sigmoid(gh) * oh
            o_proj = o_proj + jnp.dot(gated, p["wo"][l][hh * HD:(hh + 1) * HD, :],
                                      preferred_element_type=jnp.float32)
        x = res + o_proj
        res = x
        h = _rms_norm(x, p["ln2_w"][l])
        h = jnp.dot(h, p["fc1_w"][l], preferred_element_type=jnp.float32) + p["fc1_b"][l]
        h = _gelu(h)
        h = _layer_norm(h, p["ffn_ln_w"][l], p["ffn_ln_b"][l])
        h = jnp.dot(h, p["fc2_w"][l], preferred_element_type=jnp.float32) + p["fc2_b"][l]
        x = res + h
    x = _rms_norm(x, p["final_ln_w"])
    logits = jnp.dot(x, p["w_out"], preferred_element_type=jnp.float32)
    m = jnp.max(logits, axis=-1, keepdims=True)
    lse = jnp.log(jnp.sum(jnp.exp(logits - m), axis=-1, keepdims=True)) + m
    return logits - lse


def reference_forward(tokens, params):
    onehot = _shift_and_onehot(tokens)
    return jnp.stack([_seq_forward_ref(onehot[b], params)
                      for b in range(tokens.shape[0])])


if __name__ == "__main__":
    key = jax.random.PRNGKey(0)
    pkey, xkey = jax.random.split(key)
    params = init_params(pkey)
    packed = pack_params(params)

    # x: (batchsize, N) spin/occupation tokens in {0, 1}
    x = jax.random.randint(xkey, (BATCH, N), 0, VOCAB, dtype=jnp.int32)

    out = jax.block_until_ready(retnet_forward(x, packed))
    assert out.shape == (BATCH, N, VOCAB)

    with jax.default_matmul_precision("float32"):
        ref = jax.block_until_ready(reference_forward(x, params))
    np.testing.assert_allclose(np.asarray(out), np.asarray(ref), atol=2e-3, rtol=2e-3)

    print("KERNEL_OK")
</pallas_src>

<mosaic_0001>
module attributes {stable_mosaic.version = 11 : i64} {
  func.func @_retnet_kernel(%arg0: memref<32x1xf32, #tpu.memory_space<vmem>>, %arg1: memref<32x24xf32, #tpu.memory_space<vmem>>, %arg2: memref<3x32x32xf32, #tpu.memory_space<vmem>>, %arg3: memref<3x12xf32, #tpu.memory_space<vmem>>, %arg4: memref<12x2xf32, #tpu.memory_space<vmem>>, %arg5: memref<3x12x480xf32, #tpu.memory_space<vmem>>, %arg6: memref<3x408x12xf32, #tpu.memory_space<vmem>>, %arg7: memref<3x6x384xf32, #tpu.memory_space<vmem>>, %arg8: memref<32x2xf32, #tpu.memory_space<vmem>>) attributes {dimension_semantics = [], scalar_prefetch = 0 : i64, scratch_operands = 0 : i64, tpu.core_type = #tpu.core_type<tc>} {
    %c0 = arith.constant 0 : index
    %c0_0 = arith.constant 0 : index
    %0 = vector.load %arg3[%c0, %c0_0] : memref<3x12xf32, #tpu.memory_space<vmem>>, vector<3x12xf32>
    %1 = vector.extract_strided_slice %0 {offsets = [0, 0], sizes = [1, 12], strides = [1, 1]} : vector<3x12xf32> to vector<1x12xf32>
    %2 = vector.extract_strided_slice %0 {offsets = [1, 0], sizes = [1, 12], strides = [1, 1]} : vector<3x12xf32> to vector<1x12xf32>
    %3 = vector.extract_strided_slice %0 {offsets = [2, 0], sizes = [1, 12], strides = [1, 1]} : vector<3x12xf32> to vector<1x12xf32>
    %c0_1 = arith.constant 0 : index
    %c0_2 = arith.constant 0 : index
    %4 = vector.load %arg0[%c0_1, %c0_2] : memref<32x1xf32, #tpu.memory_space<vmem>>, vector<32x1xf32>
    %5 = vector.broadcast %4 : vector<32x1xf32> to vector<32x12xf32>
    %6 = vector.broadcast %2 : vector<1x12xf32> to vector<32x12xf32>
    %7 = arith.mulf %5, %6 : vector<32x12xf32>
    %8 = vector.broadcast %1 : vector<1x12xf32> to vector<32x12xf32>
    %9 = arith.addf %8, %7 : vector<32x12xf32>
    %10 = tpu.iota {dimensions = array<i32: 1>} : vector<1x12xi32>
    %11 = tpu.iota {dimensions = array<i32: 1>} : vector<1x24xi32>
    %12 = tpu.iota {dimensions = array<i32: 1>} : vector<1x384xi32>
    %c0_i32 = arith.constant 0 : i32
    %13 = vector.broadcast %c0_i32 : i32 to vector<1x12xi32>
    %14 = arith.cmpi sge, %10, %13 : vector<1x12xi32>
    %c4_i32 = arith.constant 4 : i32
    %15 = vector.broadcast %c4_i32 : i32 to vector<1x12xi32>
    %16 = arith.cmpi slt, %10, %15 : vector<1x12xi32>
    %17 = arith.andi %14, %16 : vector<1x12xi1>
    %18 = arith.extui %17 : vector<1x12xi1> to vector<1x12xi32>
    %19 = arith.sitofp %18 : vector<1x12xi32> to vector<1x12xf32>
    %c4_i32_3 = arith.constant 4 : i32
    %20 = vector.broadcast %c4_i32_3 : i32 to vector<1x12xi32>
    %21 = arith.cmpi sge, %10, %20 : vector<1x12xi32>
    %c8_i32 = arith.constant 8 : i32
    %22 = vector.broadcast %c8_i32 : i32 to vector<1x12xi32>
    %23 = arith.cmpi slt, %10, %22 : vector<1x12xi32>
    %24 = arith.andi %21, %23 : vector<1x12xi1>
    %25 = arith.extui %24 : vector<1x12xi1> to vector<1x12xi32>
    %26 = arith.sitofp %25 : vector<1x12xi32> to vector<1x12xf32>
    %c8_i32_4 = arith.constant 8 : i32
    %27 = vector.broadcast %c8_i32_4 : i32 to vector<1x12xi32>
    %28 = arith.cmpi sge, %10, %27 : vector<1x12xi32>
    %c12_i32 = arith.constant 12 : i32
    %29 = vector.broadcast %c12_i32 : i32 to vector<1x12xi32>
    %30 = arith.cmpi slt, %10, %29 : vector<1x12xi32>
    %31 = arith.andi %28, %30 : vector<1x12xi1>
    %32 = arith.extui %31 : vector<1x12xi1> to vector<1x12xi32>
    %33 = arith.sitofp %32 : vector<1x12xi32> to vector<1x12xf32>
    %c0_i32_5 = arith.constant 0 : i32
    %34 = vector.broadcast %c0_i32_5 : i32 to vector<1x24xi32>
    %35 = arith.cmpi sge, %11, %34 : vector<1x24xi32>
    %c8_i32_6 = arith.constant 8 : i32
    %36 = vector.broadcast %c8_i32_6 : i32 to vector<1x24xi32>
    %37 = arith.cmpi slt, %11, %36 : vector<1x24xi32>
    %38 = arith.andi %35, %37 : vector<1x24xi1>
    %39 = arith.extui %38 : vector<1x24xi1> to vector<1x24xi32>
    %40 = arith.sitofp %39 : vector<1x24xi32> to vector<1x24xf32>
    %c8_i32_7 = arith.constant 8 : i32
    %41 = vector.broadcast %c8_i32_7 : i32 to vector<1x24xi32>
    %42 = arith.cmpi sge, %11, %41 : vector<1x24xi32>
    %c16_i32 = arith.constant 16 : i32
    %43 = vector.broadcast %c16_i32 : i32 to vector<1x24xi32>
    %44 = arith.cmpi slt, %11, %43 : vector<1x24xi32>
    %45 = arith.andi %42, %44 : vector<1x24xi1>
    %46 = arith.extui %45 : vector<1x24xi1> to vector<1x24xi32>
    %47 = arith.sitofp %46 : vector<1x24xi32> to vector<1x24xf32>
    %c16_i32_8 = arith.constant 16 : i32
    %48 = vector.broadcast %c16_i32_8 : i32 to vector<1x24xi32>
    %49 = arith.cmpi sge, %11, %48 : vector<1x24xi32>
    %c24_i32 = arith.constant 24 : i32
    %50 = vector.broadcast %c24_i32 : i32 to vector<1x24xi32>
    %51 = arith.cmpi slt, %11, %50 : vector<1x24xi32>
    %52 = arith.andi %49, %51 : vector<1x24xi1>
    %53 = arith.extui %52 : vector<1x24xi1> to vector<1x24xi32>
    %54 = arith.sitofp %53 : vector<1x24xi32> to vector<1x24xf32>
    %c300_i32 = arith.constant 300 : i32
    %55 = vector.broadcast %c300_i32 : i32 to vector<1x384xi32>
    %56 = arith.cmpi slt, %12, %55 : vector<1x384xi32>
    %57 = arith.extui %56 : vector<1x384xi1> to vector<1x384xi32>
    %58 = arith.sitofp %57 : vector<1x384xi32> to vector<1x384xf32>
    %c0_9 = arith.constant 0 : index
    %c0_10 = arith.constant 0 : index
    %c0_11 = arith.constant 0 : index
    %59 = vector.load %arg7[%c0_9, %c0_10, %c0_11] : memref<3x6x384xf32, #tpu.memory_space<vmem>>, vector<1x6x384xf32>
    %60 = vector.shape_cast %59 : vector<1x6x384xf32> to vector<6x384xf32>
    %61 = vector.extract_strided_slice %60 {offsets = [0, 0], sizes = [1, 12], strides = [1, 1]} : vector<6x384xf32> to vector<1x12xf32>
    %62 = vector.extract_strided_slice %60 {offsets = [1, 0], sizes = [1, 12], strides = [1, 1]} : vector<6x384xf32> to vector<1x12xf32>
    %63 = vector.extract_strided_slice %60 {offsets = [2, 0], sizes = [1, 12], strides = [1, 1]} : vector<6x384xf32> to vector<1x12xf32>
    %64 = vector.extract_strided_slice %60 {offsets = [3, 0], sizes = [1, 384], strides = [1, 1]} : vector<6x384xf32> to vector<1x384xf32>
    %65 = vector.extract_strided_slice %60 {offsets = [4, 0], sizes = [1, 384], strides = [1, 1]} : vector<6x384xf32> to vector<1x384xf32>
    %66 = vector.extract_strided_slice %60 {offsets = [5, 0], sizes = [1, 384], strides = [1, 1]} : vector<6x384xf32> to vector<1x384xf32>
    %67 = arith.mulf %9, %9 : vector<32x12xf32>
    %cst = arith.constant dense<0.000000e+00> : vector<32xf32>
    %68 = vector.multi_reduction <add>, %67, %cst [1] : vector<32x12xf32> to vector<32xf32>
    %69 = vector.shape_cast %68 : vector<32xf32> to vector<32x1xf32>
    %cst_12 = arith.constant 1.200000e+01 : f32
    %70 = vector.broadcast %cst_12 : f32 to vector<32x1xf32>
    %71 = arith.divf %69, %70 : vector<32x1xf32>
    %cst_13 = arith.constant 9.99999974E-6 : f32
    %72 = vector.broadcast %cst_13 : f32 to vector<32x1xf32>
    %73 = arith.addf %71, %72 : vector<32x1xf32>
    %74 = math.rsqrt %73 : vector<32x1xf32>
    %75 = vector.broadcast %74 : vector<32x1xf32> to vector<32x12xf32>
    %76 = arith.mulf %9, %75 : vector<32x12xf32>
    %77 = vector.broadcast %61 : vector<1x12xf32> to vector<32x12xf32>
    %78 = arith.mulf %76, %77 : vector<32x12xf32>
    %c0_14 = arith.constant 0 : index
    %c0_15 = arith.constant 0 : index
    %c384 = arith.constant 384 : index
    %79 = vector.load %arg5[%c0_14, %c0_15, %c384] : memref<3x12x480xf32, #tpu.memory_space<vmem>>, vector<1x12x96xf32>
    %80 = vector.shape_cast %79 : vector<1x12x96xf32> to vector<12x96xf32>
    %cst_16 = arith.constant dense<0.000000e+00> : vector<32x96xf32>
    %81 = tpu.matmul %78, %80, %cst_16 {dimension_numbers = #tpu.dot_dimension_numbers<[1], [0], [0], [1], [0, 0, 1, 1], [], []>} : vector<32x12xf32>, vector<12x96xf32>, vector<32x96xf32> -> vector<32x96xf32>
    %c0_17 = arith.constant 0 : index
    %c0_18 = arith.constant 0 : index
    %82 = vector.load %arg1[%c0_17, %c0_18] : memref<32x24xf32, #tpu.memory_space<vmem>>, vector<32x24xf32>
    %83 = vector.extract_strided_slice %82 {offsets = [0, 0], sizes = [32, 12], strides = [1, 1]} : vector<32x24xf32> to vector<32x12xf32>
    %84 = vector.extract_strided_slice %82 {offsets = [0, 12], sizes = [32, 12], strides = [1, 1]} : vector<32x24xf32> to vector<32x12xf32>
    %85 = vector.extract_strided_slice %81 {offsets = [0, 0], sizes = [32, 12], strides = [1, 1]} : vector<32x96xf32> to vector<32x12xf32>
    %86 = arith.mulf %85, %84 : vector<32x12xf32>
    %87 = vector.extract_strided_slice %81 {offsets = [0, 12], sizes = [32, 12], strides = [1, 1]} : vector<32x96xf32> to vector<32x12xf32>
    %88 = arith.mulf %87, %83 : vector<32x12xf32>
    %89 = arith.addf %86, %88 : vector<32x12xf32>
    %90 = vector.extract_strided_slice %81 {offsets = [0, 24], sizes = [32, 12], strides = [1, 1]} : vector<32x96xf32> to vector<32x12xf32>
    %91 = arith.mulf %90, %84 : vector<32x12xf32>
    %92 = vector.extract_strided_slice %81 {offsets = [0, 36], sizes = [32, 12], strides = [1, 1]} : vector<32x96xf32> to vector<32x12xf32>
    %93 = arith.mulf %92, %83 : vector<32x12xf32>
    %94 = arith.addf %91, %93 : vector<32x12xf32>
    %95 = vector.extract_strided_slice %81 {offsets = [0, 48], sizes = [32, 24], strides = [1, 1]} : vector<32x96xf32> to vector<32x24xf32>
    %96 = vector.extract_strided_slice %81 {offsets = [0, 72], sizes = [32, 24], strides = [1, 1]} : vector<32x96xf32> to vector<32x24xf32>
    %cst_19 = arith.constant 0.000000e+00 : f32
    %97 = vector.broadcast %cst_19 : f32 to vector<32x24xf32>
    %98 = vector.broadcast %19 : vector<1x12xf32> to vector<32x12xf32>
    %99 = arith.mulf %89, %98 : vector<32x12xf32>
    %cst_20 = arith.constant dense<0.000000e+00> : vector<32x32xf32>
    %100 = tpu.matmul %99, %94, %cst_20 {dimension_numbers = #tpu.dot_dimension_numbers<[1], [1], [0], [0], [0, 0, 1, 0], [], []>} : vector<32x12xf32>, vector<32x12xf32>, vector<32x32xf32> -> vector<32x32xf32>
    %c0_21 = arith.constant 0 : index
    %c0_22 = arith.constant 0 : index
    %c0_23 = arith.constant 0 : index
    %101 = vector.load %arg2[%c0_21, %c0_22, %c0_23] : memref<3x32x32xf32, #tpu.memory_space<vmem>>, vector<1x32x32xf32>
    %102 = vector.shape_cast %101 : vector<1x32x32xf32> to vector<32x32xf32>
    %103 = arith.mulf %100, %102 : vector<32x32xf32>
    %104 = math.absf %103 : vector<32x32xf32>
    %cst_24 = arith.constant dense<0.000000e+00> : vector<32xf32>
    %105 = vector.multi_reduction <add>, %104, %cst_24 [1] : vector<32x32xf32> to vector<32xf32>
    %106 = vector.shape_cast %105 : vector<32xf32> to vector<32x1xf32>
    %cst_25 = arith.constant 1.000000e+00 : f32
    %cst_26 = arith.constant 5.000000e+04 : f32
    %107 = vector.broadcast %cst_25 : f32 to vector<32x1xf32>
    %108 = arith.maximumf %107, %106 : vector<32x1xf32>
    %109 = vector.broadcast %cst_26 : f32 to vector<32x1xf32>
    %110 = arith.minimumf %109, %108 : vector<32x1xf32>
    %111 = tpu.reciprocal %110 {approx = true} : vector<32x1xf32> -> vector<32x1xf32>
    %112 = vector.broadcast %111 : vector<32x1xf32> to vector<32x32xf32>
    %113 = arith.mulf %103, %112 : vector<32x32xf32>
    %114 = vector.broadcast %40 : vector<1x24xf32> to vector<32x24xf32>
    %115 = arith.mulf %95, %114 : vector<32x24xf32>
    %cst_27 = arith.constant dense<0.000000e+00> : vector<32x24xf32>
    %116 = tpu.matmul %113, %115, %cst_27 {dimension_numbers = #tpu.dot_dimension_numbers<[1], [0], [0], [1], [0, 0, 1, 1], [], []>} : vector<32x32xf32>, vector<32x24xf32>, vector<32x24xf32> -> vector<32x24xf32>
    %117 = arith.addf %97, %116 : vector<32x24xf32>
    %118 = vector.broadcast %26 : vector<1x12xf32> to vector<32x12xf32>
    %119 = arith.mulf %89, %118 : vector<32x12xf32>
    %cst_28 = arith.constant dense<0.000000e+00> : vector<32x32xf32>
    %120 = tpu.matmul %119, %94, %cst_28 {dimension_numbers = #tpu.dot_dimension_numbers<[1], [1], [0], [0], [0, 0, 1, 0], [], []>} : vector<32x12xf32>, vector<32x12xf32>, vector<32x32xf32> -> vector<32x32xf32>
    %c1 = arith.constant 1 : index
    %c0_29 = arith.constant 0 : index
    %c0_30 = arith.constant 0 : index
    %121 = vector.load %arg2[%c1, %c0_29, %c0_30] : memref<3x32x32xf32, #tpu.memory_space<vmem>>, vector<1x32x32xf32>
    %122 = vector.shape_cast %121 : vector<1x32x32xf32> to vector<32x32xf32>
    %123 = arith.mulf %120, %122 : vector<32x32xf32>
    %124 = math.absf %123 : vector<32x32xf32>
    %cst_31 = arith.constant dense<0.000000e+00> : vector<32xf32>
    %125 = vector.multi_reduction <add>, %124, %cst_31 [1] : vector<32x32xf32> to vector<32xf32>
    %126 = vector.shape_cast %125 : vector<32xf32> to vector<32x1xf32>
    %cst_32 = arith.constant 1.000000e+00 : f32
    %cst_33 = arith.constant 5.000000e+04 : f32
    %127 = vector.broadcast %cst_32 : f32 to vector<32x1xf32>
    %128 = arith.maximumf %127, %126 : vector<32x1xf32>
    %129 = vector.broadcast %cst_33 : f32 to vector<32x1xf32>
    %130 = arith.minimumf %129, %128 : vector<32x1xf32>
    %131 = tpu.reciprocal %130 {approx = true} : vector<32x1xf32> -> vector<32x1xf32>
    %132 = vector.broadcast %131 : vector<32x1xf32> to vector<32x32xf32>
    %133 = arith.mulf %123, %132 : vector<32x32xf32>
    %134 = vector.broadcast %47 : vector<1x24xf32> to vector<32x24xf32>
    %135 = arith.mulf %95, %134 : vector<32x24xf32>
    %cst_34 = arith.constant dense<0.000000e+00> : vector<32x24xf32>
    %136 = tpu.matmul %133, %135, %cst_34 {dimension_numbers = #tpu.dot_dimension_numbers<[1], [0], [0], [1], [0, 0, 1, 1], [], []>} : vector<32x32xf32>, vector<32x24xf32>, vector<32x24xf32> -> vector<32x24xf32>
    %137 = arith.addf %117, %136 : vector<32x24xf32>
    %138 = vector.broadcast %33 : vector<1x12xf32> to vector<32x12xf32>
    %139 = arith.mulf %89, %138 : vector<32x12xf32>
    %cst_35 = arith.constant dense<0.000000e+00> : vector<32x32xf32>
    %140 = tpu.matmul %139, %94, %cst_35 {dimension_numbers = #tpu.dot_dimension_numbers<[1], [1], [0], [0], [0, 0, 1, 0], [], []>} : vector<32x12xf32>, vector<32x12xf32>, vector<32x32xf32> -> vector<32x32xf32>
    %c2 = arith.constant 2 : index
    %c0_36 = arith.constant 0 : index
    %c0_37 = arith.constant 0 : index
    %141 = vector.load %arg2[%c2, %c0_36, %c0_37] : memref<3x32x32xf32, #tpu.memory_space<vmem>>, vector<1x32x32xf32>
    %142 = vector.shape_cast %141 : vector<1x32x32xf32> to vector<32x32xf32>
    %143 = arith.mulf %140, %142 : vector<32x32xf32>
    %144 = math.absf %143 : vector<32x32xf32>
    %cst_38 = arith.constant dense<0.000000e+00> : vector<32xf32>
    %145 = vector.multi_reduction <add>, %144, %cst_38 [1] : vector<32x32xf32> to vector<32xf32>
    %146 = vector.shape_cast %145 : vector<32xf32> to vector<32x1xf32>
    %cst_39 = arith.constant 1.000000e+00 : f32
    %cst_40 = arith.constant 5.000000e+04 : f32
    %147 = vector.broadcast %cst_39 : f32 to vector<32x1xf32>
    %148 = arith.maximumf %147, %146 : vector<32x1xf32>
    %149 = vector.broadcast %cst_40 : f32 to vector<32x1xf32>
    %150 = arith.minimumf %149, %148 : vector<32x1xf32>
    %151 = tpu.reciprocal %150 {approx = true} : vector<32x1xf32> -> vector<32x1xf32>
    %152 = vector.broadcast %151 : vector<32x1xf32> to vector<32x32xf32>
    %153 = arith.mulf %143, %152 : vector<32x32xf32>
    %154 = vector.broadcast %54 : vector<1x24xf32> to vector<32x24xf32>
    %155 = arith.mulf %95, %154 : vector<32x24xf32>
    %cst_41 = arith.constant dense<0.000000e+00> : vector<32x24xf32>
    %156 = tpu.matmul %153, %155, %cst_41 {dimension_numbers = #tpu.dot_dimension_numbers<[1], [0], [0], [1], [0, 0, 1, 1], [], []>} : vector<32x32xf32>, vector<32x24xf32>, vector<32x24xf32> -> vector<32x24xf32>
    %157 = arith.addf %137, %156 : vector<32x24xf32>
    %158 = arith.mulf %157, %157 : vector<32x24xf32>
    %cst_42 = arith.constant 0.000000e+00 : f32
    %159 = vector.broadcast %cst_42 : f32 to vector<32x24xf32>
    %160 = vector.broadcast %40 : vector<1x24xf32> to vector<32x24xf32>
    %161 = arith.mulf %158, %160 : vector<32x24xf32>
    %cst_43 = arith.constant dense<0.000000e+00> : vector<32xf32>
    %162 = vector.multi_reduction <add>, %161, %cst_43 [1] : vector<32x24xf32> to vector<32xf32>
    %163 = vector.shape_cast %162 : vector<32xf32> to vector<32x1xf32>
    %cst_44 = arith.constant 1.250000e-01 : f32
    %164 = vector.broadcast %cst_44 : f32 to vector<32x1xf32>
    %165 = arith.mulf %163, %164 : vector<32x1xf32>
    %cst_45 = arith.constant 9.99999974E-6 : f32
    %166 = vector.broadcast %cst_45 : f32 to vector<32x1xf32>
    %167 = arith.addf %165, %166 : vector<32x1xf32>
    %168 = math.rsqrt %167 : vector<32x1xf32>
    %169 = vector.broadcast %40 : vector<1x24xf32> to vector<32x24xf32>
    %170 = vector.broadcast %168 : vector<32x1xf32> to vector<32x24xf32>
    %171 = arith.mulf %169, %170 : vector<32x24xf32>
    %172 = arith.addf %159, %171 : vector<32x24xf32>
    %173 = vector.broadcast %47 : vector<1x24xf32> to vector<32x24xf32>
    %174 = arith.mulf %158, %173 : vector<32x24xf32>
    %cst_46 = arith.constant dense<0.000000e+00> : vector<32xf32>
    %175 = vector.multi_reduction <add>, %174, %cst_46 [1] : vector<32x24xf32> to vector<32xf32>
    %176 = vector.shape_cast %175 : vector<32xf32> to vector<32x1xf32>
    %cst_47 = arith.constant 1.250000e-01 : f32
    %177 = vector.broadcast %cst_47 : f32 to vector<32x1xf32>
    %178 = arith.mulf %176, %177 : vector<32x1xf32>
    %cst_48 = arith.constant 9.99999974E-6 : f32
    %179 = vector.broadcast %cst_48 : f32 to vector<32x1xf32>
    %180 = arith.addf %178, %179 : vector<32x1xf32>
    %181 = math.rsqrt %180 : vector<32x1xf32>
    %182 = vector.broadcast %47 : vector<1x24xf32> to vector<32x24xf32>
    %183 = vector.broadcast %181 : vector<32x1xf32> to vector<32x24xf32>
    %184 = arith.mulf %182, %183 : vector<32x24xf32>
    %185 = arith.addf %172, %184 : vector<32x24xf32>
    %186 = vector.broadcast %54 : vector<1x24xf32> to vector<32x24xf32>
    %187 = arith.mulf %158, %186 : vector<32x24xf32>
    %cst_49 = arith.constant dense<0.000000e+00> : vector<32xf32>
    %188 = vector.multi_reduction <add>, %187, %cst_49 [1] : vector<32x24xf32> to vector<32xf32>
    %189 = vector.shape_cast %188 : vector<32xf32> to vector<32x1xf32>
    %cst_50 = arith.constant 1.250000e-01 : f32
    %190 = vector.broadcast %cst_50 : f32 to vector<32x1xf32>
    %191 = arith.mulf %189, %190 : vector<32x1xf32>
    %cst_51 = arith.constant 9.99999974E-6 : f32
    %192 = vector.broadcast %cst_51 : f32 to vector<32x1xf32>
    %193 = arith.addf %191, %192 : vector<32x1xf32>
    %194 = math.rsqrt %193 : vector<32x1xf32>
    %195 = vector.broadcast %54 : vector<1x24xf32> to vector<32x24xf32>
    %196 = vector.broadcast %194 : vector<32x1xf32> to vector<32x24xf32>
    %197 = arith.mulf %195, %196 : vector<32x24xf32>
    %198 = arith.addf %185, %197 : vector<32x24xf32>
    %199 = arith.negf %96 : vector<32x24xf32>
    %200 = math.exp %199 : vector<32x24xf32>
    %cst_52 = arith.constant 1.000000e+00 : f32
    %201 = vector.broadcast %cst_52 : f32 to vector<32x24xf32>
    %202 = arith.addf %201, %200 : vector<32x24xf32>
    %203 = arith.divf %201, %202 : vector<32x24xf32>
    %204 = arith.mulf %96, %203 : vector<32x24xf32>
    %205 = arith.mulf %157, %198 : vector<32x24xf32>
    %206 = arith.mulf %204, %205 : vector<32x24xf32>
    %c0_53 = arith.constant 0 : index
    %c0_54 = arith.constant 0 : index
    %c0_55 = arith.constant 0 : index
    %207 = vector.load %arg6[%c0_53, %c0_54, %c0_55] : memref<3x408x12xf32, #tpu.memory_space<vmem>>, vector<1x24x12xf32>
    %208 = vector.shape_cast %207 : vector<1x24x12xf32> to vector<24x12xf32>
    %cst_56 = arith.constant dense<0.000000e+00> : vector<32x12xf32>
    %209 = tpu.matmul %206, %208, %cst_56 {dimension_numbers = #tpu.dot_dimension_numbers<[1], [0], [0], [1], [0, 0, 1, 1], [], []>} : vector<32x24xf32>, vector<24x12xf32>, vector<32x12xf32> -> vector<32x12xf32>
    %210 = arith.addf %9, %209 : vector<32x12xf32>
    %211 = arith.mulf %210, %210 : vector<32x12xf32>
    %cst_57 = arith.constant dense<0.000000e+00> : vector<32xf32>
    %212 = vector.multi_reduction <add>, %211, %cst_57 [1] : vector<32x12xf32> to vector<32xf32>
    %213 = vector.shape_cast %212 : vector<32xf32> to vector<32x1xf32>
    %cst_58 = arith.constant 1.200000e+01 : f32
    %214 = vector.broadcast %cst_58 : f32 to vector<32x1xf32>
    %215 = arith.divf %213, %214 : vector<32x1xf32>
    %cst_59 = arith.constant 9.99999974E-6 : f32
    %216 = vector.broadcast %cst_59 : f32 to vector<32x1xf32>
    %217 = arith.addf %215, %216 : vector<32x1xf32>
    %218 = math.rsqrt %217 : vector<32x1xf32>
    %219 = vector.broadcast %218 : vector<32x1xf32> to vector<32x12xf32>
    %220 = arith.mulf %210, %219 : vector<32x12xf32>
    %221 = vector.broadcast %62 : vector<1x12xf32> to vector<32x12xf32>
    %222 = arith.mulf %220, %221 : vector<32x12xf32>
    %c0_60 = arith.constant 0 : index
    %c0_61 = arith.constant 0 : index
    %c0_62 = arith.constant 0 : index
    %223 = vector.load %arg5[%c0_60, %c0_61, %c0_62] : memref<3x12x480xf32, #tpu.memory_space<vmem>>, vector<1x12x384xf32>
    %224 = vector.shape_cast %223 : vector<1x12x384xf32> to vector<12x384xf32>
    %cst_63 = arith.constant dense<0.000000e+00> : vector<32x384xf32>
    %225 = tpu.matmul %222, %224, %cst_63 {dimension_numbers = #tpu.dot_dimension_numbers<[1], [0], [0], [1], [0, 0, 1, 1], [], []>} : vector<32x12xf32>, vector<12x384xf32>, vector<32x384xf32> -> vector<32x384xf32>
    %226 = vector.broadcast %64 : vector<1x384xf32> to vector<32x384xf32>
    %227 = arith.addf %225, %226 : vector<32x384xf32>
    %cst_64 = arith.constant 5.000000e-01 : f32
    %228 = vector.broadcast %cst_64 : f32 to vector<32x384xf32>
    %229 = arith.mulf %228, %227 : vector<32x384xf32>
    %cst_65 = arith.constant 4.471500e-02 : f32
    %230 = vector.broadcast %cst_65 : f32 to vector<32x384xf32>
    %231 = arith.mulf %230, %227 : vector<32x384xf32>
    %232 = arith.mulf %231, %227 : vector<32x384xf32>
    %233 = arith.mulf %232, %227 : vector<32x384xf32>
    %234 = arith.addf %227, %233 : vector<32x384xf32>
    %cst_66 = arith.constant 0.797884583 : f32
    %235 = vector.broadcast %cst_66 : f32 to vector<32x384xf32>
    %236 = arith.mulf %235, %234 : vector<32x384xf32>
    %237 = math.tanh %236 : vector<32x384xf32>
    %cst_67 = arith.constant 1.000000e+00 : f32
    %238 = vector.broadcast %cst_67 : f32 to vector<32x384xf32>
    %239 = arith.addf %238, %237 : vector<32x384xf32>
    %240 = arith.mulf %229, %239 : vector<32x384xf32>
    %cst_68 = arith.constant dense<0.000000e+00> : vector<32xf32>
    %241 = vector.multi_reduction <add>, %240, %cst_68 [1] : vector<32x384xf32> to vector<32xf32>
    %242 = vector.shape_cast %241 : vector<32xf32> to vector<32x1xf32>
    %cst_69 = arith.constant 0.00333333341 : f32
    %243 = vector.broadcast %cst_69 : f32 to vector<32x1xf32>
    %244 = arith.mulf %242, %243 : vector<32x1xf32>
    %245 = vector.broadcast %244 : vector<32x1xf32> to vector<32x384xf32>
    %246 = arith.subf %240, %245 : vector<32x384xf32>
    %247 = vector.broadcast %58 : vector<1x384xf32> to vector<32x384xf32>
    %248 = arith.mulf %246, %247 : vector<32x384xf32>
    %249 = arith.mulf %248, %248 : vector<32x384xf32>
    %cst_70 = arith.constant dense<0.000000e+00> : vector<32xf32>
    %250 = vector.multi_reduction <add>, %249, %cst_70 [1] : vector<32x384xf32> to vector<32xf32>
    %251 = vector.shape_cast %250 : vector<32xf32> to vector<32x1xf32>
    %cst_71 = arith.constant 0.00333333341 : f32
    %252 = vector.broadcast %cst_71 : f32 to vector<32x1xf32>
    %253 = arith.mulf %251, %252 : vector<32x1xf32>
    %254 = vector.broadcast %244 : vector<32x1xf32> to vector<32x384xf32>
    %255 = arith.subf %240, %254 : vector<32x384xf32>
    %cst_72 = arith.constant 9.99999974E-6 : f32
    %256 = vector.broadcast %cst_72 : f32 to vector<32x1xf32>
    %257 = arith.addf %253, %256 : vector<32x1xf32>
    %258 = math.rsqrt %257 : vector<32x1xf32>
    %259 = vector.broadcast %258 : vector<32x1xf32> to vector<32x384xf32>
    %260 = arith.mulf %255, %259 : vector<32x384xf32>
    %261 = vector.broadcast %65 : vector<1x384xf32> to vector<32x384xf32>
    %262 = arith.mulf %260, %261 : vector<32x384xf32>
    %263 = vector.broadcast %66 : vector<1x384xf32> to vector<32x384xf32>
    %264 = arith.addf %262, %263 : vector<32x384xf32>
    %c0_73 = arith.constant 0 : index
    %c24 = arith.constant 24 : index
    %c0_74 = arith.constant 0 : index
    %265 = vector.load %arg6[%c0_73, %c24, %c0_74] : memref<3x408x12xf32, #tpu.memory_space<vmem>>, vector<1x384x12xf32>
    %266 = vector.shape_cast %265 : vector<1x384x12xf32> to vector<384x12xf32>
    %cst_75 = arith.constant dense<0.000000e+00> : vector<32x12xf32>
    %267 = tpu.matmul %264, %266, %cst_75 {dimension_numbers = #tpu.dot_dimension_numbers<[1], [0], [0], [1], [0, 0, 1, 1], [], []>} : vector<32x384xf32>, vector<384x12xf32>, vector<32x12xf32> -> vector<32x12xf32>
    %268 = arith.addf %210, %267 : vector<32x12xf32>
    %269 = vector.broadcast %63 : vector<1x12xf32> to vector<32x12xf32>
    %270 = arith.addf %268, %269 : vector<32x12xf32>
    %c1_76 = arith.constant 1 : index
    %c0_77 = arith.constant 0 : index
    %c0_78 = arith.constant 0 : index
    %271 = vector.load %arg7[%c1_76, %c0_77, %c0_78] : memref<3x6x384xf32, #tpu.memory_space<vmem>>, vector<1x6x384xf32>
    %272 = vector.shape_cast %271 : vector<1x6x384xf32> to vector<6x384xf32>
    %273 = vector.extract_strided_slice %272 {offsets = [0, 0], sizes = [1, 12], strides = [1, 1]} : vector<6x384xf32> to vector<1x12xf32>
    %274 = vector.extract_strided_slice %272 {offsets = [1, 0], sizes = [1, 12], strides = [1, 1]} : vector<6x384xf32> to vector<1x12xf32>
    %275 = vector.extract_strided_slice %272 {offsets = [2, 0], sizes = [1, 12], strides = [1, 1]} : vector<6x384xf32> to vector<1x12xf32>
    %276 = vector.extract_strided_slice %272 {offsets = [3, 0], sizes = [1, 384], strides = [1, 1]} : vector<6x384xf32> to vector<1x384xf32>
    %277 = vector.extract_strided_slice %272 {offsets = [4, 0], sizes = [1, 384], strides = [1, 1]} : vector<6x384xf32> to vector<1x384xf32>
    %278 = vector.extract_strided_slice %272 {offsets = [5, 0], sizes = [1, 384], strides = [1, 1]} : vector<6x384xf32> to vector<1x384xf32>
    %279 = arith.mulf %270, %270 : vector<32x12xf32>
    %cst_79 = arith.constant dense<0.000000e+00> : vector<32xf32>
    %280 = vector.multi_reduction <add>, %279, %cst_79 [1] : vector<32x12xf32> to vector<32xf32>
    %281 = vector.shape_cast %280 : vector<32xf32> to vector<32x1xf32>
    %cst_80 = arith.constant 1.200000e+01 : f32
    %282 = vector.broadcast %cst_80 : f32 to vector<32x1xf32>
    %283 = arith.divf %281, %282 : vector<32x1xf32>
    %cst_81 = arith.constant 9.99999974E-6 : f32
    %284 = vector.broadcast %cst_81 : f32 to vector<32x1xf32>
    %285 = arith.addf %283, %284 : vector<32x1xf32>
    %286 = math.rsqrt %285 : vector<32x1xf32>
    %287 = vector.broadcast %286 : vector<32x1xf32> to vector<32x12xf32>
    %288 = arith.mulf %270, %287 : vector<32x12xf32>
    %289 = vector.broadcast %273 : vector<1x12xf32> to vector<32x12xf32>
    %290 = arith.mulf %288, %289 : vector<32x12xf32>
    %c1_82 = arith.constant 1 : index
    %c0_83 = arith.constant 0 : index
    %c384_84 = arith.constant 384 : index
    %291 = vector.load %arg5[%c1_82, %c0_83, %c384_84] : memref<3x12x480xf32, #tpu.memory_space<vmem>>, vector<1x12x96xf32>
    %292 = vector.shape_cast %291 : vector<1x12x96xf32> to vector<12x96xf32>
    %cst_85 = arith.constant dense<0.000000e+00> : vector<32x96xf32>
    %293 = tpu.matmul %290, %292, %cst_85 {dimension_numbers = #tpu.dot_dimension_numbers<[1], [0], [0], [1], [0, 0, 1, 1], [], []>} : vector<32x12xf32>, vector<12x96xf32>, vector<32x96xf32> -> vector<32x96xf32>
    %c0_86 = arith.constant 0 : index
    %c0_87 = arith.constant 0 : index
    %294 = vector.load %arg1[%c0_86, %c0_87] : memref<32x24xf32, #tpu.memory_space<vmem>>, vector<32x24xf32>
    %295 = vector.extract_strided_slice %294 {offsets = [0, 0], sizes = [32, 12], strides = [1, 1]} : vector<32x24xf32> to vector<32x12xf32>
    %296 = vector.extract_strided_slice %294 {offsets = [0, 12], sizes = [32, 12], strides = [1, 1]} : vector<32x24xf32> to vector<32x12xf32>
    %297 = vector.extract_strided_slice %293 {offsets = [0, 0], sizes = [32, 12], strides = [1, 1]} : vector<32x96xf32> to vector<32x12xf32>
    %298 = arith.mulf %297, %296 : vector<32x12xf32>
    %299 = vector.extract_strided_slice %293 {offsets = [0, 12], sizes = [32, 12], strides = [1, 1]} : vector<32x96xf32> to vector<32x12xf32>
    %300 = arith.mulf %299, %295 : vector<32x12xf32>
    %301 = arith.addf %298, %300 : vector<32x12xf32>
    %302 = vector.extract_strided_slice %293 {offsets = [0, 24], sizes = [32, 12], strides = [1, 1]} : vector<32x96xf32> to vector<32x12xf32>
    %303 = arith.mulf %302, %296 : vector<32x12xf32>
    %304 = vector.extract_strided_slice %293 {offsets = [0, 36], sizes = [32, 12], strides = [1, 1]} : vector<32x96xf32> to vector<32x12xf32>
    %305 = arith.mulf %304, %295 : vector<32x12xf32>
    %306 = arith.addf %303, %305 : vector<32x12xf32>
    %307 = vector.extract_strided_slice %293 {offsets = [0, 48], sizes = [32, 24], strides = [1, 1]} : vector<32x96xf32> to vector<32x24xf32>
    %308 = vector.extract_strided_slice %293 {offsets = [0, 72], sizes = [32, 24], strides = [1, 1]} : vector<32x96xf32> to vector<32x24xf32>
    %cst_88 = arith.constant 0.000000e+00 : f32
    %309 = vector.broadcast %cst_88 : f32 to vector<32x24xf32>
    %310 = vector.broadcast %19 : vector<1x12xf32> to vector<32x12xf32>
    %311 = arith.mulf %301, %310 : vector<32x12xf32>
    %cst_89 = arith.constant dense<0.000000e+00> : vector<32x32xf32>
    %312 = tpu.matmul %311, %306, %cst_89 {dimension_numbers = #tpu.dot_dimension_numbers<[1], [1], [0], [0], [0, 0, 1, 0], [], []>} : vector<32x12xf32>, vector<32x12xf32>, vector<32x32xf32> -> vector<32x32xf32>
    %c0_90 = arith.constant 0 : index
    %c0_91 = arith.constant 0 : index
    %c0_92 = arith.constant 0 : index
    %313 = vector.load %arg2[%c0_90, %c0_91, %c0_92] : memref<3x32x32xf32, #tpu.memory_space<vmem>>, vector<1x32x32xf32>
    %314 = vector.shape_cast %313 : vector<1x32x32xf32> to vector<32x32xf32>
    %315 = arith.mulf %312, %314 : vector<32x32xf32>
    %316 = math.absf %315 : vector<32x32xf32>
    %cst_93 = arith.constant dense<0.000000e+00> : vector<32xf32>
    %317 = vector.multi_reduction <add>, %316, %cst_93 [1] : vector<32x32xf32> to vector<32xf32>
    %318 = vector.shape_cast %317 : vector<32xf32> to vector<32x1xf32>
    %cst_94 = arith.constant 1.000000e+00 : f32
    %cst_95 = arith.constant 5.000000e+04 : f32
    %319 = vector.broadcast %cst_94 : f32 to vector<32x1xf32>
    %320 = arith.maximumf %319, %318 : vector<32x1xf32>
    %321 = vector.broadcast %cst_95 : f32 to vector<32x1xf32>
    %322 = arith.minimumf %321, %320 : vector<32x1xf32>
    %323 = tpu.reciprocal %322 {approx = true} : vector<32x1xf32> -> vector<32x1xf32>
    %324 = vector.broadcast %323 : vector<32x1xf32> to vector<32x32xf32>
    %325 = arith.mulf %315, %324 : vector<32x32xf32>
    %326 = vector.broadcast %40 : vector<1x24xf32> to vector<32x24xf32>
    %327 = arith.mulf %307, %326 : vector<32x24xf32>
    %cst_96 = arith.constant dense<0.000000e+00> : vector<32x24xf32>
    %328 = tpu.matmul %325, %327, %cst_96 {dimension_numbers = #tpu.dot_dimension_numbers<[1], [0], [0], [1], [0, 0, 1, 1], [], []>} : vector<32x32xf32>, vector<32x24xf32>, vector<32x24xf32> -> vector<32x24xf32>
    %329 = arith.addf %309, %328 : vector<32x24xf32>
    %330 = vector.broadcast %26 : vector<1x12xf32> to vector<32x12xf32>
    %331 = arith.mulf %301, %330 : vector<32x12xf32>
    %cst_97 = arith.constant dense<0.000000e+00> : vector<32x32xf32>
    %332 = tpu.matmul %331, %306, %cst_97 {dimension_numbers = #tpu.dot_dimension_numbers<[1], [1], [0], [0], [0, 0, 1, 0], [], []>} : vector<32x12xf32>, vector<32x12xf32>, vector<32x32xf32> -> vector<32x32xf32>
    %c1_98 = arith.constant 1 : index
    %c0_99 = arith.constant 0 : index
    %c0_100 = arith.constant 0 : index
    %333 = vector.load %arg2[%c1_98, %c0_99, %c0_100] : memref<3x32x32xf32, #tpu.memory_space<vmem>>, vector<1x32x32xf32>
    %334 = vector.shape_cast %333 : vector<1x32x32xf32> to vector<32x32xf32>
    %335 = arith.mulf %332, %334 : vector<32x32xf32>
    %336 = math.absf %335 : vector<32x32xf32>
    %cst_101 = arith.constant dense<0.000000e+00> : vector<32xf32>
    %337 = vector.multi_reduction <add>, %336, %cst_101 [1] : vector<32x32xf32> to vector<32xf32>
    %338 = vector.shape_cast %337 : vector<32xf32> to vector<32x1xf32>
    %cst_102 = arith.constant 1.000000e+00 : f32
    %cst_103 = arith.constant 5.000000e+04 : f32
    %339 = vector.broadcast %cst_102 : f32 to vector<32x1xf32>
    %340 = arith.maximumf %339, %338 : vector<32x1xf32>
    %341 = vector.broadcast %cst_103 : f32 to vector<32x1xf32>
    %342 = arith.minimumf %341, %340 : vector<32x1xf32>
    %343 = tpu.reciprocal %342 {approx = true} : vector<32x1xf32> -> vector<32x1xf32>
    %344 = vector.broadcast %343 : vector<32x1xf32> to vector<32x32xf32>
    %345 = arith.mulf %335, %344 : vector<32x32xf32>
    %346 = vector.broadcast %47 : vector<1x24xf32> to vector<32x24xf32>
    %347 = arith.mulf %307, %346 : vector<32x24xf32>
    %cst_104 = arith.constant dense<0.000000e+00> : vector<32x24xf32>
    %348 = tpu.matmul %345, %347, %cst_104 {dimension_numbers = #tpu.dot_dimension_numbers<[1], [0], [0], [1], [0, 0, 1, 1], [], []>} : vector<32x32xf32>, vector<32x24xf32>, vector<32x24xf32> -> vector<32x24xf32>
    %349 = arith.addf %329, %348 : vector<32x24xf32>
    %350 = vector.broadcast %33 : vector<1x12xf32> to vector<32x12xf32>
    %351 = arith.mulf %301, %350 : vector<32x12xf32>
    %cst_105 = arith.constant dense<0.000000e+00> : vector<32x32xf32>
    %352 = tpu.matmul %351, %306, %cst_105 {dimension_numbers = #tpu.dot_dimension_numbers<[1], [1], [0], [0], [0, 0, 1, 0], [], []>} : vector<32x12xf32>, vector<32x12xf32>, vector<32x32xf32> -> vector<32x32xf32>
    %c2_106 = arith.constant 2 : index
    %c0_107 = arith.constant 0 : index
    %c0_108 = arith.constant 0 : index
    %353 = vector.load %arg2[%c2_106, %c0_107, %c0_108] : memref<3x32x32xf32, #tpu.memory_space<vmem>>, vector<1x32x32xf32>
    %354 = vector.shape_cast %353 : vector<1x32x32xf32> to vector<32x32xf32>
    %355 = arith.mulf %352, %354 : vector<32x32xf32>
    %356 = math.absf %355 : vector<32x32xf32>
    %cst_109 = arith.constant dense<0.000000e+00> : vector<32xf32>
    %357 = vector.multi_reduction <add>, %356, %cst_109 [1] : vector<32x32xf32> to vector<32xf32>
    %358 = vector.shape_cast %357 : vector<32xf32> to vector<32x1xf32>
    %cst_110 = arith.constant 1.000000e+00 : f32
    %cst_111 = arith.constant 5.000000e+04 : f32
    %359 = vector.broadcast %cst_110 : f32 to vector<32x1xf32>
    %360 = arith.maximumf %359, %358 : vector<32x1xf32>
    %361 = vector.broadcast %cst_111 : f32 to vector<32x1xf32>
    %362 = arith.minimumf %361, %360 : vector<32x1xf32>
    %363 = tpu.reciprocal %362 {approx = true} : vector<32x1xf32> -> vector<32x1xf32>
    %364 = vector.broadcast %363 : vector<32x1xf32> to vector<32x32xf32>
    %365 = arith.mulf %355, %364 : vector<32x32xf32>
    %366 = vector.broadcast %54 : vector<1x24xf32> to vector<32x24xf32>
    %367 = arith.mulf %307, %366 : vector<32x24xf32>
    %cst_112 = arith.constant dense<0.000000e+00> : vector<32x24xf32>
    %368 = tpu.matmul %365, %367, %cst_112 {dimension_numbers = #tpu.dot_dimension_numbers<[1], [0], [0], [1], [0, 0, 1, 1], [], []>} : vector<32x32xf32>, vector<32x24xf32>, vector<32x24xf32> -> vector<32x24xf32>
    %369 = arith.addf %349, %368 : vector<32x24xf32>
    %370 = arith.mulf %369, %369 : vector<32x24xf32>
    %cst_113 = arith.constant 0.000000e+00 : f32
    %371 = vector.broadcast %cst_113 : f32 to vector<32x24xf32>
    %372 = vector.broadcast %40 : vector<1x24xf32> to vector<32x24xf32>
    %373 = arith.mulf %370, %372 : vector<32x24xf32>
    %cst_114 = arith.constant dense<0.000000e+00> : vector<32xf32>
    %374 = vector.multi_reduction <add>, %373, %cst_114 [1] : vector<32x24xf32> to vector<32xf32>
    %375 = vector.shape_cast %374 : vector<32xf32> to vector<32x1xf32>
    %cst_115 = arith.constant 1.250000e-01 : f32
    %376 = vector.broadcast %cst_115 : f32 to vector<32x1xf32>
    %377 = arith.mulf %375, %376 : vector<32x1xf32>
    %cst_116 = arith.constant 9.99999974E-6 : f32
    %378 = vector.broadcast %cst_116 : f32 to vector<32x1xf32>
    %379 = arith.addf %377, %378 : vector<32x1xf32>
    %380 = math.rsqrt %379 : vector<32x1xf32>
    %381 = vector.broadcast %40 : vector<1x24xf32> to vector<32x24xf32>
    %382 = vector.broadcast %380 : vector<32x1xf32> to vector<32x24xf32>
    %383 = arith.mulf %381, %382 : vector<32x24xf32>
    %384 = arith.addf %371, %383 : vector<32x24xf32>
    %385 = vector.broadcast %47 : vector<1x24xf32> to vector<32x24xf32>
    %386 = arith.mulf %370, %385 : vector<32x24xf32>
    %cst_117 = arith.constant dense<0.000000e+00> : vector<32xf32>
    %387 = vector.multi_reduction <add>, %386, %cst_117 [1] : vector<32x24xf32> to vector<32xf32>
    %388 = vector.shape_cast %387 : vector<32xf32> to vector<32x1xf32>
    %cst_118 = arith.constant 1.250000e-01 : f32
    %389 = vector.broadcast %cst_118 : f32 to vector<32x1xf32>
    %390 = arith.mulf %388, %389 : vector<32x1xf32>
    %cst_119 = arith.constant 9.99999974E-6 : f32
    %391 = vector.broadcast %cst_119 : f32 to vector<32x1xf32>
    %392 = arith.addf %390, %391 : vector<32x1xf32>
    %393 = math.rsqrt %392 : vector<32x1xf32>
    %394 = vector.broadcast %47 : vector<1x24xf32> to vector<32x24xf32>
    %395 = vector.broadcast %393 : vector<32x1xf32> to vector<32x24xf32>
    %396 = arith.mulf %394, %395 : vector<32x24xf32>
    %397 = arith.addf %384, %396 : vector<32x24xf32>
    %398 = vector.broadcast %54 : vector<1x24xf32> to vector<32x24xf32>
    %399 = arith.mulf %370, %398 : vector<32x24xf32>
    %cst_120 = arith.constant dense<0.000000e+00> : vector<32xf32>
    %400 = vector.multi_reduction <add>, %399, %cst_120 [1] : vector<32x24xf32> to vector<32xf32>
    %401 = vector.shape_cast %400 : vector<32xf32> to vector<32x1xf32>
    %cst_121 = arith.constant 1.250000e-01 : f32
    %402 = vector.broadcast %cst_121 : f32 to vector<32x1xf32>
    %403 = arith.mulf %401, %402 : vector<32x1xf32>
    %cst_122 = arith.constant 9.99999974E-6 : f32
    %404 = vector.broadcast %cst_122 : f32 to vector<32x1xf32>
    %405 = arith.addf %403, %404 : vector<32x1xf32>
    %406 = math.rsqrt %405 : vector<32x1xf32>
    %407 = vector.broadcast %54 : vector<1x24xf32> to vector<32x24xf32>
    %408 = vector.broadcast %406 : vector<32x1xf32> to vector<32x24xf32>
    %409 = arith.mulf %407, %408 : vector<32x24xf32>
    %410 = arith.addf %397, %409 : vector<32x24xf32>
    %411 = arith.negf %308 : vector<32x24xf32>
    %412 = math.exp %411 : vector<32x24xf32>
    %cst_123 = arith.constant 1.000000e+00 : f32
    %413 = vector.broadcast %cst_123 : f32 to vector<32x24xf32>
    %414 = arith.addf %413, %412 : vector<32x24xf32>
    %415 = arith.divf %413, %414 : vector<32x24xf32>
    %416 = arith.mulf %308, %415 : vector<32x24xf32>
    %417 = arith.mulf %369, %410 : vector<32x24xf32>
    %418 = arith.mulf %416, %417 : vector<32x24xf32>
    %c1_124 = arith.constant 1 : index
    %c0_125 = arith.constant 0 : index
    %c0_126 = arith.constant 0 : index
    %419 = vector.load %arg6[%c1_124, %c0_125, %c0_126] : memref<3x408x12xf32, #tpu.memory_space<vmem>>, vector<1x24x12xf32>
    %420 = vector.shape_cast %419 : vector<1x24x12xf32> to vector<24x12xf32>
    %cst_127 = arith.constant dense<0.000000e+00> : vector<32x12xf32>
    %421 = tpu.matmul %418, %420, %cst_127 {dimension_numbers = #tpu.dot_dimension_numbers<[1], [0], [0], [1], [0, 0, 1, 1], [], []>} : vector<32x24xf32>, vector<24x12xf32>, vector<32x12xf32> -> vector<32x12xf32>
    %422 = arith.addf %270, %421 : vector<32x12xf32>
    %423 = arith.mulf %422, %422 : vector<32x12xf32>
    %cst_128 = arith.constant dense<0.000000e+00> : vector<32xf32>
    %424 = vector.multi_reduction <add>, %423, %cst_128 [1] : vector<32x12xf32> to vector<32xf32>
    %425 = vector.shape_cast %424 : vector<32xf32> to vector<32x1xf32>
    %cst_129 = arith.constant 1.200000e+01 : f32
    %426 = vector.broadcast %cst_129 : f32 to vector<32x1xf32>
    %427 = arith.divf %425, %426 : vector<32x1xf32>
    %cst_130 = arith.constant 9.99999974E-6 : f32
    %428 = vector.broadcast %cst_130 : f32 to vector<32x1xf32>
    %429 = arith.addf %427, %428 : vector<32x1xf32>
    %430 = math.rsqrt %429 : vector<32x1xf32>
    %431 = vector.broadcast %430 : vector<32x1xf32> to vector<32x12xf32>
    %432 = arith.mulf %422, %431 : vector<32x12xf32>
    %433 = vector.broadcast %274 : vector<1x12xf32> to vector<32x12xf32>
    %434 = arith.mulf %432, %433 : vector<32x12xf32>
    %c1_131 = arith.constant 1 : index
    %c0_132 = arith.constant 0 : index
    %c0_133 = arith.constant 0 : index
    %435 = vector.load %arg5[%c1_131, %c0_132, %c0_133] : memref<3x12x480xf32, #tpu.memory_space<vmem>>, vector<1x12x384xf32>
    %436 = vector.shape_cast %435 : vector<1x12x384xf32> to vector<12x384xf32>
    %cst_134 = arith.constant dense<0.000000e+00> : vector<32x384xf32>
    %437 = tpu.matmul %434, %436, %cst_134 {dimension_numbers = #tpu.dot_dimension_numbers<[1], [0], [0], [1], [0, 0, 1, 1], [], []>} : vector<32x12xf32>, vector<12x384xf32>, vector<32x384xf32> -> vector<32x384xf32>
    %438 = vector.broadcast %276 : vector<1x384xf32> to vector<32x384xf32>
    %439 = arith.addf %437, %438 : vector<32x384xf32>
    %cst_135 = arith.constant 5.000000e-01 : f32
    %440 = vector.broadcast %cst_135 : f32 to vector<32x384xf32>
    %441 = arith.mulf %440, %439 : vector<32x384xf32>
    %cst_136 = arith.constant 4.471500e-02 : f32
    %442 = vector.broadcast %cst_136 : f32 to vector<32x384xf32>
    %443 = arith.mulf %442, %439 : vector<32x384xf32>
    %444 = arith.mulf %443, %439 : vector<32x384xf32>
    %445 = arith.mulf %444, %439 : vector<32x384xf32>
    %446 = arith.addf %439, %445 : vector<32x384xf32>
    %cst_137 = arith.constant 0.797884583 : f32
    %447 = vector.broadcast %cst_137 : f32 to vector<32x384xf32>
    %448 = arith.mulf %447, %446 : vector<32x384xf32>
    %449 = math.tanh %448 : vector<32x384xf32>
    %cst_138 = arith.constant 1.000000e+00 : f32
    %450 = vector.broadcast %cst_138 : f32 to vector<32x384xf32>
    %451 = arith.addf %450, %449 : vector<32x384xf32>
    %452 = arith.mulf %441, %451 : vector<32x384xf32>
    %cst_139 = arith.constant dense<0.000000e+00> : vector<32xf32>
    %453 = vector.multi_reduction <add>, %452, %cst_139 [1] : vector<32x384xf32> to vector<32xf32>
    %454 = vector.shape_cast %453 : vector<32xf32> to vector<32x1xf32>
    %cst_140 = arith.constant 0.00333333341 : f32
    %455 = vector.broadcast %cst_140 : f32 to vector<32x1xf32>
    %456 = arith.mulf %454, %455 : vector<32x1xf32>
    %457 = vector.broadcast %456 : vector<32x1xf32> to vector<32x384xf32>
    %458 = arith.subf %452, %457 : vector<32x384xf32>
    %459 = vector.broadcast %58 : vector<1x384xf32> to vector<32x384xf32>
    %460 = arith.mulf %458, %459 : vector<32x384xf32>
    %461 = arith.mulf %460, %460 : vector<32x384xf32>
    %cst_141 = arith.constant dense<0.000000e+00> : vector<32xf32>
    %462 = vector.multi_reduction <add>, %461, %cst_141 [1] : vector<32x384xf32> to vector<32xf32>
    %463 = vector.shape_cast %462 : vector<32xf32> to vector<32x1xf32>
    %cst_142 = arith.constant 0.00333333341 : f32
    %464 = vector.broadcast %cst_142 : f32 to vector<32x1xf32>
    %465 = arith.mulf %463, %464 : vector<32x1xf32>
    %466 = vector.broadcast %456 : vector<32x1xf32> to vector<32x384xf32>
    %467 = arith.subf %452, %466 : vector<32x384xf32>
    %cst_143 = arith.constant 9.99999974E-6 : f32
    %468 = vector.broadcast %cst_143 : f32 to vector<32x1xf32>
    %469 = arith.addf %465, %468 : vector<32x1xf32>
    %470 = math.rsqrt %469 : vector<32x1xf32>
    %471 = vector.broadcast %470 : vector<32x1xf32> to vector<32x384xf32>
    %472 = arith.mulf %467, %471 : vector<32x384xf32>
    %473 = vector.broadcast %277 : vector<1x384xf32> to vector<32x384xf32>
    %474 = arith.mulf %472, %473 : vector<32x384xf32>
    %475 = vector.broadcast %278 : vector<1x384xf32> to vector<32x384xf32>
    %476 = arith.addf %474, %475 : vector<32x384xf32>
    %c1_144 = arith.constant 1 : index
    %c24_145 = arith.constant 24 : index
    %c0_146 = arith.constant 0 : index
    %477 = vector.load %arg6[%c1_144, %c24_145, %c0_146] : memref<3x408x12xf32, #tpu.memory_space<vmem>>, vector<1x384x12xf32>
    %478 = vector.shape_cast %477 : vector<1x384x12xf32> to vector<384x12xf32>
    %cst_147 = arith.constant dense<0.000000e+00> : vector<32x12xf32>
    %479 = tpu.matmul %476, %478, %cst_147 {dimension_numbers = #tpu.dot_dimension_numbers<[1], [0], [0], [1], [0, 0, 1, 1], [], []>} : vector<32x384xf32>, vector<384x12xf32>, vector<32x12xf32> -> vector<32x12xf32>
    %480 = arith.addf %422, %479 : vector<32x12xf32>
    %481 = vector.broadcast %275 : vector<1x12xf32> to vector<32x12xf32>
    %482 = arith.addf %480, %481 : vector<32x12xf32>
    %c2_148 = arith.constant 2 : index
    %c0_149 = arith.constant 0 : index
    %c0_150 = arith.constant 0 : index
    %483 = vector.load %arg7[%c2_148, %c0_149, %c0_150] : memref<3x6x384xf32, #tpu.memory_space<vmem>>, vector<1x6x384xf32>
    %484 = vector.shape_cast %483 : vector<1x6x384xf32> to vector<6x384xf32>
    %485 = vector.extract_strided_slice %484 {offsets = [0, 0], sizes = [1, 12], strides = [1, 1]} : vector<6x384xf32> to vector<1x12xf32>
    %486 = vector.extract_strided_slice %484 {offsets = [1, 0], sizes = [1, 12], strides = [1, 1]} : vector<6x384xf32> to vector<1x12xf32>
    %487 = vector.extract_strided_slice %484 {offsets = [2, 0], sizes = [1, 12], strides = [1, 1]} : vector<6x384xf32> to vector<1x12xf32>
    %488 = vector.extract_strided_slice %484 {offsets = [3, 0], sizes = [1, 384], strides = [1, 1]} : vector<6x384xf32> to vector<1x384xf32>
    %489 = vector.extract_strided_slice %484 {offsets = [4, 0], sizes = [1, 384], strides = [1, 1]} : vector<6x384xf32> to vector<1x384xf32>
    %490 = vector.extract_strided_slice %484 {offsets = [5, 0], sizes = [1, 384], strides = [1, 1]} : vector<6x384xf32> to vector<1x384xf32>
    %491 = arith.mulf %482, %482 : vector<32x12xf32>
    %cst_151 = arith.constant dense<0.000000e+00> : vector<32xf32>
    %492 = vector.multi_reduction <add>, %491, %cst_151 [1] : vector<32x12xf32> to vector<32xf32>
    %493 = vector.shape_cast %492 : vector<32xf32> to vector<32x1xf32>
    %cst_152 = arith.constant 1.200000e+01 : f32
    %494 = vector.broadcast %cst_152 : f32 to vector<32x1xf32>
    %495 = arith.divf %493, %494 : vector<32x1xf32>
    %cst_153 = arith.constant 9.99999974E-6 : f32
    %496 = vector.broadcast %cst_153 : f32 to vector<32x1xf32>
    %497 = arith.addf %495, %496 : vector<32x1xf32>
    %498 = math.rsqrt %497 : vector<32x1xf32>
    %499 = vector.broadcast %498 : vector<32x1xf32> to vector<32x12xf32>
    %500 = arith.mulf %482, %499 : vector<32x12xf32>
    %501 = vector.broadcast %485 : vector<1x12xf32> to vector<32x12xf32>
    %502 = arith.mulf %500, %501 : vector<32x12xf32>
    %c2_154 = arith.constant 2 : index
    %c0_155 = arith.constant 0 : index
    %c384_156 = arith.constant 384 : index
    %503 = vector.load %arg5[%c2_154, %c0_155, %c384_156] : memref<3x12x480xf32, #tpu.memory_space<vmem>>, vector<1x12x96xf32>
    %504 = vector.shape_cast %503 : vector<1x12x96xf32> to vector<12x96xf32>
    %cst_157 = arith.constant dense<0.000000e+00> : vector<32x96xf32>
    %505 = tpu.matmul %502, %504, %cst_157 {dimension_numbers = #tpu.dot_dimension_numbers<[1], [0], [0], [1], [0, 0, 1, 1], [], []>} : vector<32x12xf32>, vector<12x96xf32>, vector<32x96xf32> -> vector<32x96xf32>
    %c0_158 = arith.constant 0 : index
    %c0_159 = arith.constant 0 : index
    %506 = vector.load %arg1[%c0_158, %c0_159] : memref<32x24xf32, #tpu.memory_space<vmem>>, vector<32x24xf32>
    %507 = vector.extract_strided_slice %506 {offsets = [0, 0], sizes = [32, 12], strides = [1, 1]} : vector<32x24xf32> to vector<32x12xf32>
    %508 = vector.extract_strided_slice %506 {offsets = [0, 12], sizes = [32, 12], strides = [1, 1]} : vector<32x24xf32> to vector<32x12xf32>
    %509 = vector.extract_strided_slice %505 {offsets = [0, 0], sizes = [32, 12], strides = [1, 1]} : vector<32x96xf32> to vector<32x12xf32>
    %510 = arith.mulf %509, %508 : vector<32x12xf32>
    %511 = vector.extract_strided_slice %505 {offsets = [0, 12], sizes = [32, 12], strides = [1, 1]} : vector<32x96xf32> to vector<32x12xf32>
    %512 = arith.mulf %511, %507 : vector<32x12xf32>
    %513 = arith.addf %510, %512 : vector<32x12xf32>
    %514 = vector.extract_strided_slice %505 {offsets = [0, 24], sizes = [32, 12], strides = [1, 1]} : vector<32x96xf32> to vector<32x12xf32>
    %515 = arith.mulf %514, %508 : vector<32x12xf32>
    %516 = vector.extract_strided_slice %505 {offsets = [0, 36], sizes = [32, 12], strides = [1, 1]} : vector<32x96xf32> to vector<32x12xf32>
    %517 = arith.mulf %516, %507 : vector<32x12xf32>
    %518 = arith.addf %515, %517 : vector<32x12xf32>
    %519 = vector.extract_strided_slice %505 {offsets = [0, 48], sizes = [32, 24], strides = [1, 1]} : vector<32x96xf32> to vector<32x24xf32>
    %520 = vector.extract_strided_slice %505 {offsets = [0, 72], sizes = [32, 24], strides = [1, 1]} : vector<32x96xf32> to vector<32x24xf32>
    %cst_160 = arith.constant 0.000000e+00 : f32
    %521 = vector.broadcast %cst_160 : f32 to vector<32x24xf32>
    %522 = vector.broadcast %19 : vector<1x12xf32> to vector<32x12xf32>
    %523 = arith.mulf %513, %522 : vector<32x12xf32>
    %cst_161 = arith.constant dense<0.000000e+00> : vector<32x32xf32>
    %524 = tpu.matmul %523, %518, %cst_161 {dimension_numbers = #tpu.dot_dimension_numbers<[1], [1], [0], [0], [0, 0, 1, 0], [], []>} : vector<32x12xf32>, vector<32x12xf32>, vector<32x32xf32> -> vector<32x32xf32>
    %c0_162 = arith.constant 0 : index
    %c0_163 = arith.constant 0 : index
    %c0_164 = arith.constant 0 : index
    %525 = vector.load %arg2[%c0_162, %c0_163, %c0_164] : memref<3x32x32xf32, #tpu.memory_space<vmem>>, vector<1x32x32xf32>
    %526 = vector.shape_cast %525 : vector<1x32x32xf32> to vector<32x32xf32>
    %527 = arith.mulf %524, %526 : vector<32x32xf32>
    %528 = math.absf %527 : vector<32x32xf32>
    %cst_165 = arith.constant dense<0.000000e+00> : vector<32xf32>
    %529 = vector.multi_reduction <add>, %528, %cst_165 [1] : vector<32x32xf32> to vector<32xf32>
    %530 = vector.shape_cast %529 : vector<32xf32> to vector<32x1xf32>
    %cst_166 = arith.constant 1.000000e+00 : f32
    %cst_167 = arith.constant 5.000000e+04 : f32
    %531 = vector.broadcast %cst_166 : f32 to vector<32x1xf32>
    %532 = arith.maximumf %531, %530 : vector<32x1xf32>
    %533 = vector.broadcast %cst_167 : f32 to vector<32x1xf32>
    %534 = arith.minimumf %533, %532 : vector<32x1xf32>
    %535 = tpu.reciprocal %534 {approx = true} : vector<32x1xf32> -> vector<32x1xf32>
    %536 = vector.broadcast %535 : vector<32x1xf32> to vector<32x32xf32>
    %537 = arith.mulf %527, %536 : vector<32x32xf32>
    %538 = vector.broadcast %40 : vector<1x24xf32> to vector<32x24xf32>
    %539 = arith.mulf %519, %538 : vector<32x24xf32>
    %cst_168 = arith.constant dense<0.000000e+00> : vector<32x24xf32>
    %540 = tpu.matmul %537, %539, %cst_168 {dimension_numbers = #tpu.dot_dimension_numbers<[1], [0], [0], [1], [0, 0, 1, 1], [], []>} : vector<32x32xf32>, vector<32x24xf32>, vector<32x24xf32> -> vector<32x24xf32>
    %541 = arith.addf %521, %540 : vector<32x24xf32>
    %542 = vector.broadcast %26 : vector<1x12xf32> to vector<32x12xf32>
    %543 = arith.mulf %513, %542 : vector<32x12xf32>
    %cst_169 = arith.constant dense<0.000000e+00> : vector<32x32xf32>
    %544 = tpu.matmul %543, %518, %cst_169 {dimension_numbers = #tpu.dot_dimension_numbers<[1], [1], [0], [0], [0, 0, 1, 0], [], []>} : vector<32x12xf32>, vector<32x12xf32>, vector<32x32xf32> -> vector<32x32xf32>
    %c1_170 = arith.constant 1 : index
    %c0_171 = arith.constant 0 : index
    %c0_172 = arith.constant 0 : index
    %545 = vector.load %arg2[%c1_170, %c0_171, %c0_172] : memref<3x32x32xf32, #tpu.memory_space<vmem>>, vector<1x32x32xf32>
    %546 = vector.shape_cast %545 : vector<1x32x32xf32> to vector<32x32xf32>
    %547 = arith.mulf %544, %546 : vector<32x32xf32>
    %548 = math.absf %547 : vector<32x32xf32>
    %cst_173 = arith.constant dense<0.000000e+00> : vector<32xf32>
    %549 = vector.multi_reduction <add>, %548, %cst_173 [1] : vector<32x32xf32> to vector<32xf32>
    %550 = vector.shape_cast %549 : vector<32xf32> to vector<32x1xf32>
    %cst_174 = arith.constant 1.000000e+00 : f32
    %cst_175 = arith.constant 5.000000e+04 : f32
    %551 = vector.broadcast %cst_174 : f32 to vector<32x1xf32>
    %552 = arith.maximumf %551, %550 : vector<32x1xf32>
    %553 = vector.broadcast %cst_175 : f32 to vector<32x1xf32>
    %554 = arith.minimumf %553, %552 : vector<32x1xf32>
    %555 = tpu.reciprocal %554 {approx = true} : vector<32x1xf32> -> vector<32x1xf32>
    %556 = vector.broadcast %555 : vector<32x1xf32> to vector<32x32xf32>
    %557 = arith.mulf %547, %556 : vector<32x32xf32>
    %558 = vector.broadcast %47 : vector<1x24xf32> to vector<32x24xf32>
    %559 = arith.mulf %519, %558 : vector<32x24xf32>
    %cst_176 = arith.constant dense<0.000000e+00> : vector<32x24xf32>
    %560 = tpu.matmul %557, %559, %cst_176 {dimension_numbers = #tpu.dot_dimension_numbers<[1], [0], [0], [1], [0, 0, 1, 1], [], []>} : vector<32x32xf32>, vector<32x24xf32>, vector<32x24xf32> -> vector<32x24xf32>
    %561 = arith.addf %541, %560 : vector<32x24xf32>
    %562 = vector.broadcast %33 : vector<1x12xf32> to vector<32x12xf32>
    %563 = arith.mulf %513, %562 : vector<32x12xf32>
    %cst_177 = arith.constant dense<0.000000e+00> : vector<32x32xf32>
    %564 = tpu.matmul %563, %518, %cst_177 {dimension_numbers = #tpu.dot_dimension_numbers<[1], [1], [0], [0], [0, 0, 1, 0], [], []>} : vector<32x12xf32>, vector<32x12xf32>, vector<32x32xf32> -> vector<32x32xf32>
    %c2_178 = arith.constant 2 : index
    %c0_179 = arith.constant 0 : index
    %c0_180 = arith.constant 0 : index
    %565 = vector.load %arg2[%c2_178, %c0_179, %c0_180] : memref<3x32x32xf32, #tpu.memory_space<vmem>>, vector<1x32x32xf32>
    %566 = vector.shape_cast %565 : vector<1x32x32xf32> to vector<32x32xf32>
    %567 = arith.mulf %564, %566 : vector<32x32xf32>
    %568 = math.absf %567 : vector<32x32xf32>
    %cst_181 = arith.constant dense<0.000000e+00> : vector<32xf32>
    %569 = vector.multi_reduction <add>, %568, %cst_181 [1] : vector<32x32xf32> to vector<32xf32>
    %570 = vector.shape_cast %569 : vector<32xf32> to vector<32x1xf32>
    %cst_182 = arith.constant 1.000000e+00 : f32
    %cst_183 = arith.constant 5.000000e+04 : f32
    %571 = vector.broadcast %cst_182 : f32 to vector<32x1xf32>
    %572 = arith.maximumf %571, %570 : vector<32x1xf32>
    %573 = vector.broadcast %cst_183 : f32 to vector<32x1xf32>
    %574 = arith.minimumf %573, %572 : vector<32x1xf32>
    %575 = tpu.reciprocal %574 {approx = true} : vector<32x1xf32> -> vector<32x1xf32>
    %576 = vector.broadcast %575 : vector<32x1xf32> to vector<32x32xf32>
    %577 = arith.mulf %567, %576 : vector<32x32xf32>
    %578 = vector.broadcast %54 : vector<1x24xf32> to vector<32x24xf32>
    %579 = arith.mulf %519, %578 : vector<32x24xf32>
    %cst_184 = arith.constant dense<0.000000e+00> : vector<32x24xf32>
    %580 = tpu.matmul %577, %579, %cst_184 {dimension_numbers = #tpu.dot_dimension_numbers<[1], [0], [0], [1], [0, 0, 1, 1], [], []>} : vector<32x32xf32>, vector<32x24xf32>, vector<32x24xf32> -> vector<32x24xf32>
    %581 = arith.addf %561, %580 : vector<32x24xf32>
    %582 = arith.mulf %581, %581 : vector<32x24xf32>
    %cst_185 = arith.constant 0.000000e+00 : f32
    %583 = vector.broadcast %cst_185 : f32 to vector<32x24xf32>
    %584 = vector.broadcast %40 : vector<1x24xf32> to vector<32x24xf32>
    %585 = arith.mulf %582, %584 : vector<32x24xf32>
    %cst_186 = arith.constant dense<0.000000e+00> : vector<32xf32>
    %586 = vector.multi_reduction <add>, %585, %cst_186 [1] : vector<32x24xf32> to vector<32xf32>
    %587 = vector.shape_cast %586 : vector<32xf32> to vector<32x1xf32>
    %cst_187 = arith.constant 1.250000e-01 : f32
    %588 = vector.broadcast %cst_187 : f32 to vector<32x1xf32>
    %589 = arith.mulf %587, %588 : vector<32x1xf32>
    %cst_188 = arith.constant 9.99999974E-6 : f32
    %590 = vector.broadcast %cst_188 : f32 to vector<32x1xf32>
    %591 = arith.addf %589, %590 : vector<32x1xf32>
    %592 = math.rsqrt %591 : vector<32x1xf32>
    %593 = vector.broadcast %40 : vector<1x24xf32> to vector<32x24xf32>
    %594 = vector.broadcast %592 : vector<32x1xf32> to vector<32x24xf32>
    %595 = arith.mulf %593, %594 : vector<32x24xf32>
    %596 = arith.addf %583, %595 : vector<32x24xf32>
    %597 = vector.broadcast %47 : vector<1x24xf32> to vector<32x24xf32>
    %598 = arith.mulf %582, %597 : vector<32x24xf32>
    %cst_189 = arith.constant dense<0.000000e+00> : vector<32xf32>
    %599 = vector.multi_reduction <add>, %598, %cst_189 [1] : vector<32x24xf32> to vector<32xf32>
    %600 = vector.shape_cast %599 : vector<32xf32> to vector<32x1xf32>
    %cst_190 = arith.constant 1.250000e-01 : f32
    %601 = vector.broadcast %cst_190 : f32 to vector<32x1xf32>
    %602 = arith.mulf %600, %601 : vector<32x1xf32>
    %cst_191 = arith.constant 9.99999974E-6 : f32
    %603 = vector.broadcast %cst_191 : f32 to vector<32x1xf32>
    %604 = arith.addf %602, %603 : vector<32x1xf32>
    %605 = math.rsqrt %604 : vector<32x1xf32>
    %606 = vector.broadcast %47 : vector<1x24xf32> to vector<32x24xf32>
    %607 = vector.broadcast %605 : vector<32x1xf32> to vector<32x24xf32>
    %608 = arith.mulf %606, %607 : vector<32x24xf32>
    %609 = arith.addf %596, %608 : vector<32x24xf32>
    %610 = vector.broadcast %54 : vector<1x24xf32> to vector<32x24xf32>
    %611 = arith.mulf %582, %610 : vector<32x24xf32>
    %cst_192 = arith.constant dense<0.000000e+00> : vector<32xf32>
    %612 = vector.multi_reduction <add>, %611, %cst_192 [1] : vector<32x24xf32> to vector<32xf32>
    %613 = vector.shape_cast %612 : vector<32xf32> to vector<32x1xf32>
    %cst_193 = arith.constant 1.250000e-01 : f32
    %614 = vector.broadcast %cst_193 : f32 to vector<32x1xf32>
    %615 = arith.mulf %613, %614 : vector<32x1xf32>
    %cst_194 = arith.constant 9.99999974E-6 : f32
    %616 = vector.broadcast %cst_194 : f32 to vector<32x1xf32>
    %617 = arith.addf %615, %616 : vector<32x1xf32>
    %618 = math.rsqrt %617 : vector<32x1xf32>
    %619 = vector.broadcast %54 : vector<1x24xf32> to vector<32x24xf32>
    %620 = vector.broadcast %618 : vector<32x1xf32> to vector<32x24xf32>
    %621 = arith.mulf %619, %620 : vector<32x24xf32>
    %622 = arith.addf %609, %621 : vector<32x24xf32>
    %623 = arith.negf %520 : vector<32x24xf32>
    %624 = math.exp %623 : vector<32x24xf32>
    %cst_195 = arith.constant 1.000000e+00 : f32
    %625 = vector.broadcast %cst_195 : f32 to vector<32x24xf32>
    %626 = arith.addf %625, %624 : vector<32x24xf32>
    %627 = arith.divf %625, %626 : vector<32x24xf32>
    %628 = arith.mulf %520, %627 : vector<32x24xf32>
    %629 = arith.mulf %581, %622 : vector<32x24xf32>
    %630 = arith.mulf %628, %629 : vector<32x24xf32>
    %c2_196 = arith.constant 2 : index
    %c0_197 = arith.constant 0 : index
    %c0_198 = arith.constant 0 : index
    %631 = vector.load %arg6[%c2_196, %c0_197, %c0_198] : memref<3x408x12xf32, #tpu.memory_space<vmem>>, vector<1x24x12xf32>
    %632 = vector.shape_cast %631 : vector<1x24x12xf32> to vector<24x12xf32>
    %cst_199 = arith.constant dense<0.000000e+00> : vector<32x12xf32>
    %633 = tpu.matmul %630, %632, %cst_199 {dimension_numbers = #tpu.dot_dimension_numbers<[1], [0], [0], [1], [0, 0, 1, 1], [], []>} : vector<32x24xf32>, vector<24x12xf32>, vector<32x12xf32> -> vector<32x12xf32>
    %634 = arith.addf %482, %633 : vector<32x12xf32>
    %635 = arith.mulf %634, %634 : vector<32x12xf32>
    %cst_200 = arith.constant dense<0.000000e+00> : vector<32xf32>
    %636 = vector.multi_reduction <add>, %635, %cst_200 [1] : vector<32x12xf32> to vector<32xf32>
    %637 = vector.shape_cast %636 : vector<32xf32> to vector<32x1xf32>
    %cst_201 = arith.constant 1.200000e+01 : f32
    %638 = vector.broadcast %cst_201 : f32 to vector<32x1xf32>
    %639 = arith.divf %637, %638 : vector<32x1xf32>
    %cst_202 = arith.constant 9.99999974E-6 : f32
    %640 = vector.broadcast %cst_202 : f32 to vector<32x1xf32>
    %641 = arith.addf %639, %640 : vector<32x1xf32>
    %642 = math.rsqrt %641 : vector<32x1xf32>
    %643 = vector.broadcast %642 : vector<32x1xf32> to vector<32x12xf32>
    %644 = arith.mulf %634, %643 : vector<32x12xf32>
    %645 = vector.broadcast %486 : vector<1x12xf32> to vector<32x12xf32>
    %646 = arith.mulf %644, %645 : vector<32x12xf32>
    %c2_203 = arith.constant 2 : index
    %c0_204 = arith.constant 0 : index
    %c0_205 = arith.constant 0 : index
    %647 = vector.load %arg5[%c2_203, %c0_204, %c0_205] : memref<3x12x480xf32, #tpu.memory_space<vmem>>, vector<1x12x384xf32>
    %648 = vector.shape_cast %647 : vector<1x12x384xf32> to vector<12x384xf32>
    %cst_206 = arith.constant dense<0.000000e+00> : vector<32x384xf32>
    %649 = tpu.matmul %646, %648, %cst_206 {dimension_numbers = #tpu.dot_dimension_numbers<[1], [0], [0], [1], [0, 0, 1, 1], [], []>} : vector<32x12xf32>, vector<12x384xf32>, vector<32x384xf32> -> vector<32x384xf32>
    %650 = vector.broadcast %488 : vector<1x384xf32> to vector<32x384xf32>
    %651 = arith.addf %649, %650 : vector<32x384xf32>
    %cst_207 = arith.constant 5.000000e-01 : f32
    %652 = vector.broadcast %cst_207 : f32 to vector<32x384xf32>
    %653 = arith.mulf %652, %651 : vector<32x384xf32>
    %cst_208 = arith.constant 4.471500e-02 : f32
    %654 = vector.broadcast %cst_208 : f32 to vector<32x384xf32>
    %655 = arith.mulf %654, %651 : vector<32x384xf32>
    %656 = arith.mulf %655, %651 : vector<32x384xf32>
    %657 = arith.mulf %656, %651 : vector<32x384xf32>
    %658 = arith.addf %651, %657 : vector<32x384xf32>
    %cst_209 = arith.constant 0.797884583 : f32
    %659 = vector.broadcast %cst_209 : f32 to vector<32x384xf32>
    %660 = arith.mulf %659, %658 : vector<32x384xf32>
    %661 = math.tanh %660 : vector<32x384xf32>
    %cst_210 = arith.constant 1.000000e+00 : f32
    %662 = vector.broadcast %cst_210 : f32 to vector<32x384xf32>
    %663 = arith.addf %662, %661 : vector<32x384xf32>
    %664 = arith.mulf %653, %663 : vector<32x384xf32>
    %cst_211 = arith.constant dense<0.000000e+00> : vector<32xf32>
    %665 = vector.multi_reduction <add>, %664, %cst_211 [1] : vector<32x384xf32> to vector<32xf32>
    %666 = vector.shape_cast %665 : vector<32xf32> to vector<32x1xf32>
    %cst_212 = arith.constant 0.00333333341 : f32
    %667 = vector.broadcast %cst_212 : f32 to vector<32x1xf32>
    %668 = arith.mulf %666, %667 : vector<32x1xf32>
    %669 = vector.broadcast %668 : vector<32x1xf32> to vector<32x384xf32>
    %670 = arith.subf %664, %669 : vector<32x384xf32>
    %671 = vector.broadcast %58 : vector<1x384xf32> to vector<32x384xf32>
    %672 = arith.mulf %670, %671 : vector<32x384xf32>
    %673 = arith.mulf %672, %672 : vector<32x384xf32>
    %cst_213 = arith.constant dense<0.000000e+00> : vector<32xf32>
    %674 = vector.multi_reduction <add>, %673, %cst_213 [1] : vector<32x384xf32> to vector<32xf32>
    %675 = vector.shape_cast %674 : vector<32xf32> to vector<32x1xf32>
    %cst_214 = arith.constant 0.00333333341 : f32
    %676 = vector.broadcast %cst_214 : f32 to vector<32x1xf32>
    %677 = arith.mulf %675, %676 : vector<32x1xf32>
    %678 = vector.broadcast %668 : vector<32x1xf32> to vector<32x384xf32>
    %679 = arith.subf %664, %678 : vector<32x384xf32>
    %cst_215 = arith.constant 9.99999974E-6 : f32
    %680 = vector.broadcast %cst_215 : f32 to vector<32x1xf32>
    %681 = arith.addf %677, %680 : vector<32x1xf32>
    %682 = math.rsqrt %681 : vector<32x1xf32>
    %683 = vector.broadcast %682 : vector<32x1xf32> to vector<32x384xf32>
    %684 = arith.mulf %679, %683 : vector<32x384xf32>
    %685 = vector.broadcast %489 : vector<1x384xf32> to vector<32x384xf32>
    %686 = arith.mulf %684, %685 : vector<32x384xf32>
    %687 = vector.broadcast %490 : vector<1x384xf32> to vector<32x384xf32>
    %688 = arith.addf %686, %687 : vector<32x384xf32>
    %c2_216 = arith.constant 2 : index
    %c24_217 = arith.constant 24 : index
    %c0_218 = arith.constant 0 : index
    %689 = vector.load %arg6[%c2_216, %c24_217, %c0_218] : memref<3x408x12xf32, #tpu.memory_space<vmem>>, vector<1x384x12xf32>
    %690 = vector.shape_cast %689 : vector<1x384x12xf32> to vector<384x12xf32>
    %cst_219 = arith.constant dense<0.000000e+00> : vector<32x12xf32>
    %691 = tpu.matmul %688, %690, %cst_219 {dimension_numbers = #tpu.dot_dimension_numbers<[1], [0], [0], [1], [0, 0, 1, 1], [], []>} : vector<32x384xf32>, vector<384x12xf32>, vector<32x12xf32> -> vector<32x12xf32>
    %692 = arith.addf %634, %691 : vector<32x12xf32>
    %693 = vector.broadcast %487 : vector<1x12xf32> to vector<32x12xf32>
    %694 = arith.addf %692, %693 : vector<32x12xf32>
    %695 = arith.mulf %694, %694 : vector<32x12xf32>
    %cst_220 = arith.constant dense<0.000000e+00> : vector<32xf32>
    %696 = vector.multi_reduction <add>, %695, %cst_220 [1] : vector<32x12xf32> to vector<32xf32>
    %697 = vector.shape_cast %696 : vector<32xf32> to vector<32x1xf32>
    %cst_221 = arith.constant 1.200000e+01 : f32
    %698 = vector.broadcast %cst_221 : f32 to vector<32x1xf32>
    %699 = arith.divf %697, %698 : vector<32x1xf32>
    %cst_222 = arith.constant 9.99999974E-6 : f32
    %700 = vector.broadcast %cst_222 : f32 to vector<32x1xf32>
    %701 = arith.addf %699, %700 : vector<32x1xf32>
    %702 = math.rsqrt %701 : vector<32x1xf32>
    %703 = vector.broadcast %702 : vector<32x1xf32> to vector<32x12xf32>
    %704 = arith.mulf %694, %703 : vector<32x12xf32>
    %705 = vector.broadcast %3 : vector<1x12xf32> to vector<32x12xf32>
    %706 = arith.mulf %704, %705 : vector<32x12xf32>
    %c0_223 = arith.constant 0 : index
    %c0_224 = arith.constant 0 : index
    %707 = vector.load %arg4[%c0_223, %c0_224] : memref<12x2xf32, #tpu.memory_space<vmem>>, vector<12x2xf32>
    %cst_225 = arith.constant dense<0.000000e+00> : vector<32x2xf32>
    %708 = tpu.matmul %706, %707, %cst_225 {dimension_numbers = #tpu.dot_dimension_numbers<[1], [0], [0], [1], [0, 0, 1, 1], [], []>} : vector<32x12xf32>, vector<12x2xf32>, vector<32x2xf32> -> vector<32x2xf32>
    %cst_226 = arith.constant dense<0xFF800000> : vector<32xf32>
    %709 = vector.multi_reduction <maximumf>, %708, %cst_226 [1] : vector<32x2xf32> to vector<32xf32>
    %710 = vector.shape_cast %709 : vector<32xf32> to vector<32x1xf32>
    %711 = vector.broadcast %710 : vector<32x1xf32> to vector<32x2xf32>
    %712 = arith.subf %708, %711 : vector<32x2xf32>
    %713 = math.exp %712 : vector<32x2xf32>
    %cst_227 = arith.constant dense<0.000000e+00> : vector<32xf32>
    %714 = vector.multi_reduction <add>, %713, %cst_227 [1] : vector<32x2xf32> to vector<32xf32>
    %715 = vector.shape_cast %714 : vector<32xf32> to vector<32x1xf32>
    %716 = math.log %715 : vector<32x1xf32>
    %717 = arith.addf %716, %710 : vector<32x1xf32>
    %718 = vector.broadcast %717 : vector<32x1xf32> to vector<32x2xf32>
    %719 = arith.subf %708, %718 : vector<32x2xf32>
    %c0_228 = arith.constant 0 : index
    %c0_229 = arith.constant 0 : index
    %720 = vector.load %arg8[%c0_228, %c0_229] : memref<32x2xf32, #tpu.memory_space<vmem>>, vector<32x2xf32>
    tpu.vector_store %arg8[%c0_228, %c0_229], %719 {strides = array<i32>} : memref<32x2xf32, #tpu.memory_space<vmem>>, vector<32x2xf32>,
    return
  }
}

</mosaic_0001>

<llo_original>
// kernel: tpu_custom_call.1
$region0: #{tpu_custom_call.1}
  #allocation0 [shape = 'u32[]', space=smem, size = 0x4, offset = 0x4, fixed_abs, tag = 'smem constant byte address 0x4 - core index']
  #allocation1 [shape = 'u32[72,128]{1,0:T(1,128)}', space=vmem, size = 0x9000, scoped, tag = 'internal scratch']
  %s0 = inlined_call_operand.vmem [shape: f32[32,1], index: 0, kind: input, shape index: {}]
  %s1 = inlined_call_operand.vmem [shape: f32[32,24], index: 1, kind: input, shape index: {}]
  %s2 = inlined_call_operand.vmem [shape: f32[3,32,32], index: 2, kind: input, shape index: {}]
  %s3 = inlined_call_operand.vmem [shape: f32[3,12], index: 3, kind: input, shape index: {}]
  %s4 = inlined_call_operand.vmem [shape: f32[12,2], index: 4, kind: input, shape index: {}]
  %s5 = inlined_call_operand.vmem [shape: f32[3,12,480], index: 5, kind: input, shape index: {}]
  %s6 = inlined_call_operand.vmem [shape: f32[3,408,12], index: 6, kind: input, shape index: {}]
  %s7 = inlined_call_operand.vmem [shape: f32[3,6,384], index: 7, kind: input, shape index: {}]
  %s8 = inlined_call_operand.vmem [shape: f32[32,2], index: 8, kind: output, shape index: {}]
  %s9 = sld [smem:[#allocation0]]
  $region42: #{tpu_custom_call.1} parent=0
    _
  %s11 = ssub.s32 1, %s9
  %s12 = scalar_select 0, %s11, %s9
  // Predicated region
  $region2: #{tpu_custom_call.1} parent=0 // pred_check
    _
  $region3: #{tpu_custom_call.1} parent=0 // pred_check_branch
    %14 = sbr.rel (0) target = $region5
  $region4: #{tpu_custom_call.1} parent=0 // pred_region
    _
  $region5: #{tpu_custom_call.1} parent=0 // pred_fallthru
    _
  // Predicated region
  $region6: #{tpu_custom_call.1} parent=0 // pred_check
    _
  $region7: #{tpu_custom_call.1} parent=0 // pred_check_branch
    %16 = sbr.rel (0) target = $region9
  $region8: #{tpu_custom_call.1} parent=0 // pred_region
    _
  $region9: #{tpu_custom_call.1} parent=0 // pred_fallthru
    _
  // Predicated region
  $region10: #{tpu_custom_call.1} parent=0 // pred_check
    _
  $region11: #{tpu_custom_call.1} parent=0 // pred_check_branch
    %18 = sbr.rel (0) target = $region13
  $region12: #{tpu_custom_call.1} parent=0 // pred_region
    _
  $region13: #{tpu_custom_call.1} parent=0 // pred_fallthru
    _
  // Predicated region
  $region14: #{tpu_custom_call.1} parent=0 // pred_check
    _
  $region15: #{tpu_custom_call.1} parent=0 // pred_check_branch
    %20 = sbr.rel (0) target = $region17
  $region16: #{tpu_custom_call.1} parent=0 // pred_region
    _
  $region17: #{tpu_custom_call.1} parent=0 // pred_fallthru
    _
  // Predicated region
  $region18: #{tpu_custom_call.1} parent=0 // pred_check
    _
  $region19: #{tpu_custom_call.1} parent=0 // pred_check_branch
    %22 = sbr.rel (0) target = $region21
  $region20: #{tpu_custom_call.1} parent=0 // pred_region
    _
  $region21: #{tpu_custom_call.1} parent=0 // pred_fallthru
    _
  // Predicated region
  $region22: #{tpu_custom_call.1} parent=0 // pred_check
    _
  $region23: #{tpu_custom_call.1} parent=0 // pred_check_branch
    %24 = sbr.rel (0) target = $region25
  $region24: #{tpu_custom_call.1} parent=0 // pred_region
    _
  $region25: #{tpu_custom_call.1} parent=0 // pred_fallthru
    _
  // Predicated region
  $region26: #{tpu_custom_call.1} parent=0 // pred_check
    _
  $region27: #{tpu_custom_call.1} parent=0 // pred_check_branch
    %26 = sbr.rel (0) target = $region29
  $region28: #{tpu_custom_call.1} parent=0 // pred_region
    _
  $region29: #{tpu_custom_call.1} parent=0 // pred_fallthru
    _
  // Predicated region
  $region30: #{tpu_custom_call.1} parent=0 // pred_check
    _
  $region31: #{tpu_custom_call.1} parent=0 // pred_check_branch
    %28 = sbr.rel (0) target = $region33
  $region32: #{tpu_custom_call.1} parent=0 // pred_region
    _
  $region33: #{tpu_custom_call.1} parent=0 // pred_fallthru
    _
  %v29 = vld [vmem:[%s3] sm:$0x7]
  %v30 = vld [vmem:[%s0] sm:$0xff]
  %v31 = vld [vmem:[%s0 + $0x8] sm:$0xff]
  %v32 = vld [vmem:[%s0 + $0x10] sm:$0xff]
  %v33 = vld [vmem:[%s0 + $0x18] sm:$0xff]
  %35 = vset.pattern.permute.xlu0 0
  %36 = vperm.xlu0 %35, %v30
  %v37 = vpop.permute.xlu0 %36
  %40 = vset.pattern.permute.xlu0 0
  %41 = vperm.xlu0 %40, %v31
  %v42 = vpop.permute.xlu0 %41
  %45 = vset.pattern.permute.xlu0 0
  %46 = vperm.xlu0 %45, %v32
  %v47 = vpop.permute.xlu0 %46
  %50 = vset.pattern.permute.xlu0 0
  %51 = vperm.xlu0 %50, %v33
  %v52 = vpop.permute.xlu0 %51
  %v54 = vperm.slane %v29, 1
  %v55 = vmul.f32 %v37, %v54
  %v56 = vmul.f32 %v42, %v54
  %v57 = vmul.f32 %v47, %v54
  %v58 = vmul.f32 %v52, %v54
  %v59 = vperm.slane %v29, 0
  %v60 = vadd.f32 %v59, %v55
  %v61 = vadd.f32 %v59, %v56
  %v62 = vadd.f32 %v59, %v57
  %v63 = vadd.f32 %v59, %v58
  %v64 = vlaneseq
  %v65 = vand.u32 %v64, 127
  %v66 = vadd.s32 %v65, 128
  %v67 = vadd.s32 %v65, 256
  %vm68 = vcmp.ge.s32.totalorder %v65, 0
  %vm69 = vcmp.lt.s32.totalorder %v65, 4
  %vm70 = vmand %vm68, %vm69
  %v71 = vsel %vm70, 1, 0
  %v72 = vcvt.s32.f32 %v71
  %vm73 = vcmp.ge.s32.totalorder %v65, 4
  %vm74 = vcmp.lt.s32.totalorder %v65, 8
  %vm75 = vmand %vm73, %vm74
  %v76 = vsel %vm75, 1, 0
  %v77 = vcvt.s32.f32 %v76
  %vm78 = vcmp.ge.s32.totalorder %v65, 8
  %vm79 = vcmp.lt.s32.totalorder %v65, 12
  %vm80 = vmand %vm78, %vm79
  %v81 = vsel %vm80, 1, 0
  %v82 = vcvt.s32.f32 %v81
  %vm83 = vmand %vm68, %vm74
  %v84 = vsel %vm83, 1, 0
  %v85 = vcvt.s32.f32 %v84
  %vm86 = vcmp.lt.s32.totalorder %v65, 16
  %vm87 = vmand %vm78, %vm86
  %v88 = vsel %vm87, 1, 0
  %v89 = vcvt.s32.f32 %v88
  %vm90 = vcmp.ge.s32.totalorder %v65, 16
  %vm91 = vcmp.lt.s32.totalorder %v65, 24
  %vm92 = vmand %vm90, %vm91
  %v93 = vsel %vm92, 1, 0
  %v94 = vcvt.s32.f32 %v93
  %vm95 = vcmp.lt.s32.totalorder %v65, 300
  %vm96 = vcmp.lt.s32.totalorder %v66, 300
  %vm97 = vcmp.lt.s32.totalorder %v67, 300
  %v98 = vsel %vm95, 1, 0
  %v99 = vsel %vm96, 1, 0
  %v100 = vsel %vm97, 1, 0
  %v101 = vcvt.s32.f32 %v98
  %v102 = vcvt.s32.f32 %v99
  %v103 = vcvt.s32.f32 %v100
  %v104 = vld [vmem:[%s7] sm:$0x3f]
  %v105 = vld [vmem:[%s7 + $0x8] sm:$0x3f]
  %v106 = vld [vmem:[%s7 + $0x10] sm:$0x3f]
  %v107 = vmul.f32 %v60, %v60
  %v108 = vmul.f32 %v61, %v61
  %v109 = vmul.f32 %v62, %v62
  %v110 = vmul.f32 %v63, %v63
  %vm111 = vcmask 97280
  %v112 = vsel %vm111, %v107, 0.0
  %113 = vadd.xlane.f32.xlu0 %v112
  %v114 = vpop.xlane.xlu0 %113
  %v115 = vsel %vm111, %v108, 0.0
  %116 = vadd.xlane.f32.xlu0 %v115
  %v117 = vpop.xlane.xlu0 %116
  %v118 = vsel %vm111, %v109, 0.0
  %119 = vadd.xlane.f32.xlu0 %v118
  %v120 = vpop.xlane.xlu0 %119
  %v121 = vsel %vm111, %v110, 0.0
  %122 = vadd.xlane.f32.xlu0 %v121
  %v123 = vpop.xlane.xlu0 %122
  %v124 = vrcp.pop 12.0
  %v125 = vmul.f32 12.0, %v124
  %v126 = vsub.f32 1.0, %v125
  %v127 = vmul.f32 %v124, %v126
  %v128 = vadd.f32 %v124, %v127
  %vm129 = vweird.f32 %v124
  %v130 = vsel %vm129, %v124, %v128
  %v131 = vmul.f32 %v114, %v130
  %v132 = vmul.f32 %v117, %v130
  %v133 = vmul.f32 %v120, %v130
  %v134 = vmul.f32 %v123, %v130
  %v135 = vadd.f32 %v131, 1e-05
  %v136 = vadd.f32 %v132, 1e-05
  %v137 = vadd.f32 %v133, 1e-05
  %v138 = vadd.f32 %v134, 1e-05
  %v139 = vrsqrt.pop %v135
  %v140 = vmul.f32 %v139, %v135
  %v141 = vmul.f32 %v140, %v139
  %v142 = vmul.f32 0.5, %v141
  %v143 = vsub.f32 1.5, %v142
  %v144 = vmul.f32 %v139, %v143
  %vm145 = vweird.f32 %v135
  %vm146 = vweird.f32 %v139
  %vm147 = vmor %vm145, %vm146
  %v148 = vsel %vm147, %v139, %v144
  %v149 = vrsqrt.pop %v136
  %v150 = vmul.f32 %v149, %v136
  %v151 = vmul.f32 %v150, %v149
  %v152 = vmul.f32 0.5, %v151
  %v153 = vsub.f32 1.5, %v152
  %v154 = vmul.f32 %v149, %v153
  %vm155 = vweird.f32 %v136
  %vm156 = vweird.f32 %v149
  %vm157 = vmor %vm155, %vm156
  %v158 = vsel %vm157, %v149, %v154
  %v159 = vrsqrt.pop %v137
  %v160 = vmul.f32 %v159, %v137
  %v161 = vmul.f32 %v160, %v159
  %v162 = vmul.f32 0.5, %v161
  %v163 = vsub.f32 1.5, %v162
  %v164 = vmul.f32 %v159, %v163
  %vm165 = vweird.f32 %v137
  %vm166 = vweird.f32 %v159
  %vm167 = vmor %vm165, %vm166
  %v168 = vsel %vm167, %v159, %v164
  %v169 = vrsqrt.pop %v138
  %v170 = vmul.f32 %v169, %v138
  %v171 = vmul.f32 %v170, %v169
  %v172 = vmul.f32 0.5, %v171
  %v173 = vsub.f32 1.5, %v172
  %v174 = vmul.f32 %v169, %v173
  %vm175 = vweird.f32 %v138
  %vm176 = vweird.f32 %v169
  %vm177 = vmor %vm175, %vm176
  %v178 = vsel %vm177, %v169, %v174
  %v179 = vmul.f32 %v60, %v148
  %v180 = vmul.f32 %v61, %v158
  %v181 = vmul.f32 %v62, %v168
  %v182 = vmul.f32 %v63, %v178
  %v183 = vperm.slane %v104, 0
  %v184 = vmul.f32 %v179, %v183
  %v185 = vmul.f32 %v180, %v183
  %v186 = vmul.f32 %v181, %v183
  %v187 = vmul.f32 %v182, %v183
  %v188 = vld [vmem:[%s5 + $0x18] sm:$0xff]
  %v189 = vld [vmem:[%s5 + $0x38] sm:$0xf]
  %v191 = vsel %vm111, %v184, 0
  %v194 = vsel %vm111, %v185, 0
  %v197 = vsel %vm111, %v186, 0
  %v200 = vsel %vm111, %v187, 0
  %vm202 = vcmask 1043456
  %v204 = vsel %vm202, %v189, 0
  %206 = vmatpush.msra.mxu0 0.0
  %207 = vmatpush.msra.mxu0 0.0
  %208 = vmatpush.msra.mxu0 0.0
  %209 = vmatpush.msra.mxu0 0.0
  %210 = vmatpush.msra.mxu0 0.0
  %211 = vmatpush.msra.mxu0 0.0
  %212 = vmatpush.msra.mxu0 0.0
  %213 = vmatpush.msra.mxu0 0.0
  %214 = vmatpush.msra.mxu0 0.0
  %215 = vmatpush.msra.mxu0 0.0
  %216 = vmatpush.msra.mxu0 0.0
  %217 = vmatpush.msra.mxu0 0.0
  %218 = vmatpush.msra.mxu0 0.0
  %219 = vmatpush.msra.mxu0 0.0
  %220 = vmatpush.msra.mxu0 %v204
  %221 = vmatpush.msra.mxu0 %v188
  %222 = vmatmul.f32.gmra.mxu0 %v191
  %v223 = vpop.f32.mrf.mxu0
  %v224 = vadd.f32 0.0, %v223
  %225 = vmatmul.f32.gmra.mxu0 %v194
  %v226 = vpop.f32.mrf.mxu0
  %v227 = vadd.f32 0.0, %v226
  %228 = vmatmul.f32.gmra.mxu0 %v197
  %v229 = vpop.f32.mrf.mxu0
  %v230 = vadd.f32 0.0, %v229
  %231 = vmatmul.f32.gmra.mxu0 %v200
  %v232 = vpop.f32.mrf.mxu0
  %v233 = vadd.f32 0.0, %v232
  %234 = vdwg.mxu0
  %v235 = vld [vmem:[%s1] sm:$0xff]
  %v236 = vld [vmem:[%s1 + $0x8] sm:$0xff]
  %v237 = vld [vmem:[%s1 + $0x10] sm:$0xff]
  %v238 = vld [vmem:[%s1 + $0x18] sm:$0xff]
  %243 = vrot.lane.b32.xlu0 %v235, 116
  %v244 = vpop.permute.xlu0 %243
  %245 = vrot.lane.b32.xlu0 %v236, 116
  %v246 = vpop.permute.xlu0 %245
  %247 = vrot.lane.b32.xlu0 %v237, 116
  %v248 = vpop.permute.xlu0 %247
  %249 = vrot.lane.b32.xlu0 %v238, 116
  %v250 = vpop.permute.xlu0 %249
  %v255 = vmul.f32 %v224, %v244
  %v256 = vmul.f32 %v227, %v246
  %v257 = vmul.f32 %v230, %v248
  %v258 = vmul.f32 %v233, %v250
  %259 = vrot.lane.b32.xlu0 %v235, 12
  %v260 = vpop.permute.xlu0 %259
  %261 = vrot.lane.b32.xlu0 %v236, 12
  %v262 = vpop.permute.xlu0 %261
  %263 = vrot.lane.b32.xlu0 %v237, 12
  %v264 = vpop.permute.xlu0 %263
  %265 = vrot.lane.b32.xlu0 %v238, 12
  %v266 = vpop.permute.xlu0 %265
  %v271 = vmul.f32 %v224, %v260
  %v272 = vmul.f32 %v227, %v262
  %v273 = vmul.f32 %v230, %v264
  %v274 = vmul.f32 %v233, %v266
  %279 = vrot.lane.b32.xlu0 %v271, 116
  %v280 = vpop.permute.xlu0 %279
  %281 = vrot.lane.b32.xlu0 %v272, 116
  %v282 = vpop.permute.xlu0 %281
  %283 = vrot.lane.b32.xlu0 %v273, 116
  %v284 = vpop.permute.xlu0 %283
  %285 = vrot.lane.b32.xlu0 %v274, 116
  %v286 = vpop.permute.xlu0 %285
  %v291 = vadd.f32 %v255, %v280
  %v292 = vadd.f32 %v256, %v282
  %v293 = vadd.f32 %v257, %v284
  %v294 = vadd.f32 %v258, %v286
  %295 = vrot.lane.b32.xlu0 %v235, 36
  %v296 = vpop.permute.xlu0 %295
  %297 = vrot.lane.b32.xlu0 %v236, 36
  %v298 = vpop.permute.xlu0 %297
  %299 = vrot.lane.b32.xlu0 %v237, 36
  %v300 = vpop.permute.xlu0 %299
  %301 = vrot.lane.b32.xlu0 %v238, 36
  %v302 = vpop.permute.xlu0 %301
  %v307 = vmul.f32 %v224, %v296
  %v308 = vmul.f32 %v227, %v298
  %v309 = vmul.f32 %v230, %v300
  %v310 = vmul.f32 %v233, %v302
  %315 = vrot.lane.b32.xlu0 %v307, 116
  %v316 = vpop.permute.xlu0 %315
  %317 = vrot.lane.b32.xlu0 %v308, 116
  %v318 = vpop.permute.xlu0 %317
  %319 = vrot.lane.b32.xlu0 %v309, 116
  %v320 = vpop.permute.xlu0 %319
  %321 = vrot.lane.b32.xlu0 %v310, 116
  %v322 = vpop.permute.xlu0 %321
  %v327 = vadd.f32 %v271, %v316
  %v328 = vadd.f32 %v272, %v318
  %v329 = vadd.f32 %v273, %v320
  %v330 = vadd.f32 %v274, %v322
  %v331 = vmul.f32 %v291, %v72
  %v332 = vmul.f32 %v292, %v72
  %v333 = vmul.f32 %v293, %v72
  %v334 = vmul.f32 %v294, %v72
  %339 = vrot.lane.b32.xlu0 %v327, 104
  %v340 = vpop.permute.xlu0 %339
  %341 = vrot.lane.b32.xlu0 %v328, 104
  %v342 = vpop.permute.xlu0 %341
  %343 = vrot.lane.b32.xlu0 %v329, 104
  %v344 = vpop.permute.xlu0 %343
  %345 = vrot.lane.b32.xlu0 %v330, 104
  %v346 = vpop.permute.xlu0 %345
  %v348 = vsel %vm111, %v331, 0
  %v351 = vsel %vm111, %v332, 0
  %v354 = vsel %vm111, %v333, 0
  %v357 = vsel %vm111, %v334, 0
  %v359 = vsel %vm111, %v340, 0
  %v361 = vsel %vm111, %v342, 0
  %v363 = vsel %vm111, %v344, 0
  %v365 = vsel %vm111, %v346, 0
  %367 = vmatpush.xpose.msra.mxu0 0.0
  %368 = vmatpush.xpose.msra.mxu0 0.0
  %369 = vmatpush.xpose.msra.mxu0 0.0
  %370 = vmatpush.xpose.msra.mxu0 0.0
  %371 = vmatpush.xpose.msra.mxu0 0.0
  %372 = vmatpush.xpose.msra.mxu0 0.0
  %373 = vmatpush.xpose.msra.mxu0 0.0
  %374 = vmatpush.xpose.msra.mxu0 0.0
  %375 = vmatpush.xpose.msra.mxu0 0.0
  %376 = vmatpush.xpose.msra.mxu0 0.0
  %377 = vmatpush.xpose.msra.mxu0 0.0
  %378 = vmatpush.xpose.msra.mxu0 0.0
  %379 = vmatpush.xpose.msra.mxu0 %v365
  %380 = vmatpush.xpose.msra.mxu0 %v363
  %381 = vmatpush.xpose.msra.mxu0 %v361
  %382 = vmatpush.xpose.msra.mxu0 %v359
  %383 = vmatmul.f32.gmra.mxu0 %v348
  %v384 = vpop.f32.mrf.mxu0
  %v385 = vadd.f32 0.0, %v384
  %386 = vmatmul.f32.gmra.mxu0 %v351
  %v387 = vpop.f32.mrf.mxu0
  %v388 = vadd.f32 0.0, %v387
  %389 = vmatmul.f32.gmra.mxu0 %v354
  %v390 = vpop.f32.mrf.mxu0
  %v391 = vadd.f32 0.0, %v390
  %392 = vmatmul.f32.gmra.mxu0 %v357
  %v393 = vpop.f32.mrf.mxu0
  %v394 = vadd.f32 0.0, %v393
  %395 = vdwg.mxu0
  %v396 = vld [vmem:[%s2] sm:$0xff]
  %v397 = vld [vmem:[%s2 + $0x8] sm:$0xff]
  %v398 = vld [vmem:[%s2 + $0x10] sm:$0xff]
  %v399 = vld [vmem:[%s2 + $0x18] sm:$0xff]
  %v400 = vmul.f32 %v385, %v396
  %v401 = vmul.f32 %v388, %v397
  %v402 = vmul.f32 %v391, %v398
  %v403 = vmul.f32 %v394, %v399
  %v404 = vand.u32 2147483647, %v400
  %v405 = vand.u32 2147483647, %v401
  %v406 = vand.u32 2147483647, %v402
  %v407 = vand.u32 2147483647, %v403
  %vm408 = vcmask 261120
  %v409 = vsel %vm408, %v404, 0.0
  %410 = vadd.xlane.f32.xlu0 %v409
  %v411 = vpop.xlane.xlu0 %410
  %v412 = vsel %vm408, %v405, 0.0
  %413 = vadd.xlane.f32.xlu0 %v412
  %v414 = vpop.xlane.xlu0 %413
  %v415 = vsel %vm408, %v406, 0.0
  %416 = vadd.xlane.f32.xlu0 %v415
  %v417 = vpop.xlane.xlu0 %416
  %v418 = vsel %vm408, %v407, 0.0
  %419 = vadd.xlane.f32.xlu0 %v418
  %v420 = vpop.xlane.xlu0 %419
  %v421 = vmax.f32 %v411, 1.0
  %v422 = vmax.f32 %v414, 1.0
  %v423 = vmax.f32 %v417, 1.0
  %v424 = vmax.f32 %v420, 1.0
  %v425 = vmin.f32 %v421, 50000.0
  %v426 = vmin.f32 %v422, 50000.0
  %v427 = vmin.f32 %v423, 50000.0
  %v428 = vmin.f32 %v424, 50000.0
  %v429 = vrcp.pop %v425
  %v430 = vrcp.pop %v426
  %v431 = vrcp.pop %v427
  %v432 = vrcp.pop %v428
  %v433 = vmul.f32 %v400, %v429
  %v434 = vmul.f32 %v401, %v430
  %v435 = vmul.f32 %v402, %v431
  %v436 = vmul.f32 %v403, %v432
  %438 = vrot.lane.b32.xlu0 %v85, 48
  %v439 = vpop.permute.xlu0 %438
  %v441 = vmul.f32 %v224, %v439
  %v442 = vmul.f32 %v227, %v439
  %v443 = vmul.f32 %v230, %v439
  %v444 = vmul.f32 %v233, %v439
  %v445 = vmul.f32 %v291, %v77
  %v446 = vmul.f32 %v292, %v77
  %v447 = vmul.f32 %v293, %v77
  %v448 = vmul.f32 %v294, %v77
  %v450 = vsel %vm111, %v445, 0
  %v453 = vsel %vm111, %v446, 0
  %v456 = vsel %vm111, %v447, 0
  %v459 = vsel %vm111, %v448, 0
  %461 = vmatpush.xpose.msra.mxu0 0.0
  %462 = vmatpush.xpose.msra.mxu0 0.0
  %463 = vmatpush.xpose.msra.mxu0 0.0
  %464 = vmatpush.xpose.msra.mxu0 0.0
  %465 = vmatpush.xpose.msra.mxu0 0.0
  %466 = vmatpush.xpose.msra.mxu0 0.0
  %467 = vmatpush.xpose.msra.mxu0 0.0
  %468 = vmatpush.xpose.msra.mxu0 0.0
  %469 = vmatpush.xpose.msra.mxu0 0.0
  %470 = vmatpush.xpose.msra.mxu0 0.0
  %471 = vmatpush.xpose.msra.mxu0 0.0
  %472 = vmatpush.xpose.msra.mxu0 0.0
  %473 = vmatpush.xpose.msra.mxu0 %v365
  %474 = vmatpush.xpose.msra.mxu0 %v363
  %475 = vmatpush.xpose.msra.mxu0 %v361
  %476 = vmatpush.xpose.msra.mxu0 %v359
  %477 = vmatmul.f32.gmra.mxu0 %v450
  %v478 = vpop.f32.mrf.mxu0
  %v479 = vadd.f32 0.0, %v478
  %480 = vmatmul.f32.gmra.mxu0 %v453
  %v481 = vpop.f32.mrf.mxu0
  %v482 = vadd.f32 0.0, %v481
  %483 = vmatmul.f32.gmra.mxu0 %v456
  %v484 = vpop.f32.mrf.mxu0
  %v485 = vadd.f32 0.0, %v484
  %486 = vmatmul.f32.gmra.mxu0 %v459
  %v487 = vpop.f32.mrf.mxu0
  %v488 = vadd.f32 0.0, %v487
  %489 = vdwg.mxu0
  %s490 = scalar_lea.vmem %s2, 32
  %v491 = vld [vmem:[%s490] sm:$0xff]
  %v492 = vld [vmem:[%s490 + $0x8] sm:$0xff]
  %v493 = vld [vmem:[%s490 + $0x10] sm:$0xff]
  %v494 = vld [vmem:[%s490 + $0x18] sm:$0xff]
  %v495 = vmul.f32 %v479, %v491
  %v496 = vmul.f32 %v482, %v492
  %v497 = vmul.f32 %v485, %v493
  %v498 = vmul.f32 %v488, %v494
  %v499 = vand.u32 2147483647, %v495
  %v500 = vand.u32 2147483647, %v496
  %v501 = vand.u32 2147483647, %v497
  %v502 = vand.u32 2147483647, %v498
  %v503 = vsel %vm408, %v499, 0.0
  %504 = vadd.xlane.f32.xlu0 %v503
  %v505 = vpop.xlane.xlu0 %504
  %v506 = vsel %vm408, %v500, 0.0
  %507 = vadd.xlane.f32.xlu0 %v506
  %v508 = vpop.xlane.xlu0 %507
  %v509 = vsel %vm408, %v501, 0.0
  %510 = vadd.xlane.f32.xlu0 %v509
  %v511 = vpop.xlane.xlu0 %510
  %v512 = vsel %vm408, %v502, 0.0
  %513 = vadd.xlane.f32.xlu0 %v512
  %v514 = vpop.xlane.xlu0 %513
  %v515 = vmax.f32 %v505, 1.0
  %v516 = vmax.f32 %v508, 1.0
  %v517 = vmax.f32 %v511, 1.0
  %v518 = vmax.f32 %v514, 1.0
  %v519 = vmin.f32 %v515, 50000.0
  %v520 = vmin.f32 %v516, 50000.0
  %v521 = vmin.f32 %v517, 50000.0
  %v522 = vmin.f32 %v518, 50000.0
  %v523 = vrcp.pop %v519
  %v524 = vrcp.pop %v520
  %v525 = vrcp.pop %v521
  %v526 = vrcp.pop %v522
  %v527 = vmul.f32 %v495, %v523
  %v528 = vmul.f32 %v496, %v524
  %v529 = vmul.f32 %v497, %v525
  %v530 = vmul.f32 %v498, %v526
  %532 = vrot.lane.b32.xlu0 %v89, 48
  %v533 = vpop.permute.xlu0 %532
  %v535 = vmul.f32 %v224, %v533
  %v536 = vmul.f32 %v227, %v533
  %v537 = vmul.f32 %v230, %v533
  %v538 = vmul.f32 %v233, %v533
  %543 = vrot.lane.b32.xlu0 %v535, 80
  %v544 = vpop.permute.xlu0 %543
  %545 = vrot.lane.b32.xlu0 %v536, 80
  %v546 = vpop.permute.xlu0 %545
  %547 = vrot.lane.b32.xlu0 %v537, 80
  %v548 = vpop.permute.xlu0 %547
  %549 = vrot.lane.b32.xlu0 %v538, 80
  %v550 = vpop.permute.xlu0 %549
  %v556 = vsel %vm408, %v527, 0
  %v559 = vsel %vm408, %v528, 0
  %v562 = vsel %vm408, %v529, 0
  %v565 = vsel %vm408, %v530, 0
  %567 = vmatpush.msra.mxu0 0.0
  %568 = vmatpush.msra.mxu0 0.0
  %569 = vmatpush.msra.mxu0 0.0
  %570 = vmatpush.msra.mxu0 0.0
  %571 = vmatpush.msra.mxu0 0.0
  %572 = vmatpush.msra.mxu0 0.0
  %573 = vmatpush.msra.mxu0 0.0
  %574 = vmatpush.msra.mxu0 0.0
  %575 = vmatpush.msra.mxu0 0.0
  %576 = vmatpush.msra.mxu0 0.0
  %577 = vmatpush.msra.mxu0 0.0
  %578 = vmatpush.msra.mxu0 0.0
  %579 = vmatpush.msra.mxu0 %v550
  %580 = vmatpush.msra.mxu0 %v548
  %581 = vmatpush.msra.mxu0 %v546
  %582 = vmatpush.msra.mxu0 %v544
  %583 = vmatmul.f32.gmra.mxu0 %v556
  %v584 = vpop.f32.mrf.mxu0
  %v585 = vadd.f32 0.0, %v584
  %586 = vmatmul.f32.gmra.mxu0 %v559
  %v587 = vpop.f32.mrf.mxu0
  %v588 = vadd.f32 0.0, %v587
  %589 = vmatmul.f32.gmra.mxu0 %v562
  %v590 = vpop.f32.mrf.mxu0
  %v591 = vadd.f32 0.0, %v590
  %592 = vmatmul.f32.gmra.mxu0 %v565
  %v593 = vpop.f32.mrf.mxu0
  %v594 = vadd.f32 0.0, %v593
  %595 = vdwg.mxu0
  %600 = vrot.lane.b32.xlu0 %v441, 80
  %v601 = vpop.permute.xlu0 %600
  %602 = vrot.lane.b32.xlu0 %v442, 80
  %v603 = vpop.permute.xlu0 %602
  %604 = vrot.lane.b32.xlu0 %v443, 80
  %v605 = vpop.permute.xlu0 %604
  %606 = vrot.lane.b32.xlu0 %v444, 80
  %v607 = vpop.permute.xlu0 %606
  %v613 = vsel %vm408, %v433, 0
  %v616 = vsel %vm408, %v434, 0
  %v619 = vsel %vm408, %v435, 0
  %v622 = vsel %vm408, %v436, 0
  %624 = vmatpush.msra.mxu0 0.0
  %625 = vmatpush.msra.mxu0 0.0
  %626 = vmatpush.msra.mxu0 0.0
  %627 = vmatpush.msra.mxu0 0.0
  %628 = vmatpush.msra.mxu0 0.0
  %629 = vmatpush.msra.mxu0 0.0
  %630 = vmatpush.msra.mxu0 0.0
  %631 = vmatpush.msra.mxu0 0.0
  %632 = vmatpush.msra.mxu0 0.0
  %633 = vmatpush.msra.mxu0 0.0
  %634 = vmatpush.msra.mxu0 0.0
  %635 = vmatpush.msra.mxu0 0.0
  %636 = vmatpush.msra.mxu0 %v607
  %637 = vmatpush.msra.mxu0 %v605
  %638 = vmatpush.msra.mxu0 %v603
  %639 = vmatpush.msra.mxu0 %v601
  %640 = vmatmul.f32.gmra.mxu0 %v613
  %v641 = vpop.f32.mrf.mxu0
  %v642 = vadd.f32 %v585, %v641
  %643 = vmatmul.f32.gmra.mxu0 %v616
  %v644 = vpop.f32.mrf.mxu0
  %v645 = vadd.f32 %v588, %v644
  %646 = vmatmul.f32.gmra.mxu0 %v619
  %v647 = vpop.f32.mrf.mxu0
  %v648 = vadd.f32 %v591, %v647
  %649 = vmatmul.f32.gmra.mxu0 %v622
  %v650 = vpop.f32.mrf.mxu0
  %v651 = vadd.f32 %v594, %v650
  %652 = vdwg.mxu0
  %v653 = vmul.f32 %v291, %v82
  %v654 = vmul.f32 %v292, %v82
  %v655 = vmul.f32 %v293, %v82
  %v656 = vmul.f32 %v294, %v82
  %v658 = vsel %vm111, %v653, 0
  %v661 = vsel %vm111, %v654, 0
  %v664 = vsel %vm111, %v655, 0
  %v667 = vsel %vm111, %v656, 0
  %669 = vmatpush.xpose.msra.mxu0 0.0
  %670 = vmatpush.xpose.msra.mxu0 0.0
  %671 = vmatpush.xpose.msra.mxu0 0.0
  %672 = vmatpush.xpose.msra.mxu0 0.0
  %673 = vmatpush.xpose.msra.mxu0 0.0
  %674 = vmatpush.xpose.msra.mxu0 0.0
  %675 = vmatpush.xpose.msra.mxu0 0.0
  %676 = vmatpush.xpose.msra.mxu0 0.0
  %677 = vmatpush.xpose.msra.mxu0 0.0
  %678 = vmatpush.xpose.msra.mxu0 0.0
  %679 = vmatpush.xpose.msra.mxu0 0.0
  %680 = vmatpush.xpose.msra.mxu0 0.0
  %681 = vmatpush.xpose.msra.mxu0 %v365
  %682 = vmatpush.xpose.msra.mxu0 %v363
  %683 = vmatpush.xpose.msra.mxu0 %v361
  %684 = vmatpush.xpose.msra.mxu0 %v359
  %685 = vmatmul.f32.gmra.mxu0 %v658
  %v686 = vpop.f32.mrf.mxu0
  %v687 = vadd.f32 0.0, %v686
  %688 = vmatmul.f32.gmra.mxu0 %v661
  %v689 = vpop.f32.mrf.mxu0
  %v690 = vadd.f32 0.0, %v689
  %691 = vmatmul.f32.gmra.mxu0 %v664
  %v692 = vpop.f32.mrf.mxu0
  %v693 = vadd.f32 0.0, %v692
  %694 = vmatmul.f32.gmra.mxu0 %v667
  %v695 = vpop.f32.mrf.mxu0
  %v696 = vadd.f32 0.0, %v695
  %697 = vdwg.mxu0
  %s698 = scalar_lea.vmem %s2, 64
  %v699 = vld [vmem:[%s698] sm:$0xff]
  %v700 = vld [vmem:[%s698 + $0x8] sm:$0xff]
  %v701 = vld [vmem:[%s698 + $0x10] sm:$0xff]
  %v702 = vld [vmem:[%s698 + $0x18] sm:$0xff]
  %v703 = vmul.f32 %v687, %v699
  %v704 = vmul.f32 %v690, %v700
  %v705 = vmul.f32 %v693, %v701
  %v706 = vmul.f32 %v696, %v702
  %v707 = vand.u32 2147483647, %v703
  %v708 = vand.u32 2147483647, %v704
  %v709 = vand.u32 2147483647, %v705
  %v710 = vand.u32 2147483647, %v706
  %v711 = vsel %vm408, %v707, 0.0
  %712 = vadd.xlane.f32.xlu0 %v711
  %v713 = vpop.xlane.xlu0 %712
  %v714 = vsel %vm408, %v708, 0.0
  %715 = vadd.xlane.f32.xlu0 %v714
  %v716 = vpop.xlane.xlu0 %715
  %v717 = vsel %vm408, %v709, 0.0
  %718 = vadd.xlane.f32.xlu0 %v717
  %v719 = vpop.xlane.xlu0 %718
  %v720 = vsel %vm408, %v710, 0.0
  %721 = vadd.xlane.f32.xlu0 %v720
  %v722 = vpop.xlane.xlu0 %721
  %v723 = vmax.f32 %v713, 1.0
  %v724 = vmax.f32 %v716, 1.0
  %v725 = vmax.f32 %v719, 1.0
  %v726 = vmax.f32 %v722, 1.0
  %v727 = vmin.f32 %v723, 50000.0
  %v728 = vmin.f32 %v724, 50000.0
  %v729 = vmin.f32 %v725, 50000.0
  %v730 = vmin.f32 %v726, 50000.0
  %v731 = vrcp.pop %v727
  %v732 = vrcp.pop %v728
  %v733 = vrcp.pop %v729
  %v734 = vrcp.pop %v730
  %v735 = vmul.f32 %v703, %v731
  %v736 = vmul.f32 %v704, %v732
  %v737 = vmul.f32 %v705, %v733
  %v738 = vmul.f32 %v706, %v734
  %740 = vrot.lane.b32.xlu0 %v94, 48
  %v741 = vpop.permute.xlu0 %740
  %v743 = vmul.f32 %v224, %v741
  %v744 = vmul.f32 %v227, %v741
  %v745 = vmul.f32 %v230, %v741
  %v746 = vmul.f32 %v233, %v741
  %751 = vrot.lane.b32.xlu0 %v743, 80
  %v752 = vpop.permute.xlu0 %751
  %753 = vrot.lane.b32.xlu0 %v744, 80
  %v754 = vpop.permute.xlu0 %753
  %755 = vrot.lane.b32.xlu0 %v745, 80
  %v756 = vpop.permute.xlu0 %755
  %757 = vrot.lane.b32.xlu0 %v746, 80
  %v758 = vpop.permute.xlu0 %757
  %v764 = vsel %vm408, %v735, 0
  %v767 = vsel %vm408, %v736, 0
  %v770 = vsel %vm408, %v737, 0
  %v773 = vsel %vm408, %v738, 0
  %775 = vmatpush.msra.mxu0 0.0
  %776 = vmatpush.msra.mxu0 0.0
  %777 = vmatpush.msra.mxu0 0.0
  %778 = vmatpush.msra.mxu0 0.0
  %779 = vmatpush.msra.mxu0 0.0
  %780 = vmatpush.msra.mxu0 0.0
  %781 = vmatpush.msra.mxu0 0.0
  %782 = vmatpush.msra.mxu0 0.0
  %783 = vmatpush.msra.mxu0 0.0
  %784 = vmatpush.msra.mxu0 0.0
  %785 = vmatpush.msra.mxu0 0.0
  %786 = vmatpush.msra.mxu0 0.0
  %787 = vmatpush.msra.mxu0 %v758
  %788 = vmatpush.msra.mxu0 %v756
  %789 = vmatpush.msra.mxu0 %v754
  %790 = vmatpush.msra.mxu0 %v752
  %791 = vmatmul.f32.gmra.mxu0 %v764
  %v792 = vpop.f32.mrf.mxu0
  %v793 = vadd.f32 0.0, %v792
  %794 = vmatmul.f32.gmra.mxu0 %v767
  %v795 = vpop.f32.mrf.mxu0
  %v796 = vadd.f32 0.0, %v795
  %797 = vmatmul.f32.gmra.mxu0 %v770
  %v798 = vpop.f32.mrf.mxu0
  %v799 = vadd.f32 0.0, %v798
  %800 = vmatmul.f32.gmra.mxu0 %v773
  %v801 = vpop.f32.mrf.mxu0
  %v802 = vadd.f32 0.0, %v801
  %803 = vdwg.mxu0
  %v804 = vadd.f32 %v642, %v793
  %v805 = vadd.f32 %v645, %v796
  %v806 = vadd.f32 %v648, %v799
  %v807 = vadd.f32 %v651, %v802
  %v808 = vmul.f32 %v804, %v804
  %v809 = vmul.f32 %v805, %v805
  %v810 = vmul.f32 %v806, %v806
  %v811 = vmul.f32 %v807, %v807
  %v812 = vmul.f32 %v808, %v85
  %v813 = vmul.f32 %v809, %v85
  %v814 = vmul.f32 %v810, %v85
  %v815 = vmul.f32 %v811, %v85
  %vm816 = vcmask 195584
  %v817 = vsel %vm816, %v812, 0.0
  %818 = vadd.xlane.f32.xlu0 %v817
  %v819 = vpop.xlane.xlu0 %818
  %v820 = vsel %vm816, %v813, 0.0
  %821 = vadd.xlane.f32.xlu0 %v820
  %v822 = vpop.xlane.xlu0 %821
  %v823 = vsel %vm816, %v814, 0.0
  %824 = vadd.xlane.f32.xlu0 %v823
  %v825 = vpop.xlane.xlu0 %824
  %v826 = vsel %vm816, %v815, 0.0
  %827 = vadd.xlane.f32.xlu0 %v826
  %v828 = vpop.xlane.xlu0 %827
  %v829 = vmul.f32 %v819, 0.125
  %v830 = vmul.f32 %v822, 0.125
  %v831 = vmul.f32 %v825, 0.125
  %v832 = vmul.f32 %v828, 0.125
  %v833 = vadd.f32 %v829, 1e-05
  %v834 = vadd.f32 %v830, 1e-05
  %v835 = vadd.f32 %v831, 1e-05
  %v836 = vadd.f32 %v832, 1e-05
  %v837 = vrsqrt.pop %v833
  %v838 = vmul.f32 %v837, %v833
  %v839 = vmul.f32 %v838, %v837
  %v840 = vmul.f32 0.5, %v839
  %v841 = vsub.f32 1.5, %v840
  %v842 = vmul.f32 %v837, %v841
  %vm843 = vweird.f32 %v833
  %vm844 = vweird.f32 %v837
  %vm845 = vmor %vm843, %vm844
  %v846 = vsel %vm845, %v837, %v842
  %v847 = vrsqrt.pop %v834
  %v848 = vmul.f32 %v847, %v834
  %v849 = vmul.f32 %v848, %v847
  %v850 = vmul.f32 0.5, %v849
  %v851 = vsub.f32 1.5, %v850
  %v852 = vmul.f32 %v847, %v851
  %vm853 = vweird.f32 %v834
  %vm854 = vweird.f32 %v847
  %vm855 = vmor %vm853, %vm854
  %v856 = vsel %vm855, %v847, %v852
  %v857 = vrsqrt.pop %v835
  %v858 = vmul.f32 %v857, %v835
  %v859 = vmul.f32 %v858, %v857
  %v860 = vmul.f32 0.5, %v859
  %v861 = vsub.f32 1.5, %v860
  %v862 = vmul.f32 %v857, %v861
  %vm863 = vweird.f32 %v835
  %vm864 = vweird.f32 %v857
  %vm865 = vmor %vm863, %vm864
  %v866 = vsel %vm865, %v857, %v862
  %v867 = vrsqrt.pop %v836
  %v868 = vmul.f32 %v867, %v836
  %v869 = vmul.f32 %v868, %v867
  %v870 = vmul.f32 0.5, %v869
  %v871 = vsub.f32 1.5, %v870
  %v872 = vmul.f32 %v867, %v871
  %vm873 = vweird.f32 %v836
  %vm874 = vweird.f32 %v867
  %vm875 = vmor %vm873, %vm874
  %v876 = vsel %vm875, %v867, %v872
  %v877 = vmul.f32 %v85, %v846
  %v878 = vmul.f32 %v85, %v856
  %v879 = vmul.f32 %v85, %v866
  %v880 = vmul.f32 %v85, %v876
  %v881 = vadd.f32 %v877, 0.0
  %v882 = vadd.f32 %v878, 0.0
  %v883 = vadd.f32 %v879, 0.0
  %v884 = vadd.f32 %v880, 0.0
  %v885 = vmul.f32 %v808, %v89
  %v886 = vmul.f32 %v809, %v89
  %v887 = vmul.f32 %v810, %v89
  %v888 = vmul.f32 %v811, %v89
  %v889 = vsel %vm816, %v885, 0.0
  %890 = vadd.xlane.f32.xlu0 %v889
  %v891 = vpop.xlane.xlu0 %890
  %v892 = vsel %vm816, %v886, 0.0
  %893 = vadd.xlane.f32.xlu0 %v892
  %v894 = vpop.xlane.xlu0 %893
  %v895 = vsel %vm816, %v887, 0.0
  %896 = vadd.xlane.f32.xlu0 %v895
  %v897 = vpop.xlane.xlu0 %896
  %v898 = vsel %vm816, %v888, 0.0
  %899 = vadd.xlane.f32.xlu0 %v898
  %v900 = vpop.xlane.xlu0 %899
  %v901 = vmul.f32 %v891, 0.125
  %v902 = vmul.f32 %v894, 0.125
  %v903 = vmul.f32 %v897, 0.125
  %v904 = vmul.f32 %v900, 0.125
  %v905 = vadd.f32 %v901, 1e-05
  %v906 = vadd.f32 %v902, 1e-05
  %v907 = vadd.f32 %v903, 1e-05
  %v908 = vadd.f32 %v904, 1e-05
  %v909 = vrsqrt.pop %v905
  %v910 = vmul.f32 %v909, %v905
  %v911 = vmul.f32 %v910, %v909
  %v912 = vmul.f32 0.5, %v911
  %v913 = vsub.f32 1.5, %v912
  %v914 = vmul.f32 %v909, %v913
  %vm915 = vweird.f32 %v905
  %vm916 = vweird.f32 %v909
  %vm917 = vmor %vm915, %vm916
  %v918 = vsel %vm917, %v909, %v914
  %v919 = vrsqrt.pop %v906
  %v920 = vmul.f32 %v919, %v906
  %v921 = vmul.f32 %v920, %v919
  %v922 = vmul.f32 0.5, %v921
  %v923 = vsub.f32 1.5, %v922
  %v924 = vmul.f32 %v919, %v923
  %vm925 = vweird.f32 %v906
  %vm926 = vweird.f32 %v919
  %vm927 = vmor %vm925, %vm926
  %v928 = vsel %vm927, %v919, %v924
  %v929 = vrsqrt.pop %v907
  %v930 = vmul.f32 %v929, %v907
  %v931 = vmul.f32 %v930, %v929
  %v932 = vmul.f32 0.5, %v931
  %v933 = vsub.f32 1.5, %v932
  %v934 = vmul.f32 %v929, %v933
  %vm935 = vweird.f32 %v907
  %vm936 = vweird.f32 %v929
  %vm937 = vmor %vm935, %vm936
  %v938 = vsel %vm937, %v929, %v934
  %v939 = vrsqrt.pop %v908
  %v940 = vmul.f32 %v939, %v908
  %v941 = vmul.f32 %v940, %v939
  %v942 = vmul.f32 0.5, %v941
  %v943 = vsub.f32 1.5, %v942
  %v944 = vmul.f32 %v939, %v943
  %vm945 = vweird.f32 %v908
  %vm946 = vweird.f32 %v939
  %vm947 = vmor %vm945, %vm946
  %v948 = vsel %vm947, %v939, %v944
  %v949 = vmul.f32 %v89, %v918
  %v950 = vmul.f32 %v89, %v928
  %v951 = vmul.f32 %v89, %v938
  %v952 = vmul.f32 %v89, %v948
  %v953 = vadd.f32 %v881, %v949
  %v954 = vadd.f32 %v882, %v950
  %v955 = vadd.f32 %v883, %v951
  %v956 = vadd.f32 %v884, %v952
  %v957 = vmul.f32 %v808, %v94
  %v958 = vmul.f32 %v809, %v94
  %v959 = vmul.f32 %v810, %v94
  %v960 = vmul.f32 %v811, %v94
  %v961 = vsel %vm816, %v957, 0.0
  %962 = vadd.xlane.f32.xlu0 %v961
  %v963 = vpop.xlane.xlu0 %962
  %v964 = vsel %vm816, %v958, 0.0
  %965 = vadd.xlane.f32.xlu0 %v964
  %v966 = vpop.xlane.xlu0 %965
  %v967 = vsel %vm816, %v959, 0.0
  %968 = vadd.xlane.f32.xlu0 %v967
  %v969 = vpop.xlane.xlu0 %968
  %v970 = vsel %vm816, %v960, 0.0
  %971 = vadd.xlane.f32.xlu0 %v970
  %v972 = vpop.xlane.xlu0 %971
  %v973 = vmul.f32 %v963, 0.125
  %v974 = vmul.f32 %v966, 0.125
  %v975 = vmul.f32 %v969, 0.125
  %v976 = vmul.f32 %v972, 0.125
  %v977 = vadd.f32 %v973, 1e-05
  %v978 = vadd.f32 %v974, 1e-05
  %v979 = vadd.f32 %v975, 1e-05
  %v980 = vadd.f32 %v976, 1e-05
  %v981 = vrsqrt.pop %v977
  %v982 = vmul.f32 %v981, %v977
  %v983 = vmul.f32 %v982, %v981
  %v984 = vmul.f32 0.5, %v983
  %v985 = vsub.f32 1.5, %v984
  %v986 = vmul.f32 %v981, %v985
  %vm987 = vweird.f32 %v977
  %vm988 = vweird.f32 %v981
  %vm989 = vmor %vm987, %vm988
  %v990 = vsel %vm989, %v981, %v986
  %v991 = vrsqrt.pop %v978
  %v992 = vmul.f32 %v991, %v978
  %v993 = vmul.f32 %v992, %v991
  %v994 = vmul.f32 0.5, %v993
  %v995 = vsub.f32 1.5, %v994
  %v996 = vmul.f32 %v991, %v995
  %vm997 = vweird.f32 %v978
  %vm998 = vweird.f32 %v991
  %vm999 = vmor %vm997, %vm998
  %v1000 = vsel %vm999, %v991, %v996
  %v1001 = vrsqrt.pop %v979
  %v1002 = vmul.f32 %v1001, %v979
  %v1003 = vmul.f32 %v1002, %v1001
  %v1004 = vmul.f32 0.5, %v1003
  %v1005 = vsub.f32 1.5, %v1004
  %v1006 = vmul.f32 %v1001, %v1005
  %vm1007 = vweird.f32 %v979
  %vm1008 = vweird.f32 %v1001
  %vm1009 = vmor %vm1007, %vm1008
  %v1010 = vsel %vm1009, %v1001, %v1006
  %v1011 = vrsqrt.pop %v980
  %v1012 = vmul.f32 %v1011, %v980
  %v1013 = vmul.f32 %v1012, %v1011
  %v1014 = vmul.f32 0.5, %v1013
  %v1015 = vsub.f32 1.5, %v1014
  %v1016 = vmul.f32 %v1011, %v1015
  %vm1017 = vweird.f32 %v980
  %vm1018 = vweird.f32 %v1011
  %vm1019 = vmor %vm1017, %vm1018
  %v1020 = vsel %vm1019, %v1011, %v1016
  %v1021 = vmul.f32 %v94, %v990
  %v1022 = vmul.f32 %v94, %v1000
  %v1023 = vmul.f32 %v94, %v1010
  %v1024 = vmul.f32 %v94, %v1020
  %v1025 = vadd.f32 %v953, %v1021
  %v1026 = vadd.f32 %v954, %v1022
  %v1027 = vadd.f32 %v955, %v1023
  %v1028 = vadd.f32 %v956, %v1024
  %v1029 = vxor.u32 %v224, 2147483648
  %v1030 = vxor.u32 %v227, 2147483648
  %v1031 = vxor.u32 %v230, 2147483648
  %v1032 = vxor.u32 %v233, 2147483648
  %v1033 = vmul.f32 %v1029, 1.442695
  %v1034 = vpow.pop %v1033
  %v1035 = vmul.f32 %v1030, 1.442695
  %v1036 = vpow.pop %v1035
  %v1037 = vmul.f32 %v1031, 1.442695
  %v1038 = vpow.pop %v1037
  %v1039 = vmul.f32 %v1032, 1.442695
  %v1040 = vpow.pop %v1039
  %v1041 = vadd.f32 %v1034, 1.0
  %v1042 = vadd.f32 %v1036, 1.0
  %v1043 = vadd.f32 %v1038, 1.0
  %v1044 = vadd.f32 %v1040, 1.0
  %v1045 = vrcp.pop %v1041
  %v1046 = vmul.f32 %v1041, %v1045
  %v1047 = vsub.f32 1.0, %v1046
  %v1048 = vmul.f32 %v1045, %v1047
  %v1049 = vadd.f32 %v1045, %v1048
  %vm1050 = vweird.f32 %v1041
  %vm1051 = vweird.f32 %v1045
  %vm1052 = vmor %vm1050, %vm1051
  %v1053 = vsel %vm1052, %v1045, %v1049
  %v1054 = vand.u32 2147483647, %v1041
  %vm1055 = vcmp.eq.f32.partialorder %v1054, 8.507059e+37
  %v1056 = vand.u32 %v1041, 2147483648
  %v1057 = vor.u32 1.1754944e-38, %v1056
  %v1058 = vsel %vm1055, %v1057, %v1053
  %v1059 = vmul.f32 1.0, %v1058
  %v1060 = vrcp.pop %v1042
  %v1061 = vmul.f32 %v1042, %v1060
  %v1062 = vsub.f32 1.0, %v1061
  %v1063 = vmul.f32 %v1060, %v1062
  %v1064 = vadd.f32 %v1060, %v1063
  %vm1065 = vweird.f32 %v1042
  %vm1066 = vweird.f32 %v1060
  %vm1067 = vmor %vm1065, %vm1066
  %v1068 = vsel %vm1067, %v1060, %v1064
  %v1069 = vand.u32 2147483647, %v1042
  %vm1070 = vcmp.eq.f32.partialorder %v1069, 8.507059e+37
  %v1071 = vand.u32 %v1042, 2147483648
  %v1072 = vor.u32 1.1754944e-38, %v1071
  %v1073 = vsel %vm1070, %v1072, %v1068
  %v1074 = vmul.f32 1.0, %v1073
  %v1075 = vrcp.pop %v1043
  %v1076 = vmul.f32 %v1043, %v1075
  %v1077 = vsub.f32 1.0, %v1076
  %v1078 = vmul.f32 %v1075, %v1077
  %v1079 = vadd.f32 %v1075, %v1078
  %vm1080 = vweird.f32 %v1043
  %vm1081 = vweird.f32 %v1075
  %vm1082 = vmor %vm1080, %vm1081
  %v1083 = vsel %vm1082, %v1075, %v1079
  %v1084 = vand.u32 2147483647, %v1043
  %vm1085 = vcmp.eq.f32.partialorder %v1084, 8.507059e+37
  %v1086 = vand.u32 %v1043, 2147483648
  %v1087 = vor.u32 1.1754944e-38, %v1086
  %v1088 = vsel %vm1085, %v1087, %v1083
  %v1089 = vmul.f32 1.0, %v1088
  %v1090 = vrcp.pop %v1044
  %v1091 = vmul.f32 %v1044, %v1090
  %v1092 = vsub.f32 1.0, %v1091
  %v1093 = vmul.f32 %v1090, %v1092
  %v1094 = vadd.f32 %v1090, %v1093
  %vm1095 = vweird.f32 %v1044
  %vm1096 = vweird.f32 %v1090
  %vm1097 = vmor %vm1095, %vm1096
  %v1098 = vsel %vm1097, %v1090, %v1094
  %v1099 = vand.u32 2147483647, %v1044
  %vm1100 = vcmp.eq.f32.partialorder %v1099, 8.507059e+37
  %v1101 = vand.u32 %v1044, 2147483648
  %v1102 = vor.u32 1.1754944e-38, %v1101
  %v1103 = vsel %vm1100, %v1102, %v1098
  %v1104 = vmul.f32 1.0, %v1103
  %v1105 = vmul.f32 %v224, %v1059
  %v1106 = vmul.f32 %v227, %v1074
  %v1107 = vmul.f32 %v230, %v1089
  %v1108 = vmul.f32 %v233, %v1104
  %v1109 = vmul.f32 %v804, %v1025
  %v1110 = vmul.f32 %v805, %v1026
  %v1111 = vmul.f32 %v806, %v1027
  %v1112 = vmul.f32 %v807, %v1028
  %1117 = vrot.lane.b32.xlu0 %v1109, 72
  %v1118 = vpop.permute.xlu0 %1117
  %1119 = vrot.lane.b32.xlu0 %v1110, 72
  %v1120 = vpop.permute.xlu0 %1119
  %1121 = vrot.lane.b32.xlu0 %v1111, 72
  %v1122 = vpop.permute.xlu0 %1121
  %1123 = vrot.lane.b32.xlu0 %v1112, 72
  %v1124 = vpop.permute.xlu0 %1123
  %v1129 = vmul.f32 %v1105, %v1118
  %v1130 = vmul.f32 %v1106, %v1120
  %v1131 = vmul.f32 %v1107, %v1122
  %v1132 = vmul.f32 %v1108, %v1124
  %v1133 = vld [vmem:[%s6] sm:$0xff]
  %v1134 = vld [vmem:[%s6 + $0x8] sm:$0xff]
  %v1135 = vld [vmem:[%s6 + $0x10] sm:$0xff]
  %1140 = vrot.lane.b32.xlu0 %v1129, 56
  %v1141 = vpop.permute.xlu0 %1140
  %1142 = vrot.lane.b32.xlu0 %v1130, 56
  %v1143 = vpop.permute.xlu0 %1142
  %1144 = vrot.lane.b32.xlu0 %v1131, 56
  %v1145 = vpop.permute.xlu0 %1144
  %1146 = vrot.lane.b32.xlu0 %v1132, 56
  %v1147 = vpop.permute.xlu0 %1146
  %v1148 = vsel %vm816, %v1141, 0
  %v1150 = vsel %vm816, %v1143, 0
  %v1152 = vsel %vm816, %v1145, 0
  %v1154 = vsel %vm816, %v1147, 0
  %1156 = vmatpush.msra.mxu0 0.0
  %1157 = vmatpush.msra.mxu0 0.0
  %1158 = vmatpush.msra.mxu0 0.0
  %1159 = vmatpush.msra.mxu0 0.0
  %1160 = vmatpush.msra.mxu0 0.0
  %1161 = vmatpush.msra.mxu0 0.0
  %1162 = vmatpush.msra.mxu0 0.0
  %1163 = vmatpush.msra.mxu0 0.0
  %1164 = vmatpush.msra.mxu0 0.0
  %1165 = vmatpush.msra.mxu0 0.0
  %1166 = vmatpush.msra.mxu0 0.0
  %1167 = vmatpush.msra.mxu0 0.0
  %1168 = vmatpush.msra.mxu0 0.0
  %1169 = vmatpush.msra.mxu0 %v1135
  %1170 = vmatpush.msra.mxu0 %v1134
  %1171 = vmatpush.msra.mxu0 %v1133
  %1172 = vmatmul.f32.gmra.mxu0 %v1148
  %v1173 = vpop.f32.mrf.mxu0
  %v1174 = vadd.f32 0.0, %v1173
  %1175 = vmatmul.f32.gmra.mxu0 %v1150
  %v1176 = vpop.f32.mrf.mxu0
  %v1177 = vadd.f32 0.0, %v1176
  %1178 = vmatmul.f32.gmra.mxu0 %v1152
  %v1179 = vpop.f32.mrf.mxu0
  %v1180 = vadd.f32 0.0, %v1179
  %1181 = vmatmul.f32.gmra.mxu0 %v1154
  %v1182 = vpop.f32.mrf.mxu0
  %v1183 = vadd.f32 0.0, %v1182
  %1184 = vdwg.mxu0
  %v1185 = vadd.f32 %v60, %v1174
  %v1186 = vadd.f32 %v61, %v1177
  %v1187 = vadd.f32 %v62, %v1180
  %v1188 = vadd.f32 %v63, %v1183
  %v1189 = vmul.f32 %v1185, %v1185
  %v1190 = vmul.f32 %v1186, %v1186
  %v1191 = vmul.f32 %v1187, %v1187
  %v1192 = vmul.f32 %v1188, %v1188
  %v1193 = vsel %vm111, %v1189, 0.0
  %1194 = vadd.xlane.f32.xlu0 %v1193
  %v1195 = vpop.xlane.xlu0 %1194
  %v1196 = vsel %vm111, %v1190, 0.0
  %1197 = vadd.xlane.f32.xlu0 %v1196
  %v1198 = vpop.xlane.xlu0 %1197
  %v1199 = vsel %vm111, %v1191, 0.0
  %1200 = vadd.xlane.f32.xlu0 %v1199
  %v1201 = vpop.xlane.xlu0 %1200
  %v1202 = vsel %vm111, %v1192, 0.0
  %1203 = vadd.xlane.f32.xlu0 %v1202
  %v1204 = vpop.xlane.xlu0 %1203
  %v1205 = vmul.f32 %v1195, %v130
  %v1206 = vmul.f32 %v1198, %v130
  %v1207 = vmul.f32 %v1201, %v130
  %v1208 = vmul.f32 %v1204, %v130
  %v1209 = vadd.f32 %v1205, 1e-05
  %v1210 = vadd.f32 %v1206, 1e-05
  %v1211 = vadd.f32 %v1207, 1e-05
  %v1212 = vadd.f32 %v1208, 1e-05
  %v1213 = vrsqrt.pop %v1209
  %v1214 = vmul.f32 %v1213, %v1209
  %v1215 = vmul.f32 %v1214, %v1213
  %v1216 = vmul.f32 0.5, %v1215
  %v1217 = vsub.f32 1.5, %v1216
  %v1218 = vmul.f32 %v1213, %v1217
  %vm1219 = vweird.f32 %v1209
  %vm1220 = vweird.f32 %v1213
  %vm1221 = vmor %vm1219, %vm1220
  %v1222 = vsel %vm1221, %v1213, %v1218
  %v1223 = vrsqrt.pop %v1210
  %v1224 = vmul.f32 %v1223, %v1210
  %v1225 = vmul.f32 %v1224, %v1223
  %v1226 = vmul.f32 0.5, %v1225
  %v1227 = vsub.f32 1.5, %v1226
  %v1228 = vmul.f32 %v1223, %v1227
  %vm1229 = vweird.f32 %v1210
  %vm1230 = vweird.f32 %v1223
  %vm1231 = vmor %vm1229, %vm1230
  %v1232 = vsel %vm1231, %v1223, %v1228
  %v1233 = vrsqrt.pop %v1211
  %v1234 = vmul.f32 %v1233, %v1211
  %v1235 = vmul.f32 %v1234, %v1233
  %v1236 = vmul.f32 0.5, %v1235
  %v1237 = vsub.f32 1.5, %v1236
  %v1238 = vmul.f32 %v1233, %v1237
  %vm1239 = vweird.f32 %v1211
  %vm1240 = vweird.f32 %v1233
  %vm1241 = vmor %vm1239, %vm1240
  %v1242 = vsel %vm1241, %v1233, %v1238
  %v1243 = vrsqrt.pop %v1212
  %v1244 = vmul.f32 %v1243, %v1212
  %v1245 = vmul.f32 %v1244, %v1243
  %v1246 = vmul.f32 0.5, %v1245
  %v1247 = vsub.f32 1.5, %v1246
  %v1248 = vmul.f32 %v1243, %v1247
  %vm1249 = vweird.f32 %v1212
  %vm1250 = vweird.f32 %v1243
  %vm1251 = vmor %vm1249, %vm1250
  %v1252 = vsel %vm1251, %v1243, %v1248
  %v1253 = vmul.f32 %v1185, %v1222
  %v1254 = vmul.f32 %v1186, %v1232
  %v1255 = vmul.f32 %v1187, %v1242
  %v1256 = vmul.f32 %v1188, %v1252
  %v1257 = vperm.slane %v104, 1
  %v1258 = vmul.f32 %v1253, %v1257
  %v1259 = vmul.f32 %v1254, %v1257
  %v1260 = vmul.f32 %v1255, %v1257
  %v1261 = vmul.f32 %v1256, %v1257
  %v1262 = vld [vmem:[%s5] sm:$0xff]
  %v1263 = vld [vmem:[%s5 + $0x8] sm:$0xff]
  %v1264 = vld [vmem:[%s5 + $0x10] sm:$0xff]
  %v1265 = vld [vmem:[%s5 + $0x20] sm:$0xf]
  %v1266 = vld [vmem:[%s5 + $0x28] sm:$0xf]
  %v1267 = vld [vmem:[%s5 + $0x30] sm:$0xf]
  %v1268 = vperm.slane %v104, 3
  %v1269 = vperm.slane %v105, 3
  %v1270 = vperm.slane %v106, 3
  %v1272 = vsel %vm111, %v1258, 0
  %v1275 = vsel %vm111, %v1259, 0
  %v1278 = vsel %vm111, %v1260, 0
  %v1281 = vsel %vm111, %v1261, 0
  %v1284 = vsel %vm202, %v1265, 0
  %v1287 = vsel %vm202, %v1266, 0
  %v1290 = vsel %vm202, %v1267, 0
  %1292 = vmatpush.msra.mxu0 0.0
  %1293 = vmatpush.msra.mxu0 0.0
  %1294 = vmatpush.msra.mxu0 0.0
  %1295 = vmatpush.msra.mxu0 0.0
  %1296 = vmatpush.msra.mxu0 0.0
  %1297 = vmatpush.msra.mxu0 0.0
  %1298 = vmatpush.msra.mxu0 0.0
  %1299 = vmatpush.msra.mxu0 0.0
  %1300 = vmatpush.msra.mxu0 0.0
  %1301 = vmatpush.msra.mxu0 0.0
  %1302 = vmatpush.msra.mxu0 0.0
  %1303 = vmatpush.msra.mxu0 0.0
  %1304 = vmatpush.msra.mxu0 0.0
  %1305 = vmatpush.msra.mxu0 0.0
  %1306 = vmatpush.msra.mxu0 %v1284
  %1307 = vmatpush.msra.mxu0 %v1262
  %1308 = vmatmul.f32.gmra.mxu0 %v1272
  %v1309 = vpop.f32.mrf.mxu0
  %v1310 = vadd.f32 %v1268, %v1309
  %1311 = vmatmul.f32.gmra.mxu0 %v1275
  %v1312 = vpop.f32.mrf.mxu0
  %v1313 = vadd.f32 %v1268, %v1312
  %1314 = vmatmul.f32.gmra.mxu0 %v1278
  %v1315 = vpop.f32.mrf.mxu0
  %v1316 = vadd.f32 %v1268, %v1315
  %1317 = vmatmul.f32.gmra.mxu0 %v1281
  %v1318 = vpop.f32.mrf.mxu0
  %v1319 = vadd.f32 %v1268, %v1318
  %1320 = vdwg.mxu0
  %1321 = vmatpush.msra.mxu0 0.0
  %1322 = vmatpush.msra.mxu0 0.0
  %1323 = vmatpush.msra.mxu0 0.0
  %1324 = vmatpush.msra.mxu0 0.0
  %1325 = vmatpush.msra.mxu0 0.0
  %1326 = vmatpush.msra.mxu0 0.0
  %1327 = vmatpush.msra.mxu0 0.0
  %1328 = vmatpush.msra.mxu0 0.0
  %1329 = vmatpush.msra.mxu0 0.0
  %1330 = vmatpush.msra.mxu0 0.0
  %1331 = vmatpush.msra.mxu0 0.0
  %1332 = vmatpush.msra.mxu0 0.0
  %1333 = vmatpush.msra.mxu0 0.0
  %1334 = vmatpush.msra.mxu0 0.0
  %1335 = vmatpush.msra.mxu0 %v1287
  %1336 = vmatpush.msra.mxu0 %v1263
  %1337 = vmatmul.f32.gmra.mxu0 %v1272
  %v1338 = vpop.f32.mrf.mxu0
  %v1339 = vadd.f32 %v1269, %v1338
  %1340 = vmatmul.f32.gmra.mxu0 %v1275
  %v1341 = vpop.f32.mrf.mxu0
  %v1342 = vadd.f32 %v1269, %v1341
  %1343 = vmatmul.f32.gmra.mxu0 %v1278
  %v1344 = vpop.f32.mrf.mxu0
  %v1345 = vadd.f32 %v1269, %v1344
  %1346 = vmatmul.f32.gmra.mxu0 %v1281
  %v1347 = vpop.f32.mrf.mxu0
  %v1348 = vadd.f32 %v1269, %v1347
  %1349 = vdwg.mxu0
  %1350 = vmatpush.msra.mxu0 0.0
  %1351 = vmatpush.msra.mxu0 0.0
  %1352 = vmatpush.msra.mxu0 0.0
  %1353 = vmatpush.msra.mxu0 0.0
  %1354 = vmatpush.msra.mxu0 0.0
  %1355 = vmatpush.msra.mxu0 0.0
  %1356 = vmatpush.msra.mxu0 0.0
  %1357 = vmatpush.msra.mxu0 0.0
  %1358 = vmatpush.msra.mxu0 0.0
  %1359 = vmatpush.msra.mxu0 0.0
  %1360 = vmatpush.msra.mxu0 0.0
  %1361 = vmatpush.msra.mxu0 0.0
  %1362 = vmatpush.msra.mxu0 0.0
  %1363 = vmatpush.msra.mxu0 0.0
  %1364 = vmatpush.msra.mxu0 %v1290
  %1365 = vmatpush.msra.mxu0 %v1264
  %1366 = vmatmul.f32.gmra.mxu0 %v1272
  %v1367 = vpop.f32.mrf.mxu0
  %v1368 = vadd.f32 %v1270, %v1367
  %1369 = vmatmul.f32.gmra.mxu0 %v1275
  %v1370 = vpop.f32.mrf.mxu0
  %v1371 = vadd.f32 %v1270, %v1370
  %1372 = vmatmul.f32.gmra.mxu0 %v1278
  %v1373 = vpop.f32.mrf.mxu0
  %v1374 = vadd.f32 %v1270, %v1373
  %1375 = vmatmul.f32.gmra.mxu0 %v1281
  %v1376 = vpop.f32.mrf.mxu0
  %v1377 = vadd.f32 %v1270, %v1376
  %1378 = vdwg.mxu0
  %v1379 = vmul.f32 %v1310, 0.5
  %v1380 = vmul.f32 %v1339, 0.5
  %v1381 = vmul.f32 %v1368, 0.5
  %v1382 = vmul.f32 %v1313, 0.5
  %v1383 = vmul.f32 %v1342, 0.5
  %v1384 = vmul.f32 %v1371, 0.5
  %v1385 = vmul.f32 %v1316, 0.5
  %v1386 = vmul.f32 %v1345, 0.5
  %v1387 = vmul.f32 %v1374, 0.5
  %v1388 = vmul.f32 %v1319, 0.5
  %v1389 = vmul.f32 %v1348, 0.5
  %v1390 = vmul.f32 %v1377, 0.5
  %v1391 = vmul.f32 %v1310, 0.044715
  %v1392 = vmul.f32 %v1339, 0.044715
  %v1393 = vmul.f32 %v1368, 0.044715
  %v1394 = vmul.f32 %v1313, 0.044715
  %v1395 = vmul.f32 %v1342, 0.044715
  %v1396 = vmul.f32 %v1371, 0.044715
  %v1397 = vmul.f32 %v1316, 0.044715
  %v1398 = vmul.f32 %v1345, 0.044715
  %v1399 = vmul.f32 %v1374, 0.044715
  %v1400 = vmul.f32 %v1319, 0.044715
  %v1401 = vmul.f32 %v1348, 0.044715
  %v1402 = vmul.f32 %v1377, 0.044715
  %v1403 = vmul.f32 %v1391, %v1310
  %v1404 = vmul.f32 %v1392, %v1339
  %v1405 = vmul.f32 %v1393, %v1368
  %v1406 = vmul.f32 %v1394, %v1313
  %v1407 = vmul.f32 %v1395, %v1342
  %v1408 = vmul.f32 %v1396, %v1371
  %v1409 = vmul.f32 %v1397, %v1316
  %v1410 = vmul.f32 %v1398, %v1345
  %v1411 = vmul.f32 %v1399, %v1374
  %v1412 = vmul.f32 %v1400, %v1319
  %v1413 = vmul.f32 %v1401, %v1348
  %v1414 = vmul.f32 %v1402, %v1377
  %v1415 = vmul.f32 %v1403, %v1310
  %v1416 = vmul.f32 %v1404, %v1339
  %v1417 = vmul.f32 %v1405, %v1368
  %v1418 = vmul.f32 %v1406, %v1313
  %v1419 = vmul.f32 %v1407, %v1342
  %v1420 = vmul.f32 %v1408, %v1371
  %v1421 = vmul.f32 %v1409, %v1316
  %v1422 = vmul.f32 %v1410, %v1345
  %v1423 = vmul.f32 %v1411, %v1374
  %v1424 = vmul.f32 %v1412, %v1319
  %v1425 = vmul.f32 %v1413, %v1348
  %v1426 = vmul.f32 %v1414, %v1377
  %v1427 = vadd.f32 %v1310, %v1415
  %v1428 = vadd.f32 %v1339, %v1416
  %v1429 = vadd.f32 %v1368, %v1417
  %v1430 = vadd.f32 %v1313, %v1418
  %v1431 = vadd.f32 %v1342, %v1419
  %v1432 = vadd.f32 %v1371, %v1420
  %v1433 = vadd.f32 %v1316, %v1421
  %v1434 = vadd.f32 %v1345, %v1422
  %v1435 = vadd.f32 %v1374, %v1423
  %v1436 = vadd.f32 %v1319, %v1424
  %v1437 = vadd.f32 %v1348, %v1425
  %v1438 = vadd.f32 %v1377, %v1426
  %v1439 = vmul.f32 %v1427, 0.7978846
  %v1440 = vmul.f32 %v1428, 0.7978846
  %v1441 = vmul.f32 %v1429, 0.7978846
  %v1442 = vmul.f32 %v1430, 0.7978846
  %v1443 = vmul.f32 %v1431, 0.7978846
  %v1444 = vmul.f32 %v1432, 0.7978846
  %v1445 = vmul.f32 %v1433, 0.7978846
  %v1446 = vmul.f32 %v1434, 0.7978846
  %v1447 = vmul.f32 %v1435, 0.7978846
  %v1448 = vmul.f32 %v1436, 0.7978846
  %v1449 = vmul.f32 %v1437, 0.7978846
  %v1450 = vmul.f32 %v1438, 0.7978846
  %v1451 = vtanh.pop %v1439
  %v1452 = vtanh.pop %v1440
  %v1453 = vtanh.pop %v1441
  %v1454 = vtanh.pop %v1442
  %v1455 = vtanh.pop %v1443
  %v1456 = vtanh.pop %v1444
  %v1457 = vtanh.pop %v1445
  %v1458 = vtanh.pop %v1446
  %v1459 = vtanh.pop %v1447
  %v1460 = vtanh.pop %v1448
  %v1461 = vtanh.pop %v1449
  %v1462 = vtanh.pop %v1450
  %v1463 = vadd.f32 %v1451, 1.0
  %v1464 = vadd.f32 %v1452, 1.0
  %v1465 = vadd.f32 %v1453, 1.0
  %v1466 = vadd.f32 %v1454, 1.0
  %v1467 = vadd.f32 %v1455, 1.0
  %v1468 = vadd.f32 %v1456, 1.0
  %v1469 = vadd.f32 %v1457, 1.0
  %v1470 = vadd.f32 %v1458, 1.0
  %v1471 = vadd.f32 %v1459, 1.0
  %v1472 = vadd.f32 %v1460, 1.0
  %v1473 = vadd.f32 %v1461, 1.0
  %v1474 = vadd.f32 %v1462, 1.0
  %v1475 = vmul.f32 %v1379, %v1463
  %v1476 = vmul.f32 %v1380, %v1464
  %v1477 = vmul.f32 %v1381, %v1465
  %v1478 = vmul.f32 %v1382, %v1466
  %v1479 = vmul.f32 %v1383, %v1467
  %v1480 = vmul.f32 %v1384, %v1468
  %v1481 = vmul.f32 %v1385, %v1469
  %v1482 = vmul.f32 %v1386, %v1470
  %v1483 = vmul.f32 %v1387, %v1471
  %v1484 = vmul.f32 %v1388, %v1472
  %v1485 = vmul.f32 %v1389, %v1473
  %v1486 = vmul.f32 %v1390, %v1474
  %v1487 = vadd.f32 %v1475, %v1476
  %v1488 = vadd.f32 %v1487, %v1477
  %1489 = vadd.xlane.f32.xlu0 %v1488
  %v1490 = vpop.xlane.xlu0 %1489
  %v1491 = vadd.f32 %v1478, %v1479
  %v1492 = vadd.f32 %v1491, %v1480
  %1493 = vadd.xlane.f32.xlu0 %v1492
  %v1494 = vpop.xlane.xlu0 %1493
  %v1495 = vadd.f32 %v1481, %v1482
  %v1496 = vadd.f32 %v1495, %v1483
  %1497 = vadd.xlane.f32.xlu0 %v1496
  %v1498 = vpop.xlane.xlu0 %1497
  %v1499 = vadd.f32 %v1484, %v1485
  %v1500 = vadd.f32 %v1499, %v1486
  %1501 = vadd.xlane.f32.xlu0 %v1500
  %v1502 = vpop.xlane.xlu0 %1501
  %v1503 = vmul.f32 %v1490, 0.0033333334
  %v1504 = vmul.f32 %v1494, 0.0033333334
  %v1505 = vmul.f32 %v1498, 0.0033333334
  %v1506 = vmul.f32 %v1502, 0.0033333334
  %v1507 = vsub.f32 %v1475, %v1503
  %v1508 = vsub.f32 %v1476, %v1503
  %v1509 = vsub.f32 %v1477, %v1503
  %v1510 = vsub.f32 %v1478, %v1504
  %v1511 = vsub.f32 %v1479, %v1504
  %v1512 = vsub.f32 %v1480, %v1504
  %v1513 = vsub.f32 %v1481, %v1505
  %v1514 = vsub.f32 %v1482, %v1505
  %v1515 = vsub.f32 %v1483, %v1505
  %v1516 = vsub.f32 %v1484, %v1506
  %v1517 = vsub.f32 %v1485, %v1506
  %v1518 = vsub.f32 %v1486, %v1506
  %v1519 = vmul.f32 %v1507, %v101
  %v1520 = vmul.f32 %v1508, %v102
  %v1521 = vmul.f32 %v1509, %v103
  %v1522 = vmul.f32 %v1510, %v101
  %v1523 = vmul.f32 %v1511, %v102
  %v1524 = vmul.f32 %v1512, %v103
  %v1525 = vmul.f32 %v1513, %v101
  %v1526 = vmul.f32 %v1514, %v102
  %v1527 = vmul.f32 %v1515, %v103
  %v1528 = vmul.f32 %v1516, %v101
  %v1529 = vmul.f32 %v1517, %v102
  %v1530 = vmul.f32 %v1518, %v103
  %v1531 = vmul.f32 %v1519, %v1519
  %v1532 = vmul.f32 %v1520, %v1520
  %v1533 = vmul.f32 %v1521, %v1521
  %v1534 = vmul.f32 %v1522, %v1522
  %v1535 = vmul.f32 %v1523, %v1523
  %v1536 = vmul.f32 %v1524, %v1524
  %v1537 = vmul.f32 %v1525, %v1525
  %v1538 = vmul.f32 %v1526, %v1526
  %v1539 = vmul.f32 %v1527, %v1527
  %v1540 = vmul.f32 %v1528, %v1528
  %v1541 = vmul.f32 %v1529, %v1529
  %v1542 = vmul.f32 %v1530, %v1530
  %v1543 = vadd.f32 %v1531, %v1532
  %v1544 = vadd.f32 %v1543, %v1533
  %1545 = vadd.xlane.f32.xlu0 %v1544
  %v1546 = vpop.xlane.xlu0 %1545
  %v1547 = vadd.f32 %v1534, %v1535
  %v1548 = vadd.f32 %v1547, %v1536
  %1549 = vadd.xlane.f32.xlu0 %v1548
  %v1550 = vpop.xlane.xlu0 %1549
  %v1551 = vadd.f32 %v1537, %v1538
  %v1552 = vadd.f32 %v1551, %v1539
  %1553 = vadd.xlane.f32.xlu0 %v1552
  %v1554 = vpop.xlane.xlu0 %1553
  %v1555 = vadd.f32 %v1540, %v1541
  %v1556 = vadd.f32 %v1555, %v1542
  %1557 = vadd.xlane.f32.xlu0 %v1556
  %v1558 = vpop.xlane.xlu0 %1557
  %v1559 = vmul.f32 %v1546, 0.0033333334
  %v1560 = vmul.f32 %v1550, 0.0033333334
  %v1561 = vmul.f32 %v1554, 0.0033333334
  %v1562 = vmul.f32 %v1558, 0.0033333334
  %v1563 = vadd.f32 %v1559, 1e-05
  %v1564 = vadd.f32 %v1560, 1e-05
  %v1565 = vadd.f32 %v1561, 1e-05
  %v1566 = vadd.f32 %v1562, 1e-05
  %v1567 = vrsqrt.pop %v1563
  %v1568 = vmul.f32 %v1567, %v1563
  %v1569 = vmul.f32 %v1568, %v1567
  %v1570 = vmul.f32 0.5, %v1569
  %v1571 = vsub.f32 1.5, %v1570
  %v1572 = vmul.f32 %v1567, %v1571
  %vm1573 = vweird.f32 %v1563
  %vm1574 = vweird.f32 %v1567
  %vm1575 = vmor %vm1573, %vm1574
  %v1576 = vsel %vm1575, %v1567, %v1572
  %v1577 = vrsqrt.pop %v1564
  %v1578 = vmul.f32 %v1577, %v1564
  %v1579 = vmul.f32 %v1578, %v1577
  %v1580 = vmul.f32 0.5, %v1579
  %v1581 = vsub.f32 1.5, %v1580
  %v1582 = vmul.f32 %v1577, %v1581
  %vm1583 = vweird.f32 %v1564
  %vm1584 = vweird.f32 %v1577
  %vm1585 = vmor %vm1583, %vm1584
  %v1586 = vsel %vm1585, %v1577, %v1582
  %v1587 = vrsqrt.pop %v1565
  %v1588 = vmul.f32 %v1587, %v1565
  %v1589 = vmul.f32 %v1588, %v1587
  %v1590 = vmul.f32 0.5, %v1589
  %v1591 = vsub.f32 1.5, %v1590
  %v1592 = vmul.f32 %v1587, %v1591
  %vm1593 = vweird.f32 %v1565
  %vm1594 = vweird.f32 %v1587
  %vm1595 = vmor %vm1593, %vm1594
  %v1596 = vsel %vm1595, %v1587, %v1592
  %v1597 = vrsqrt.pop %v1566
  %v1598 = vmul.f32 %v1597, %v1566
  %v1599 = vmul.f32 %v1598, %v1597
  %v1600 = vmul.f32 0.5, %v1599
  %v1601 = vsub.f32 1.5, %v1600
  %v1602 = vmul.f32 %v1597, %v1601
  %vm1603 = vweird.f32 %v1566
  %vm1604 = vweird.f32 %v1597
  %vm1605 = vmor %vm1603, %vm1604
  %v1606 = vsel %vm1605, %v1597, %v1602
  %v1607 = vmul.f32 %v1507, %v1576
  %v1608 = vmul.f32 %v1508, %v1576
  %v1609 = vmul.f32 %v1509, %v1576
  %v1610 = vmul.f32 %v1510, %v1586
  %v1611 = vmul.f32 %v1511, %v1586
  %v1612 = vmul.f32 %v1512, %v1586
  %v1613 = vmul.f32 %v1513, %v1596
  %v1614 = vmul.f32 %v1514, %v1596
  %v1615 = vmul.f32 %v1515, %v1596
  %v1616 = vmul.f32 %v1516, %v1606
  %v1617 = vmul.f32 %v1517, %v1606
  %v1618 = vmul.f32 %v1518, %v1606
  %v1619 = vperm.slane %v104, 4
  %v1620 = vperm.slane %v105, 4
  %v1621 = vperm.slane %v106, 4
  %v1622 = vmul.f32 %v1607, %v1619
  %v1623 = vmul.f32 %v1608, %v1620
  %v1624 = vmul.f32 %v1609, %v1621
  %v1625 = vmul.f32 %v1610, %v1619
  %v1626 = vmul.f32 %v1611, %v1620
  %v1627 = vmul.f32 %v1612, %v1621
  %v1628 = vmul.f32 %v1613, %v1619
  %v1629 = vmul.f32 %v1614, %v1620
  %v1630 = vmul.f32 %v1615, %v1621
  %v1631 = vmul.f32 %v1616, %v1619
  %v1632 = vmul.f32 %v1617, %v1620
  %v1633 = vmul.f32 %v1618, %v1621
  %v1634 = vperm.slane %v104, 5
  %v1635 = vperm.slane %v105, 5
  %v1636 = vperm.slane %v106, 5
  %v1637 = vadd.f32 %v1622, %v1634
  %v1638 = vadd.f32 %v1623, %v1635
  %v1639 = vadd.f32 %v1624, %v1636
  %v1640 = vadd.f32 %v1625, %v1634
  %v1641 = vadd.f32 %v1626, %v1635
  %v1642 = vadd.f32 %v1627, %v1636
  %v1643 = vadd.f32 %v1628, %v1634
  %v1644 = vadd.f32 %v1629, %v1635
  %v1645 = vadd.f32 %v1630, %v1636
  %v1646 = vadd.f32 %v1631, %v1634
  %v1647 = vadd.f32 %v1632, %v1635
  %v1648 = vadd.f32 %v1633, %v1636
  %v1649 = vld [vmem:[%s6 + $0x18] sm:$0xff]
  %v1650 = vld [vmem:[%s6 + $0x20] sm:$0xff]
  %v1651 = vld [vmem:[%s6 + $0x28] sm:$0xff]
  %v1652 = vld [vmem:[%s6 + $0x30] sm:$0xff]
  %v1653 = vld [vmem:[%s6 + $0x38] sm:$0xff]
  %v1654 = vld [vmem:[%s6 + $0x40] sm:$0xff]
  %v1655 = vld [vmem:[%s6 + $0x48] sm:$0xff]
  %v1656 = vld [vmem:[%s6 + $0x50] sm:$0xff]
  %v1657 = vld [vmem:[%s6 + $0x58] sm:$0xff]
  %v1658 = vld [vmem:[%s6 + $0x60] sm:$0xff]
  %v1659 = vld [vmem:[%s6 + $0x68] sm:$0xff]
  %v1660 = vld [vmem:[%s6 + $0x70] sm:$0xff]
  %v1661 = vld [vmem:[%s6 + $0x78] sm:$0xff]
  %v1662 = vld [vmem:[%s6 + $0x80] sm:$0xff]
  %v1663 = vld [vmem:[%s6 + $0x88] sm:$0xff]
  %v1664 = vld [vmem:[%s6 + $0x90] sm:$0xff]
  %v1665 = vld [vmem:[%s6 + $0x98] sm:$0xff]
  %v1666 = vld [vmem:[%s6 + $0xa0] sm:$0xff]
  %v1667 = vld [vmem:[%s6 + $0xa8] sm:$0xff]
  %v1668 = vld [vmem:[%s6 + $0xb0] sm:$0xff]
  %v1669 = vld [vmem:[%s6 + $0xb8] sm:$0xff]
  %v1670 = vld [vmem:[%s6 + $0xc0] sm:$0xff]
  %v1671 = vld [vmem:[%s6 + $0xc8] sm:$0xff]
  %v1672 = vld [vmem:[%s6 + $0xd0] sm:$0xff]
  %v1673 = vld [vmem:[%s6 + $0xd8] sm:$0xff]
  %v1674 = vld [vmem:[%s6 + $0xe0] sm:$0xff]
  %v1675 = vld [vmem:[%s6 + $0xe8] sm:$0xff]
  %v1676 = vld [vmem:[%s6 + $0xf0] sm:$0xff]
  %v1677 = vld [vmem:[%s6 + $0xf8] sm:$0xff]
  %v1678 = vld [vmem:[%s6 + $0x100] sm:$0xff]
  %v1679 = vld [vmem:[%s6 + $0x108] sm:$0xff]
  %v1680 = vld [vmem:[%s6 + $0x110] sm:$0xff]
  %v1681 = vld [vmem:[%s6 + $0x118] sm:$0xff]
  %v1682 = vld [vmem:[%s6 + $0x120] sm:$0xff]
  %v1683 = vld [vmem:[%s6 + $0x128] sm:$0xff]
  %v1684 = vld [vmem:[%s6 + $0x130] sm:$0xff]
  %v1685 = vld [vmem:[%s6 + $0x138] sm:$0xff]
  %v1686 = vld [vmem:[%s6 + $0x140] sm:$0xff]
  %v1687 = vld [vmem:[%s6 + $0x148] sm:$0xff]
  %v1688 = vld [vmem:[%s6 + $0x150] sm:$0xff]
  %v1689 = vld [vmem:[%s6 + $0x158] sm:$0xff]
  %v1690 = vld [vmem:[%s6 + $0x160] sm:$0xff]
  %v1691 = vld [vmem:[%s6 + $0x168] sm:$0xff]
  %v1692 = vld [vmem:[%s6 + $0x170] sm:$0xff]
  %v1693 = vld [vmem:[%s6 + $0x178] sm:$0xff]
  %v1694 = vld [vmem:[%s6 + $0x180] sm:$0xff]
  %v1695 = vld [vmem:[%s6 + $0x188] sm:$0xff]
  %v1696 = vld [vmem:[%s6 + $0x190] sm:$0xff]
  %1697 = vmatpush.msra.mxu0 %v1664
  %1698 = vmatpush.msra.mxu0 %v1663
  %1699 = vmatpush.msra.mxu0 %v1662
  %1700 = vmatpush.msra.mxu0 %v1661
  %1701 = vmatpush.msra.mxu0 %v1660
  %1702 = vmatpush.msra.mxu0 %v1659
  %1703 = vmatpush.msra.mxu0 %v1658
  %1704 = vmatpush.msra.mxu0 %v1657
  %1705 = vmatpush.msra.mxu0 %v1656
  %1706 = vmatpush.msra.mxu0 %v1655
  %1707 = vmatpush.msra.mxu0 %v1654
  %1708 = vmatpush.msra.mxu0 %v1653
  %1709 = vmatpush.msra.mxu0 %v1652
  %1710 = vmatpush.msra.mxu0 %v1651
  %1711 = vmatpush.msra.mxu0 %v1650
  %1712 = vmatpush.msra.mxu0 %v1649
  %1713 = vmatmul.f32.gmra.mxu0 %v1637
  %v1714 = vpop.f32.mrf.mxu0
  %v1715 = vadd.f32 0.0, %v1714
  %1716 = vmatmul.f32.gmra.mxu0 %v1640
  %v1717 = vpop.f32.mrf.mxu0
  %v1718 = vadd.f32 0.0, %v1717
  %1719 = vmatmul.f32.gmra.mxu0 %v1643
  %v1720 = vpop.f32.mrf.mxu0
  %v1721 = vadd.f32 0.0, %v1720
  %1722 = vmatmul.f32.gmra.mxu0 %v1646
  %v1723 = vpop.f32.mrf.mxu0
  %v1724 = vadd.f32 0.0, %v1723
  %1725 = vdwg.mxu0
  %1726 = vmatpush.msra.mxu0 %v1680
  %1727 = vmatpush.msra.mxu0 %v1679
  %1728 = vmatpush.msra.mxu0 %v1678
  %1729 = vmatpush.msra.mxu0 %v1677
  %1730 = vmatpush.msra.mxu0 %v1676
  %1731 = vmatpush.msra.mxu0 %v1675
  %1732 = vmatpush.msra.mxu0 %v1674
  %1733 = vmatpush.msra.mxu0 %v1673
  %1734 = vmatpush.msra.mxu0 %v1672
  %1735 = vmatpush.msra.mxu0 %v1671
  %1736 = vmatpush.msra.mxu0 %v1670
  %1737 = vmatpush.msra.mxu0 %v1669
  %1738 = vmatpush.msra.mxu0 %v1668
  %1739 = vmatpush.msra.mxu0 %v1667
  %1740 = vmatpush.msra.mxu0 %v1666
  %1741 = vmatpush.msra.mxu0 %v1665
  %1742 = vmatmul.f32.gmra.mxu0 %v1638
  %v1743 = vpop.f32.mrf.mxu0
  %v1744 = vadd.f32 %v1715, %v1743
  %1745 = vmatmul.f32.gmra.mxu0 %v1641
  %v1746 = vpop.f32.mrf.mxu0
  %v1747 = vadd.f32 %v1718, %v1746
  %1748 = vmatmul.f32.gmra.mxu0 %v1644
  %v1749 = vpop.f32.mrf.mxu0
  %v1750 = vadd.f32 %v1721, %v1749
  %1751 = vmatmul.f32.gmra.mxu0 %v1647
  %v1752 = vpop.f32.mrf.mxu0
  %v1753 = vadd.f32 %v1724, %v1752
  %1754 = vdwg.mxu0
  %1755 = vmatpush.msra.mxu0 %v1696
  %1756 = vmatpush.msra.mxu0 %v1695
  %1757 = vmatpush.msra.mxu0 %v1694
  %1758 = vmatpush.msra.mxu0 %v1693
  %1759 = vmatpush.msra.mxu0 %v1692
  %1760 = vmatpush.msra.mxu0 %v1691
  %1761 = vmatpush.msra.mxu0 %v1690
  %1762 = vmatpush.msra.mxu0 %v1689
  %1763 = vmatpush.msra.mxu0 %v1688
  %1764 = vmatpush.msra.mxu0 %v1687
  %1765 = vmatpush.msra.mxu0 %v1686
  %1766 = vmatpush.msra.mxu0 %v1685
  %1767 = vmatpush.msra.mxu0 %v1684
  %1768 = vmatpush.msra.mxu0 %v1683
  %1769 = vmatpush.msra.mxu0 %v1682
  %1770 = vmatpush.msra.mxu0 %v1681
  %1771 = vmatmul.f32.gmra.mxu0 %v1639
  %v1772 = vpop.f32.mrf.mxu0
  %v1773 = vadd.f32 %v1744, %v1772
  %1774 = vmatmul.f32.gmra.mxu0 %v1642
  %v1775 = vpop.f32.mrf.mxu0
  %v1776 = vadd.f32 %v1747, %v1775
  %1777 = vmatmul.f32.gmra.mxu0 %v1645
  %v1778 = vpop.f32.mrf.mxu0
  %v1779 = vadd.f32 %v1750, %v1778
  %1780 = vmatmul.f32.gmra.mxu0 %v1648
  %v1781 = vpop.f32.mrf.mxu0
  %v1782 = vadd.f32 %v1753, %v1781
  %1783 = vdwg.mxu0
  %v1784 = vadd.f32 %v1185, %v1773
  %v1785 = vadd.f32 %v1186, %v1776
  %v1786 = vadd.f32 %v1187, %v1779
  %v1787 = vadd.f32 %v1188, %v1782
  %v1788 = vperm.slane %v104, 2
  %v1789 = vadd.f32 %v1784, %v1788
  %v1790 = vadd.f32 %v1785, %v1788
  %v1791 = vadd.f32 %v1786, %v1788
  %v1792 = vadd.f32 %v1787, %v1788
  %s1793 = scalar_lea.vmem %s7, 24
  %v1794 = vld [vmem:[%s1793] sm:$0x3f]
  %v1795 = vld [vmem:[%s1793 + $0x8] sm:$0x3f]
  %v1796 = vld [vmem:[%s1793 + $0x10] sm:$0x3f]
  %v1797 = vmul.f32 %v1789, %v1789
  %v1798 = vmul.f32 %v1790, %v1790
  %v1799 = vmul.f32 %v1791, %v1791
  %v1800 = vmul.f32 %v1792, %v1792
  %v1801 = vsel %vm111, %v1797, 0.0
  %1802 = vadd.xlane.f32.xlu0 %v1801
  %v1803 = vpop.xlane.xlu0 %1802
  %v1804 = vsel %vm111, %v1798, 0.0
  %1805 = vadd.xlane.f32.xlu0 %v1804
  %v1806 = vpop.xlane.xlu0 %1805
  %v1807 = vsel %vm111, %v1799, 0.0
  %1808 = vadd.xlane.f32.xlu0 %v1807
  %v1809 = vpop.xlane.xlu0 %1808
  %v1810 = vsel %vm111, %v1800, 0.0
  %1811 = vadd.xlane.f32.xlu0 %v1810
  %v1812 = vpop.xlane.xlu0 %1811
  %v1813 = vmul.f32 %v1803, %v130
  %v1814 = vmul.f32 %v1806, %v130
  %v1815 = vmul.f32 %v1809, %v130
  %v1816 = vmul.f32 %v1812, %v130
  %v1817 = vadd.f32 %v1813, 1e-05
  %v1818 = vadd.f32 %v1814, 1e-05
  %v1819 = vadd.f32 %v1815, 1e-05
  %v1820 = vadd.f32 %v1816, 1e-05
  %v1821 = vrsqrt.pop %v1817
  %v1822 = vmul.f32 %v1821, %v1817
  %v1823 = vmul.f32 %v1822, %v1821
  %v1824 = vmul.f32 0.5, %v1823
  %v1825 = vsub.f32 1.5, %v1824
  %v1826 = vmul.f32 %v1821, %v1825
  %vm1827 = vweird.f32 %v1817
  %vm1828 = vweird.f32 %v1821
  %vm1829 = vmor %vm1827, %vm1828
  %v1830 = vsel %vm1829, %v1821, %v1826
  %v1831 = vrsqrt.pop %v1818
  %v1832 = vmul.f32 %v1831, %v1818
  %v1833 = vmul.f32 %v1832, %v1831
  %v1834 = vmul.f32 0.5, %v1833
  %v1835 = vsub.f32 1.5, %v1834
  %v1836 = vmul.f32 %v1831, %v1835
  %vm1837 = vweird.f32 %v1818
  %vm1838 = vweird.f32 %v1831
  %vm1839 = vmor %vm1837, %vm1838
  %v1840 = vsel %vm1839, %v1831, %v1836
  %v1841 = vrsqrt.pop %v1819
  %v1842 = vmul.f32 %v1841, %v1819
  %v1843 = vmul.f32 %v1842, %v1841
  %v1844 = vmul.f32 0.5, %v1843
  %v1845 = vsub.f32 1.5, %v1844
  %v1846 = vmul.f32 %v1841, %v1845
  %vm1847 = vweird.f32 %v1819
  %vm1848 = vweird.f32 %v1841
  %vm1849 = vmor %vm1847, %vm1848
  %v1850 = vsel %vm1849, %v1841, %v1846
  %v1851 = vrsqrt.pop %v1820
  %v1852 = vmul.f32 %v1851, %v1820
  %v1853 = vmul.f32 %v1852, %v1851
  %v1854 = vmul.f32 0.5, %v1853
  %v1855 = vsub.f32 1.5, %v1854
  %v1856 = vmul.f32 %v1851, %v1855
  %vm1857 = vweird.f32 %v1820
  %vm1858 = vweird.f32 %v1851
  %vm1859 = vmor %vm1857, %vm1858
  %v1860 = vsel %vm1859, %v1851, %v1856
  %v1861 = vmul.f32 %v1789, %v1830
  %v1862 = vmul.f32 %v1790, %v1840
  %v1863 = vmul.f32 %v1791, %v1850
  %v1864 = vmul.f32 %v1792, %v1860
  %v1865 = vperm.slane %v1794, 0
  %v1866 = vmul.f32 %v1861, %v1865
  %v1867 = vmul.f32 %v1862, %v1865
  %v1868 = vmul.f32 %v1863, %v1865
  %v1869 = vmul.f32 %v1864, %v1865
  %s1870 = scalar_lea.vmem %s5, 64
  %v1871 = vld [vmem:[%s1870 + $0x18] sm:$0xff]
  %v1872 = vld [vmem:[%s1870 + $0x38] sm:$0xf]
  %v1874 = vsel %vm111, %v1866, 0
  %v1877 = vsel %vm111, %v1867, 0
  %v1880 = vsel %vm111, %v1868, 0
  %v1883 = vsel %vm111, %v1869, 0
  %v1886 = vsel %vm202, %v1872, 0
  %1888 = vmatpush.msra.mxu0 0.0
  %1889 = vmatpush.msra.mxu0 0.0
  %1890 = vmatpush.msra.mxu0 0.0
  %1891 = vmatpush.msra.mxu0 0.0
  %1892 = vmatpush.msra.mxu0 0.0
  %1893 = vmatpush.msra.mxu0 0.0
  %1894 = vmatpush.msra.mxu0 0.0
  %1895 = vmatpush.msra.mxu0 0.0
  %1896 = vmatpush.msra.mxu0 0.0
  %1897 = vmatpush.msra.mxu0 0.0
  %1898 = vmatpush.msra.mxu0 0.0
  %1899 = vmatpush.msra.mxu0 0.0
  %1900 = vmatpush.msra.mxu0 0.0
  %1901 = vmatpush.msra.mxu0 0.0
  %1902 = vmatpush.msra.mxu0 %v1886
  %1903 = vmatpush.msra.mxu0 %v1871
  %1904 = vmatmul.f32.gmra.mxu0 %v1874
  %v1905 = vpop.f32.mrf.mxu0
  %v1906 = vadd.f32 0.0, %v1905
  %1907 = vmatmul.f32.gmra.mxu0 %v1877
  %v1908 = vpop.f32.mrf.mxu0
  %v1909 = vadd.f32 0.0, %v1908
  %1910 = vmatmul.f32.gmra.mxu0 %v1880
  %v1911 = vpop.f32.mrf.mxu0
  %v1912 = vadd.f32 0.0, %v1911
  %1913 = vmatmul.f32.gmra.mxu0 %v1883
  %v1914 = vpop.f32.mrf.mxu0
  %v1915 = vadd.f32 0.0, %v1914
  %1916 = vdwg.mxu0
  %v1917 = vmul.f32 %v1906, %v244
  %v1918 = vmul.f32 %v1909, %v246
  %v1919 = vmul.f32 %v1912, %v248
  %v1920 = vmul.f32 %v1915, %v250
  %v1921 = vmul.f32 %v1906, %v260
  %v1922 = vmul.f32 %v1909, %v262
  %v1923 = vmul.f32 %v1912, %v264
  %v1924 = vmul.f32 %v1915, %v266
  %1929 = vrot.lane.b32.xlu0 %v1921, 116
  %v1930 = vpop.permute.xlu0 %1929
  %1931 = vrot.lane.b32.xlu0 %v1922, 116
  %v1932 = vpop.permute.xlu0 %1931
  %1933 = vrot.lane.b32.xlu0 %v1923, 116
  %v1934 = vpop.permute.xlu0 %1933
  %1935 = vrot.lane.b32.xlu0 %v1924, 116
  %v1936 = vpop.permute.xlu0 %1935
  %v1941 = vadd.f32 %v1917, %v1930
  %v1942 = vadd.f32 %v1918, %v1932
  %v1943 = vadd.f32 %v1919, %v1934
  %v1944 = vadd.f32 %v1920, %v1936
  %v1945 = vmul.f32 %v1906, %v296
  %v1946 = vmul.f32 %v1909, %v298
  %v1947 = vmul.f32 %v1912, %v300
  %v1948 = vmul.f32 %v1915, %v302
  %1953 = vrot.lane.b32.xlu0 %v1945, 116
  %v1954 = vpop.permute.xlu0 %1953
  %1955 = vrot.lane.b32.xlu0 %v1946, 116
  %v1956 = vpop.permute.xlu0 %1955
  %1957 = vrot.lane.b32.xlu0 %v1947, 116
  %v1958 = vpop.permute.xlu0 %1957
  %1959 = vrot.lane.b32.xlu0 %v1948, 116
  %v1960 = vpop.permute.xlu0 %1959
  %v1965 = vadd.f32 %v1921, %v1954
  %v1966 = vadd.f32 %v1922, %v1956
  %v1967 = vadd.f32 %v1923, %v1958
  %v1968 = vadd.f32 %v1924, %v1960
  %v1969 = vmul.f32 %v1941, %v72
  %v1970 = vmul.f32 %v1942, %v72
  %v1971 = vmul.f32 %v1943, %v72
  %v1972 = vmul.f32 %v1944, %v72
  %1977 = vrot.lane.b32.xlu0 %v1965, 104
  %v1978 = vpop.permute.xlu0 %1977
  %1979 = vrot.lane.b32.xlu0 %v1966, 104
  %v1980 = vpop.permute.xlu0 %1979
  %1981 = vrot.lane.b32.xlu0 %v1967, 104
  %v1982 = vpop.permute.xlu0 %1981
  %1983 = vrot.lane.b32.xlu0 %v1968, 104
  %v1984 = vpop.permute.xlu0 %1983
  %v1986 = vsel %vm111, %v1969, 0
  %v1989 = vsel %vm111, %v1970, 0
  %v1992 = vsel %vm111, %v1971, 0
  %v1995 = vsel %vm111, %v1972, 0
  %v1997 = vsel %vm111, %v1978, 0
  %v1999 = vsel %vm111, %v1980, 0
  %v2001 = vsel %vm111, %v1982, 0
  %v2003 = vsel %vm111, %v1984, 0
  %2005 = vmatpush.xpose.msra.mxu0 0.0
  %2006 = vmatpush.xpose.msra.mxu0 0.0
  %2007 = vmatpush.xpose.msra.mxu0 0.0
  %2008 = vmatpush.xpose.msra.mxu0 0.0
  %2009 = vmatpush.xpose.msra.mxu0 0.0
  %2010 = vmatpush.xpose.msra.mxu0 0.0
  %2011 = vmatpush.xpose.msra.mxu0 0.0
  %2012 = vmatpush.xpose.msra.mxu0 0.0
  %2013 = vmatpush.xpose.msra.mxu0 0.0
  %2014 = vmatpush.xpose.msra.mxu0 0.0
  %2015 = vmatpush.xpose.msra.mxu0 0.0
  %2016 = vmatpush.xpose.msra.mxu0 0.0
  %2017 = vmatpush.xpose.msra.mxu0 %v2003
  %2018 = vmatpush.xpose.msra.mxu0 %v2001
  %2019 = vmatpush.xpose.msra.mxu0 %v1999
  %2020 = vmatpush.xpose.msra.mxu0 %v1997
  %2021 = vmatmul.f32.gmra.mxu0 %v1986
  %v2022 = vpop.f32.mrf.mxu0
  %v2023 = vadd.f32 0.0, %v2022
  %2024 = vmatmul.f32.gmra.mxu0 %v1989
  %v2025 = vpop.f32.mrf.mxu0
  %v2026 = vadd.f32 0.0, %v2025
  %2027 = vmatmul.f32.gmra.mxu0 %v1992
  %v2028 = vpop.f32.mrf.mxu0
  %v2029 = vadd.f32 0.0, %v2028
  %2030 = vmatmul.f32.gmra.mxu0 %v1995
  %v2031 = vpop.f32.mrf.mxu0
  %v2032 = vadd.f32 0.0, %v2031
  %2033 = vdwg.mxu0
  %v2034 = vmul.f32 %v2023, %v396
  %v2035 = vmul.f32 %v2026, %v397
  %v2036 = vmul.f32 %v2029, %v398
  %v2037 = vmul.f32 %v2032, %v399
  %v2038 = vand.u32 2147483647, %v2034
  %v2039 = vand.u32 2147483647, %v2035
  %v2040 = vand.u32 2147483647, %v2036
  %v2041 = vand.u32 2147483647, %v2037
  %v2042 = vsel %vm408, %v2038, 0.0
  %2043 = vadd.xlane.f32.xlu0 %v2042
  %v2044 = vpop.xlane.xlu0 %2043
  %v2045 = vsel %vm408, %v2039, 0.0
  %2046 = vadd.xlane.f32.xlu0 %v2045
  %v2047 = vpop.xlane.xlu0 %2046
  %v2048 = vsel %vm408, %v2040, 0.0
  %2049 = vadd.xlane.f32.xlu0 %v2048
  %v2050 = vpop.xlane.xlu0 %2049
  %v2051 = vsel %vm408, %v2041, 0.0
  %2052 = vadd.xlane.f32.xlu0 %v2051
  %v2053 = vpop.xlane.xlu0 %2052
  %v2054 = vmax.f32 %v2044, 1.0
  %v2055 = vmax.f32 %v2047, 1.0
  %v2056 = vmax.f32 %v2050, 1.0
  %v2057 = vmax.f32 %v2053, 1.0
  %v2058 = vmin.f32 %v2054, 50000.0
  %v2059 = vmin.f32 %v2055, 50000.0
  %v2060 = vmin.f32 %v2056, 50000.0
  %v2061 = vmin.f32 %v2057, 50000.0
  %v2062 = vrcp.pop %v2058
  %v2063 = vrcp.pop %v2059
  %v2064 = vrcp.pop %v2060
  %v2065 = vrcp.pop %v2061
  %v2066 = vmul.f32 %v2034, %v2062
  %v2067 = vmul.f32 %v2035, %v2063
  %v2068 = vmul.f32 %v2036, %v2064
  %v2069 = vmul.f32 %v2037, %v2065
  %v2070 = vmul.f32 %v1906, %v439
  %v2071 = vmul.f32 %v1909, %v439
  %v2072 = vmul.f32 %v1912, %v439
  %v2073 = vmul.f32 %v1915, %v439
  %v2074 = vmul.f32 %v1941, %v77
  %v2075 = vmul.f32 %v1942, %v77
  %v2076 = vmul.f32 %v1943, %v77
  %v2077 = vmul.f32 %v1944, %v77
  %v2079 = vsel %vm111, %v2074, 0
  %v2082 = vsel %vm111, %v2075, 0
  %v2085 = vsel %vm111, %v2076, 0
  %v2088 = vsel %vm111, %v2077, 0
  %2090 = vmatpush.xpose.msra.mxu0 0.0
  %2091 = vmatpush.xpose.msra.mxu0 0.0
  %2092 = vmatpush.xpose.msra.mxu0 0.0
  %2093 = vmatpush.xpose.msra.mxu0 0.0
  %2094 = vmatpush.xpose.msra.mxu0 0.0
  %2095 = vmatpush.xpose.msra.mxu0 0.0
  %2096 = vmatpush.xpose.msra.mxu0 0.0
  %2097 = vmatpush.xpose.msra.mxu0 0.0
  %2098 = vmatpush.xpose.msra.mxu0 0.0
  %2099 = vmatpush.xpose.msra.mxu0 0.0
  %2100 = vmatpush.xpose.msra.mxu0 0.0
  %2101 = vmatpush.xpose.msra.mxu0 0.0
  %2102 = vmatpush.xpose.msra.mxu0 %v2003
  %2103 = vmatpush.xpose.msra.mxu0 %v2001
  %2104 = vmatpush.xpose.msra.mxu0 %v1999
  %2105 = vmatpush.xpose.msra.mxu0 %v1997
  %2106 = vmatmul.f32.gmra.mxu0 %v2079
  %v2107 = vpop.f32.mrf.mxu0
  %v2108 = vadd.f32 0.0, %v2107
  %2109 = vmatmul.f32.gmra.mxu0 %v2082
  %v2110 = vpop.f32.mrf.mxu0
  %v2111 = vadd.f32 0.0, %v2110
  %2112 = vmatmul.f32.gmra.mxu0 %v2085
  %v2113 = vpop.f32.mrf.mxu0
  %v2114 = vadd.f32 0.0, %v2113
  %2115 = vmatmul.f32.gmra.mxu0 %v2088
  %v2116 = vpop.f32.mrf.mxu0
  %v2117 = vadd.f32 0.0, %v2116
  %2118 = vdwg.mxu0
  %v2119 = vmul.f32 %v2108, %v491
  %v2120 = vmul.f32 %v2111, %v492
  %v2121 = vmul.f32 %v2114, %v493
  %v2122 = vmul.f32 %v2117, %v494
  %v2123 = vand.u32 2147483647, %v2119
  %v2124 = vand.u32 2147483647, %v2120
  %v2125 = vand.u32 2147483647, %v2121
  %v2126 = vand.u32 2147483647, %v2122
  %v2127 = vsel %vm408, %v2123, 0.0
  %2128 = vadd.xlane.f32.xlu0 %v2127
  %v2129 = vpop.xlane.xlu0 %2128
  %v2130 = vsel %vm408, %v2124, 0.0
  %2131 = vadd.xlane.f32.xlu0 %v2130
  %v2132 = vpop.xlane.xlu0 %2131
  %v2133 = vsel %vm408, %v2125, 0.0
  %2134 = vadd.xlane.f32.xlu0 %v2133
  %v2135 = vpop.xlane.xlu0 %2134
  %v2136 = vsel %vm408, %v2126, 0.0
  %2137 = vadd.xlane.f32.xlu0 %v2136
  %v2138 = vpop.xlane.xlu0 %2137
  %v2139 = vmax.f32 %v2129, 1.0
  %v2140 = vmax.f32 %v2132, 1.0
  %v2141 = vmax.f32 %v2135, 1.0
  %v2142 = vmax.f32 %v2138, 1.0
  %v2143 = vmin.f32 %v2139, 50000.0
  %v2144 = vmin.f32 %v2140, 50000.0
  %v2145 = vmin.f32 %v2141, 50000.0
  %v2146 = vmin.f32 %v2142, 50000.0
  %v2147 = vrcp.pop %v2143
  %v2148 = vrcp.pop %v2144
  %v2149 = vrcp.pop %v2145
  %v2150 = vrcp.pop %v2146
  %v2151 = vmul.f32 %v2119, %v2147
  %v2152 = vmul.f32 %v2120, %v2148
  %v2153 = vmul.f32 %v2121, %v2149
  %v2154 = vmul.f32 %v2122, %v2150
  %v2155 = vmul.f32 %v1906, %v533
  %v2156 = vmul.f32 %v1909, %v533
  %v2157 = vmul.f32 %v1912, %v533
  %v2158 = vmul.f32 %v1915, %v533
  %2163 = vrot.lane.b32.xlu0 %v2155, 80
  %v2164 = vpop.permute.xlu0 %2163
  %2165 = vrot.lane.b32.xlu0 %v2156, 80
  %v2166 = vpop.permute.xlu0 %2165
  %2167 = vrot.lane.b32.xlu0 %v2157, 80
  %v2168 = vpop.permute.xlu0 %2167
  %2169 = vrot.lane.b32.xlu0 %v2158, 80
  %v2170 = vpop.permute.xlu0 %2169
  %v2176 = vsel %vm408, %v2151, 0
  %v2179 = vsel %vm408, %v2152, 0
  %v2182 = vsel %vm408, %v2153, 0
  %v2185 = vsel %vm408, %v2154, 0
  %2187 = vmatpush.msra.mxu0 0.0
  %2188 = vmatpush.msra.mxu0 0.0
  %2189 = vmatpush.msra.mxu0 0.0
  %2190 = vmatpush.msra.mxu0 0.0
  %2191 = vmatpush.msra.mxu0 0.0
  %2192 = vmatpush.msra.mxu0 0.0
  %2193 = vmatpush.msra.mxu0 0.0
  %2194 = vmatpush.msra.mxu0 0.0
  %2195 = vmatpush.msra.mxu0 0.0
  %2196 = vmatpush.msra.mxu0 0.0
  %2197 = vmatpush.msra.mxu0 0.0
  %2198 = vmatpush.msra.mxu0 0.0
  %2199 = vmatpush.msra.mxu0 %v2170
  %2200 = vmatpush.msra.mxu0 %v2168
  %2201 = vmatpush.msra.mxu0 %v2166
  %2202 = vmatpush.msra.mxu0 %v2164
  %2203 = vmatmul.f32.gmra.mxu0 %v2176
  %v2204 = vpop.f32.mrf.mxu0
  %v2205 = vadd.f32 0.0, %v2204
  %2206 = vmatmul.f32.gmra.mxu0 %v2179
  %v2207 = vpop.f32.mrf.mxu0
  %v2208 = vadd.f32 0.0, %v2207
  %2209 = vmatmul.f32.gmra.mxu0 %v2182
  %v2210 = vpop.f32.mrf.mxu0
  %v2211 = vadd.f32 0.0, %v2210
  %2212 = vmatmul.f32.gmra.mxu0 %v2185
  %v2213 = vpop.f32.mrf.mxu0
  %v2214 = vadd.f32 0.0, %v2213
  %2215 = vdwg.mxu0
  %2220 = vrot.lane.b32.xlu0 %v2070, 80
  %v2221 = vpop.permute.xlu0 %2220
  %2222 = vrot.lane.b32.xlu0 %v2071, 80
  %v2223 = vpop.permute.xlu0 %2222
  %2224 = vrot.lane.b32.xlu0 %v2072, 80
  %v2225 = vpop.permute.xlu0 %2224
  %2226 = vrot.lane.b32.xlu0 %v2073, 80
  %v2227 = vpop.permute.xlu0 %2226
  %v2233 = vsel %vm408, %v2066, 0
  %v2236 = vsel %vm408, %v2067, 0
  %v2239 = vsel %vm408, %v2068, 0
  %v2242 = vsel %vm408, %v2069, 0
  %2244 = vmatpush.msra.mxu0 0.0
  %2245 = vmatpush.msra.mxu0 0.0
  %2246 = vmatpush.msra.mxu0 0.0
  %2247 = vmatpush.msra.mxu0 0.0
  %2248 = vmatpush.msra.mxu0 0.0
  %2249 = vmatpush.msra.mxu0 0.0
  %2250 = vmatpush.msra.mxu0 0.0
  %2251 = vmatpush.msra.mxu0 0.0
  %2252 = vmatpush.msra.mxu0 0.0
  %2253 = vmatpush.msra.mxu0 0.0
  %2254 = vmatpush.msra.mxu0 0.0
  %2255 = vmatpush.msra.mxu0 0.0
  %2256 = vmatpush.msra.mxu0 %v2227
  %2257 = vmatpush.msra.mxu0 %v2225
  %2258 = vmatpush.msra.mxu0 %v2223
  %2259 = vmatpush.msra.mxu0 %v2221
  %2260 = vmatmul.f32.gmra.mxu0 %v2233
  %v2261 = vpop.f32.mrf.mxu0
  %v2262 = vadd.f32 %v2205, %v2261
  %2263 = vmatmul.f32.gmra.mxu0 %v2236
  %v2264 = vpop.f32.mrf.mxu0
  %v2265 = vadd.f32 %v2208, %v2264
  %2266 = vmatmul.f32.gmra.mxu0 %v2239
  %v2267 = vpop.f32.mrf.mxu0
  %v2268 = vadd.f32 %v2211, %v2267
  %2269 = vmatmul.f32.gmra.mxu0 %v2242
  %v2270 = vpop.f32.mrf.mxu0
  %v2271 = vadd.f32 %v2214, %v2270
  %2272 = vdwg.mxu0
  %v2273 = vmul.f32 %v1941, %v82
  %v2274 = vmul.f32 %v1942, %v82
  %v2275 = vmul.f32 %v1943, %v82
  %v2276 = vmul.f32 %v1944, %v82
  %v2278 = vsel %vm111, %v2273, 0
  %v2281 = vsel %vm111, %v2274, 0
  %v2284 = vsel %vm111, %v2275, 0
  %v2287 = vsel %vm111, %v2276, 0
  %2289 = vmatpush.xpose.msra.mxu0 0.0
  %2290 = vmatpush.xpose.msra.mxu0 0.0
  %2291 = vmatpush.xpose.msra.mxu0 0.0
  %2292 = vmatpush.xpose.msra.mxu0 0.0
  %2293 = vmatpush.xpose.msra.mxu0 0.0
  %2294 = vmatpush.xpose.msra.mxu0 0.0
  %2295 = vmatpush.xpose.msra.mxu0 0.0
  %2296 = vmatpush.xpose.msra.mxu0 0.0
  %2297 = vmatpush.xpose.msra.mxu0 0.0
  %2298 = vmatpush.xpose.msra.mxu0 0.0
  %2299 = vmatpush.xpose.msra.mxu0 0.0
  %2300 = vmatpush.xpose.msra.mxu0 0.0
  %2301 = vmatpush.xpose.msra.mxu0 %v2003
  %2302 = vmatpush.xpose.msra.mxu0 %v2001
  %2303 = vmatpush.xpose.msra.mxu0 %v1999
  %2304 = vmatpush.xpose.msra.mxu0 %v1997
  %2305 = vmatmul.f32.gmra.mxu0 %v2278
  %v2306 = vpop.f32.mrf.mxu0
  %v2307 = vadd.f32 0.0, %v2306
  %2308 = vmatmul.f32.gmra.mxu0 %v2281
  %v2309 = vpop.f32.mrf.mxu0
  %v2310 = vadd.f32 0.0, %v2309
  %2311 = vmatmul.f32.gmra.mxu0 %v2284
  %v2312 = vpop.f32.mrf.mxu0
  %v2313 = vadd.f32 0.0, %v2312
  %2314 = vmatmul.f32.gmra.mxu0 %v2287
  %v2315 = vpop.f32.mrf.mxu0
  %v2316 = vadd.f32 0.0, %v2315
  %2317 = vdwg.mxu0
  %v2318 = vmul.f32 %v2307, %v699
  %v2319 = vmul.f32 %v2310, %v700
  %v2320 = vmul.f32 %v2313, %v701
  %v2321 = vmul.f32 %v2316, %v702
  %v2322 = vand.u32 2147483647, %v2318
  %v2323 = vand.u32 2147483647, %v2319
  %v2324 = vand.u32 2147483647, %v2320
  %v2325 = vand.u32 2147483647, %v2321
  %v2326 = vsel %vm408, %v2322, 0.0
  %2327 = vadd.xlane.f32.xlu0 %v2326
  %v2328 = vpop.xlane.xlu0 %2327
  %v2329 = vsel %vm408, %v2323, 0.0
  %2330 = vadd.xlane.f32.xlu0 %v2329
  %v2331 = vpop.xlane.xlu0 %2330
  %v2332 = vsel %vm408, %v2324, 0.0
  %2333 = vadd.xlane.f32.xlu0 %v2332
  %v2334 = vpop.xlane.xlu0 %2333
  %v2335 = vsel %vm408, %v2325, 0.0
  %2336 = vadd.xlane.f32.xlu0 %v2335
  %v2337 = vpop.xlane.xlu0 %2336
  %v2338 = vmax.f32 %v2328, 1.0
  %v2339 = vmax.f32 %v2331, 1.0
  %v2340 = vmax.f32 %v2334, 1.0
  %v2341 = vmax.f32 %v2337, 1.0
  %v2342 = vmin.f32 %v2338, 50000.0
  %v2343 = vmin.f32 %v2339, 50000.0
  %v2344 = vmin.f32 %v2340, 50000.0
  %v2345 = vmin.f32 %v2341, 50000.0
  %v2346 = vrcp.pop %v2342
  %v2347 = vrcp.pop %v2343
  %v2348 = vrcp.pop %v2344
  %v2349 = vrcp.pop %v2345
  %v2350 = vmul.f32 %v2318, %v2346
  %v2351 = vmul.f32 %v2319, %v2347
  %v2352 = vmul.f32 %v2320, %v2348
  %v2353 = vmul.f32 %v2321, %v2349
  %v2354 = vmul.f32 %v1906, %v741
  %v2355 = vmul.f32 %v1909, %v741
  %v2356 = vmul.f32 %v1912, %v741
  %v2357 = vmul.f32 %v1915, %v741
  %2362 = vrot.lane.b32.xlu0 %v2354, 80
  %v2363 = vpop.permute.xlu0 %2362
  %2364 = vrot.lane.b32.xlu0 %v2355, 80
  %v2365 = vpop.permute.xlu0 %2364
  %2366 = vrot.lane.b32.xlu0 %v2356, 80
  %v2367 = vpop.permute.xlu0 %2366
  %2368 = vrot.lane.b32.xlu0 %v2357, 80
  %v2369 = vpop.permute.xlu0 %2368
  %v2375 = vsel %vm408, %v2350, 0
  %v2378 = vsel %vm408, %v2351, 0
  %v2381 = vsel %vm408, %v2352, 0
  %v2384 = vsel %vm408, %v2353, 0
  %2386 = vmatpush.msra.mxu0 0.0
  %2387 = vmatpush.msra.mxu0 0.0
  %2388 = vmatpush.msra.mxu0 0.0
  %2389 = vmatpush.msra.mxu0 0.0
  %2390 = vmatpush.msra.mxu0 0.0
  %2391 = vmatpush.msra.mxu0 0.0
  %2392 = vmatpush.msra.mxu0 0.0
  %2393 = vmatpush.msra.mxu0 0.0
  %2394 = vmatpush.msra.mxu0 0.0
  %2395 = vmatpush.msra.mxu0 0.0
  %2396 = vmatpush.msra.mxu0 0.0
  %2397 = vmatpush.msra.mxu0 0.0
  %2398 = vmatpush.msra.mxu0 %v2369
  %2399 = vmatpush.msra.mxu0 %v2367
  %2400 = vmatpush.msra.mxu0 %v2365
  %2401 = vmatpush.msra.mxu0 %v2363
  %2402 = vmatmul.f32.gmra.mxu0 %v2375
  %v2403 = vpop.f32.mrf.mxu0
  %v2404 = vadd.f32 0.0, %v2403
  %2405 = vmatmul.f32.gmra.mxu0 %v2378
  %v2406 = vpop.f32.mrf.mxu0
  %v2407 = vadd.f32 0.0, %v2406
  %2408 = vmatmul.f32.gmra.mxu0 %v2381
  %v2409 = vpop.f32.mrf.mxu0
  %v2410 = vadd.f32 0.0, %v2409
  %2411 = vmatmul.f32.gmra.mxu0 %v2384
  %v2412 = vpop.f32.mrf.mxu0
  %v2413 = vadd.f32 0.0, %v2412
  %2414 = vdwg.mxu0
  %v2415 = vadd.f32 %v2262, %v2404
  %v2416 = vadd.f32 %v2265, %v2407
  %v2417 = vadd.f32 %v2268, %v2410
  %v2418 = vadd.f32 %v2271, %v2413
  %v2419 = vmul.f32 %v2415, %v2415
  %v2420 = vmul.f32 %v2416, %v2416
  %v2421 = vmul.f32 %v2417, %v2417
  %v2422 = vmul.f32 %v2418, %v2418
  %v2423 = vmul.f32 %v2419, %v85
  %v2424 = vmul.f32 %v2420, %v85
  %v2425 = vmul.f32 %v2421, %v85
  %v2426 = vmul.f32 %v2422, %v85
  %v2427 = vsel %vm816, %v2423, 0.0
  %2428 = vadd.xlane.f32.xlu0 %v2427
  %v2429 = vpop.xlane.xlu0 %2428
  %v2430 = vsel %vm816, %v2424, 0.0
  %2431 = vadd.xlane.f32.xlu0 %v2430
  %v2432 = vpop.xlane.xlu0 %2431
  %v2433 = vsel %vm816, %v2425, 0.0
  %2434 = vadd.xlane.f32.xlu0 %v2433
  %v2435 = vpop.xlane.xlu0 %2434
  %v2436 = vsel %vm816, %v2426, 0.0
  %2437 = vadd.xlane.f32.xlu0 %v2436
  %v2438 = vpop.xlane.xlu0 %2437
  %v2439 = vmul.f32 %v2429, 0.125
  %v2440 = vmul.f32 %v2432, 0.125
  %v2441 = vmul.f32 %v2435, 0.125
  %v2442 = vmul.f32 %v2438, 0.125
  %v2443 = vadd.f32 %v2439, 1e-05
  %v2444 = vadd.f32 %v2440, 1e-05
  %v2445 = vadd.f32 %v2441, 1e-05
  %v2446 = vadd.f32 %v2442, 1e-05
  %v2447 = vrsqrt.pop %v2443
  %v2448 = vmul.f32 %v2447, %v2443
  %v2449 = vmul.f32 %v2448, %v2447
  %v2450 = vmul.f32 0.5, %v2449
  %v2451 = vsub.f32 1.5, %v2450
  %v2452 = vmul.f32 %v2447, %v2451
  %vm2453 = vweird.f32 %v2443
  %vm2454 = vweird.f32 %v2447
  %vm2455 = vmor %vm2453, %vm2454
  %v2456 = vsel %vm2455, %v2447, %v2452
  %v2457 = vrsqrt.pop %v2444
  %v2458 = vmul.f32 %v2457, %v2444
  %v2459 = vmul.f32 %v2458, %v2457
  %v2460 = vmul.f32 0.5, %v2459
  %v2461 = vsub.f32 1.5, %v2460
  %v2462 = vmul.f32 %v2457, %v2461
  %vm2463 = vweird.f32 %v2444
  %vm2464 = vweird.f32 %v2457
  %vm2465 = vmor %vm2463, %vm2464
  %v2466 = vsel %vm2465, %v2457, %v2462
  %v2467 = vrsqrt.pop %v2445
  %v2468 = vmul.f32 %v2467, %v2445
  %v2469 = vmul.f32 %v2468, %v2467
  %v2470 = vmul.f32 0.5, %v2469
  %v2471 = vsub.f32 1.5, %v2470
  %v2472 = vmul.f32 %v2467, %v2471
  %vm2473 = vweird.f32 %v2445
  %vm2474 = vweird.f32 %v2467
  %vm2475 = vmor %vm2473, %vm2474
  %v2476 = vsel %vm2475, %v2467, %v2472
  %v2477 = vrsqrt.pop %v2446
  %v2478 = vmul.f32 %v2477, %v2446
  %v2479 = vmul.f32 %v2478, %v2477
  %v2480 = vmul.f32 0.5, %v2479
  %v2481 = vsub.f32 1.5, %v2480
  %v2482 = vmul.f32 %v2477, %v2481
  %vm2483 = vweird.f32 %v2446
  %vm2484 = vweird.f32 %v2477
  %vm2485 = vmor %vm2483, %vm2484
  %v2486 = vsel %vm2485, %v2477, %v2482
  %v2487 = vmul.f32 %v85, %v2456
  %v2488 = vmul.f32 %v85, %v2466
  %v2489 = vmul.f32 %v85, %v2476
  %v2490 = vmul.f32 %v85, %v2486
  %v2491 = vadd.f32 %v2487, 0.0
  %v2492 = vadd.f32 %v2488, 0.0
  %v2493 = vadd.f32 %v2489, 0.0
  %v2494 = vadd.f32 %v2490, 0.0
  %v2495 = vmul.f32 %v2419, %v89
  %v2496 = vmul.f32 %v2420, %v89
  %v2497 = vmul.f32 %v2421, %v89
  %v2498 = vmul.f32 %v2422, %v89
  %v2499 = vsel %vm816, %v2495, 0.0
  %2500 = vadd.xlane.f32.xlu0 %v2499
  %v2501 = vpop.xlane.xlu0 %2500
  %v2502 = vsel %vm816, %v2496, 0.0
  %2503 = vadd.xlane.f32.xlu0 %v2502
  %v2504 = vpop.xlane.xlu0 %2503
  %v2505 = vsel %vm816, %v2497, 0.0
  %2506 = vadd.xlane.f32.xlu0 %v2505
  %v2507 = vpop.xlane.xlu0 %2506
  %v2508 = vsel %vm816, %v2498, 0.0
  %2509 = vadd.xlane.f32.xlu0 %v2508
  %v2510 = vpop.xlane.xlu0 %2509
  %v2511 = vmul.f32 %v2501, 0.125
  %v2512 = vmul.f32 %v2504, 0.125
  %v2513 = vmul.f32 %v2507, 0.125
  %v2514 = vmul.f32 %v2510, 0.125
  %v2515 = vadd.f32 %v2511, 1e-05
  %v2516 = vadd.f32 %v2512, 1e-05
  %v2517 = vadd.f32 %v2513, 1e-05
  %v2518 = vadd.f32 %v2514, 1e-05
  %v2519 = vrsqrt.pop %v2515
  %v2520 = vmul.f32 %v2519, %v2515
  %v2521 = vmul.f32 %v2520, %v2519
  %v2522 = vmul.f32 0.5, %v2521
  %v2523 = vsub.f32 1.5, %v2522
  %v2524 = vmul.f32 %v2519, %v2523
  %vm2525 = vweird.f32 %v2515
  %vm2526 = vweird.f32 %v2519
  %vm2527 = vmor %vm2525, %vm2526
  %v2528 = vsel %vm2527, %v2519, %v2524
  %v2529 = vrsqrt.pop %v2516
  %v2530 = vmul.f32 %v2529, %v2516
  %v2531 = vmul.f32 %v2530, %v2529
  %v2532 = vmul.f32 0.5, %v2531
  %v2533 = vsub.f32 1.5, %v2532
  %v2534 = vmul.f32 %v2529, %v2533
  %vm2535 = vweird.f32 %v2516
  %vm2536 = vweird.f32 %v2529
  %vm2537 = vmor %vm2535, %vm2536
  %v2538 = vsel %vm2537, %v2529, %v2534
  %v2539 = vrsqrt.pop %v2517
  %v2540 = vmul.f32 %v2539, %v2517
  %v2541 = vmul.f32 %v2540, %v2539
  %v2542 = vmul.f32 0.5, %v2541
  %v2543 = vsub.f32 1.5, %v2542
  %v2544 = vmul.f32 %v2539, %v2543
  %vm2545 = vweird.f32 %v2517
  %vm2546 = vweird.f32 %v2539
  %vm2547 = vmor %vm2545, %vm2546
  %v2548 = vsel %vm2547, %v2539, %v2544
  %v2549 = vrsqrt.pop %v2518
  %v2550 = vmul.f32 %v2549, %v2518
  %v2551 = vmul.f32 %v2550, %v2549
  %v2552 = vmul.f32 0.5, %v2551
  %v2553 = vsub.f32 1.5, %v2552
  %v2554 = vmul.f32 %v2549, %v2553
  %vm2555 = vweird.f32 %v2518
  %vm2556 = vweird.f32 %v2549
  %vm2557 = vmor %vm2555, %vm2556
  %v2558 = vsel %vm2557, %v2549, %v2554
  %v2559 = vmul.f32 %v89, %v2528
  %v2560 = vmul.f32 %v89, %v2538
  %v2561 = vmul.f32 %v89, %v2548
  %v2562 = vmul.f32 %v89, %v2558
  %v2563 = vadd.f32 %v2491, %v2559
  %v2564 = vadd.f32 %v2492, %v2560
  %v2565 = vadd.f32 %v2493, %v2561
  %v2566 = vadd.f32 %v2494, %v2562
  %v2567 = vmul.f32 %v2419, %v94
  %v2568 = vmul.f32 %v2420, %v94
  %v2569 = vmul.f32 %v2421, %v94
  %v2570 = vmul.f32 %v2422, %v94
  %v2571 = vsel %vm816, %v2567, 0.0
  %2572 = vadd.xlane.f32.xlu0 %v2571
  %v2573 = vpop.xlane.xlu0 %2572
  %v2574 = vsel %vm816, %v2568, 0.0
  %2575 = vadd.xlane.f32.xlu0 %v2574
  %v2576 = vpop.xlane.xlu0 %2575
  %v2577 = vsel %vm816, %v2569, 0.0
  %2578 = vadd.xlane.f32.xlu0 %v2577
  %v2579 = vpop.xlane.xlu0 %2578
  %v2580 = vsel %vm816, %v2570, 0.0
  %2581 = vadd.xlane.f32.xlu0 %v2580
  %v2582 = vpop.xlane.xlu0 %2581
  %v2583 = vmul.f32 %v2573, 0.125
  %v2584 = vmul.f32 %v2576, 0.125
  %v2585 = vmul.f32 %v2579, 0.125
  %v2586 = vmul.f32 %v2582, 0.125
  %v2587 = vadd.f32 %v2583, 1e-05
  %v2588 = vadd.f32 %v2584, 1e-05
  %v2589 = vadd.f32 %v2585, 1e-05
  %v2590 = vadd.f32 %v2586, 1e-05
  %v2591 = vrsqrt.pop %v2587
  %v2592 = vmul.f32 %v2591, %v2587
  %v2593 = vmul.f32 %v2592, %v2591
  %v2594 = vmul.f32 0.5, %v2593
  %v2595 = vsub.f32 1.5, %v2594
  %v2596 = vmul.f32 %v2591, %v2595
  %vm2597 = vweird.f32 %v2587
  %vm2598 = vweird.f32 %v2591
  %vm2599 = vmor %vm2597, %vm2598
  %v2600 = vsel %vm2599, %v2591, %v2596
  %v2601 = vrsqrt.pop %v2588
  %v2602 = vmul.f32 %v2601, %v2588
  %v2603 = vmul.f32 %v2602, %v2601
  %v2604 = vmul.f32 0.5, %v2603
  %v2605 = vsub.f32 1.5, %v2604
  %v2606 = vmul.f32 %v2601, %v2605
  %vm2607 = vweird.f32 %v2588
  %vm2608 = vweird.f32 %v2601
  %vm2609 = vmor %vm2607, %vm2608
  %v2610 = vsel %vm2609, %v2601, %v2606
  %v2611 = vrsqrt.pop %v2589
  %v2612 = vmul.f32 %v2611, %v2589
  %v2613 = vmul.f32 %v2612, %v2611
  %v2614 = vmul.f32 0.5, %v2613
  %v2615 = vsub.f32 1.5, %v2614
  %v2616 = vmul.f32 %v2611, %v2615
  %vm2617 = vweird.f32 %v2589
  %vm2618 = vweird.f32 %v2611
  %vm2619 = vmor %vm2617, %vm2618
  %v2620 = vsel %vm2619, %v2611, %v2616
  %v2621 = vrsqrt.pop %v2590
  %v2622 = vmul.f32 %v2621, %v2590
  %v2623 = vmul.f32 %v2622, %v2621
  %v2624 = vmul.f32 0.5, %v2623
  %v2625 = vsub.f32 1.5, %v2624
  %v2626 = vmul.f32 %v2621, %v2625
  %vm2627 = vweird.f32 %v2590
  %vm2628 = vweird.f32 %v2621
  %vm2629 = vmor %vm2627, %vm2628
  %v2630 = vsel %vm2629, %v2621, %v2626
  %v2631 = vmul.f32 %v94, %v2600
  %v2632 = vmul.f32 %v94, %v2610
  %v2633 = vmul.f32 %v94, %v2620
  %v2634 = vmul.f32 %v94, %v2630
  %v2635 = vadd.f32 %v2563, %v2631
  %v2636 = vadd.f32 %v2564, %v2632
  %v2637 = vadd.f32 %v2565, %v2633
  %v2638 = vadd.f32 %v2566, %v2634
  %v2639 = vxor.u32 %v1906, 2147483648
  %v2640 = vxor.u32 %v1909, 2147483648
  %v2641 = vxor.u32 %v1912, 2147483648
  %v2642 = vxor.u32 %v1915, 2147483648
  %v2643 = vmul.f32 %v2639, 1.442695
  %v2644 = vpow.pop %v2643
  %v2645 = vmul.f32 %v2640, 1.442695
  %v2646 = vpow.pop %v2645
  %v2647 = vmul.f32 %v2641, 1.442695
  %v2648 = vpow.pop %v2647
  %v2649 = vmul.f32 %v2642, 1.442695
  %v2650 = vpow.pop %v2649
  %v2651 = vadd.f32 %v2644, 1.0
  %v2652 = vadd.f32 %v2646, 1.0
  %v2653 = vadd.f32 %v2648, 1.0
  %v2654 = vadd.f32 %v2650, 1.0
  %v2655 = vrcp.pop %v2651
  %v2656 = vmul.f32 %v2651, %v2655
  %v2657 = vsub.f32 1.0, %v2656
  %v2658 = vmul.f32 %v2655, %v2657
  %v2659 = vadd.f32 %v2655, %v2658
  %vm2660 = vweird.f32 %v2651
  %vm2661 = vweird.f32 %v2655
  %vm2662 = vmor %vm2660, %vm2661
  %v2663 = vsel %vm2662, %v2655, %v2659
  %v2664 = vand.u32 2147483647, %v2651
  %vm2665 = vcmp.eq.f32.partialorder %v2664, 8.507059e+37
  %v2666 = vand.u32 %v2651, 2147483648
  %v2667 = vor.u32 1.1754944e-38, %v2666
  %v2668 = vsel %vm2665, %v2667, %v2663
  %v2669 = vmul.f32 1.0, %v2668
  %v2670 = vrcp.pop %v2652
  %v2671 = vmul.f32 %v2652, %v2670
  %v2672 = vsub.f32 1.0, %v2671
  %v2673 = vmul.f32 %v2670, %v2672
  %v2674 = vadd.f32 %v2670, %v2673
  %vm2675 = vweird.f32 %v2652
  %vm2676 = vweird.f32 %v2670
  %vm2677 = vmor %vm2675, %vm2676
  %v2678 = vsel %vm2677, %v2670, %v2674
  %v2679 = vand.u32 2147483647, %v2652
  %vm2680 = vcmp.eq.f32.partialorder %v2679, 8.507059e+37
  %v2681 = vand.u32 %v2652, 2147483648
  %v2682 = vor.u32 1.1754944e-38, %v2681
  %v2683 = vsel %vm2680, %v2682, %v2678
  %v2684 = vmul.f32 1.0, %v2683
  %v2685 = vrcp.pop %v2653
  %v2686 = vmul.f32 %v2653, %v2685
  %v2687 = vsub.f32 1.0, %v2686
  %v2688 = vmul.f32 %v2685, %v2687
  %v2689 = vadd.f32 %v2685, %v2688
  %vm2690 = vweird.f32 %v2653
  %vm2691 = vweird.f32 %v2685
  %vm2692 = vmor %vm2690, %vm2691
  %v2693 = vsel %vm2692, %v2685, %v2689
  %v2694 = vand.u32 2147483647, %v2653
  %vm2695 = vcmp.eq.f32.partialorder %v2694, 8.507059e+37
  %v2696 = vand.u32 %v2653, 2147483648
  %v2697 = vor.u32 1.1754944e-38, %v2696
  %v2698 = vsel %vm2695, %v2697, %v2693
  %v2699 = vmul.f32 1.0, %v2698
  %v2700 = vrcp.pop %v2654
  %v2701 = vmul.f32 %v2654, %v2700
  %v2702 = vsub.f32 1.0, %v2701
  %v2703 = vmul.f32 %v2700, %v2702
  %v2704 = vadd.f32 %v2700, %v2703
  %vm2705 = vweird.f32 %v2654
  %vm2706 = vweird.f32 %v2700
  %vm2707 = vmor %vm2705, %vm2706
  %v2708 = vsel %vm2707, %v2700, %v2704
  %v2709 = vand.u32 2147483647, %v2654
  %vm2710 = vcmp.eq.f32.partialorder %v2709, 8.507059e+37
  %v2711 = vand.u32 %v2654, 2147483648
  %v2712 = vor.u32 1.1754944e-38, %v2711
  %v2713 = vsel %vm2710, %v2712, %v2708
  %v2714 = vmul.f32 1.0, %v2713
  %v2715 = vmul.f32 %v1906, %v2669
  %v2716 = vmul.f32 %v1909, %v2684
  %v2717 = vmul.f32 %v1912, %v2699
  %v2718 = vmul.f32 %v1915, %v2714
  %v2719 = vmul.f32 %v2415, %v2635
  %v2720 = vmul.f32 %v2416, %v2636
  %v2721 = vmul.f32 %v2417, %v2637
  %v2722 = vmul.f32 %v2418, %v2638
  %2727 = vrot.lane.b32.xlu0 %v2719, 72
  %v2728 = vpop.permute.xlu0 %2727
  %2729 = vrot.lane.b32.xlu0 %v2720, 72
  %v2730 = vpop.permute.xlu0 %2729
  %2731 = vrot.lane.b32.xlu0 %v2721, 72
  %v2732 = vpop.permute.xlu0 %2731
  %2733 = vrot.lane.b32.xlu0 %v2722, 72
  %v2734 = vpop.permute.xlu0 %2733
  %v2739 = vmul.f32 %v2715, %v2728
  %v2740 = vmul.f32 %v2716, %v2730
  %v2741 = vmul.f32 %v2717, %v2732
  %v2742 = vmul.f32 %v2718, %v2734
  %s2743 = scalar_lea.vmem %s6, 408
  %v2744 = vld [vmem:[%s2743] sm:$0xff]
  %v2745 = vld [vmem:[%s2743 + $0x8] sm:$0xff]
  %v2746 = vld [vmem:[%s2743 + $0x10] sm:$0xff]
  %2751 = vrot.lane.b32.xlu0 %v2739, 56
  %v2752 = vpop.permute.xlu0 %2751
  %2753 = vrot.lane.b32.xlu0 %v2740, 56
  %v2754 = vpop.permute.xlu0 %2753
  %2755 = vrot.lane.b32.xlu0 %v2741, 56
  %v2756 = vpop.permute.xlu0 %2755
  %2757 = vrot.lane.b32.xlu0 %v2742, 56
  %v2758 = vpop.permute.xlu0 %2757
  %v2759 = vsel %vm816, %v2752, 0
  %v2761 = vsel %vm816, %v2754, 0
  %v2763 = vsel %vm816, %v2756, 0
  %v2765 = vsel %vm816, %v2758, 0
  %2767 = vmatpush.msra.mxu0 0.0
  %2768 = vmatpush.msra.mxu0 0.0
  %2769 = vmatpush.msra.mxu0 0.0
  %2770 = vmatpush.msra.mxu0 0.0
  %2771 = vmatpush.msra.mxu0 0.0
  %2772 = vmatpush.msra.mxu0 0.0
  %2773 = vmatpush.msra.mxu0 0.0
  %2774 = vmatpush.msra.mxu0 0.0
  %2775 = vmatpush.msra.mxu0 0.0
  %2776 = vmatpush.msra.mxu0 0.0
  %2777 = vmatpush.msra.mxu0 0.0
  %2778 = vmatpush.msra.mxu0 0.0
  %2779 = vmatpush.msra.mxu0 0.0
  %2780 = vmatpush.msra.mxu0 %v2746
  %2781 = vmatpush.msra.mxu0 %v2745
  %2782 = vmatpush.msra.mxu0 %v2744
  %2783 = vmatmul.f32.gmra.mxu0 %v2759
  %v2784 = vpop.f32.mrf.mxu0
  %v2785 = vadd.f32 0.0, %v2784
  %2786 = vmatmul.f32.gmra.mxu0 %v2761
  %v2787 = vpop.f32.mrf.mxu0
  %v2788 = vadd.f32 0.0, %v2787
  %2789 = vmatmul.f32.gmra.mxu0 %v2763
  %v2790 = vpop.f32.mrf.mxu0
  %v2791 = vadd.f32 0.0, %v2790
  %2792 = vmatmul.f32.gmra.mxu0 %v2765
  %v2793 = vpop.f32.mrf.mxu0
  %v2794 = vadd.f32 0.0, %v2793
  %2795 = vdwg.mxu0
  %v2796 = vadd.f32 %v1789, %v2785
  %v2797 = vadd.f32 %v1790, %v2788
  %v2798 = vadd.f32 %v1791, %v2791
  %v2799 = vadd.f32 %v1792, %v2794
  %v2800 = vmul.f32 %v2796, %v2796
  %v2801 = vmul.f32 %v2797, %v2797
  %v2802 = vmul.f32 %v2798, %v2798
  %v2803 = vmul.f32 %v2799, %v2799
  %v2804 = vsel %vm111, %v2800, 0.0
  %2805 = vadd.xlane.f32.xlu0 %v2804
  %v2806 = vpop.xlane.xlu0 %2805
  %v2807 = vsel %vm111, %v2801, 0.0
  %2808 = vadd.xlane.f32.xlu0 %v2807
  %v2809 = vpop.xlane.xlu0 %2808
  %v2810 = vsel %vm111, %v2802, 0.0
  %2811 = vadd.xlane.f32.xlu0 %v2810
  %v2812 = vpop.xlane.xlu0 %2811
  %v2813 = vsel %vm111, %v2803, 0.0
  %2814 = vadd.xlane.f32.xlu0 %v2813
  %v2815 = vpop.xlane.xlu0 %2814
  %v2816 = vmul.f32 %v2806, %v130
  %v2817 = vmul.f32 %v2809, %v130
  %v2818 = vmul.f32 %v2812, %v130
  %v2819 = vmul.f32 %v2815, %v130
  %v2820 = vadd.f32 %v2816, 1e-05
  %v2821 = vadd.f32 %v2817, 1e-05
  %v2822 = vadd.f32 %v2818, 1e-05
  %v2823 = vadd.f32 %v2819, 1e-05
  %v2824 = vrsqrt.pop %v2820
  %v2825 = vmul.f32 %v2824, %v2820
  %v2826 = vmul.f32 %v2825, %v2824
  %v2827 = vmul.f32 0.5, %v2826
  %v2828 = vsub.f32 1.5, %v2827
  %v2829 = vmul.f32 %v2824, %v2828
  %vm2830 = vweird.f32 %v2820
  %vm2831 = vweird.f32 %v2824
  %vm2832 = vmor %vm2830, %vm2831
  %v2833 = vsel %vm2832, %v2824, %v2829
  %v2834 = vrsqrt.pop %v2821
  %v2835 = vmul.f32 %v2834, %v2821
  %v2836 = vmul.f32 %v2835, %v2834
  %v2837 = vmul.f32 0.5, %v2836
  %v2838 = vsub.f32 1.5, %v2837
  %v2839 = vmul.f32 %v2834, %v2838
  %vm2840 = vweird.f32 %v2821
  %vm2841 = vweird.f32 %v2834
  %vm2842 = vmor %vm2840, %vm2841
  %v2843 = vsel %vm2842, %v2834, %v2839
  %v2844 = vrsqrt.pop %v2822
  %v2845 = vmul.f32 %v2844, %v2822
  %v2846 = vmul.f32 %v2845, %v2844
  %v2847 = vmul.f32 0.5, %v2846
  %v2848 = vsub.f32 1.5, %v2847
  %v2849 = vmul.f32 %v2844, %v2848
  %vm2850 = vweird.f32 %v2822
  %vm2851 = vweird.f32 %v2844
  %vm2852 = vmor %vm2850, %vm2851
  %v2853 = vsel %vm2852, %v2844, %v2849
  %v2854 = vrsqrt.pop %v2823
  %v2855 = vmul.f32 %v2854, %v2823
  %v2856 = vmul.f32 %v2855, %v2854
  %v2857 = vmul.f32 0.5, %v2856
  %v2858 = vsub.f32 1.5, %v2857
  %v2859 = vmul.f32 %v2854, %v2858
  %vm2860 = vweird.f32 %v2823
  %vm2861 = vweird.f32 %v2854
  %vm2862 = vmor %vm2860, %vm2861
  %v2863 = vsel %vm2862, %v2854, %v2859
  %v2864 = vmul.f32 %v2796, %v2833
  %v2865 = vmul.f32 %v2797, %v2843
  %v2866 = vmul.f32 %v2798, %v2853
  %v2867 = vmul.f32 %v2799, %v2863
  %v2868 = vperm.slane %v1794, 1
  %v2869 = vmul.f32 %v2864, %v2868
  %v2870 = vmul.f32 %v2865, %v2868
  %v2871 = vmul.f32 %v2866, %v2868
  %v2872 = vmul.f32 %v2867, %v2868
  %v2873 = vld [vmem:[%s1870] sm:$0xff]
  %v2874 = vld [vmem:[%s1870 + $0x8] sm:$0xff]
  %v2875 = vld [vmem:[%s1870 + $0x10] sm:$0xff]
  %v2876 = vld [vmem:[%s1870 + $0x20] sm:$0xf]
  %v2877 = vld [vmem:[%s1870 + $0x28] sm:$0xf]
  %v2878 = vld [vmem:[%s1870 + $0x30] sm:$0xf]
  %v2879 = vperm.slane %v1794, 3
  %v2880 = vperm.slane %v1795, 3
  %v2881 = vperm.slane %v1796, 3
  %v2883 = vsel %vm111, %v2869, 0
  %v2886 = vsel %vm111, %v2870, 0
  %v2889 = vsel %vm111, %v2871, 0
  %v2892 = vsel %vm111, %v2872, 0
  %v2895 = vsel %vm202, %v2876, 0
  %v2898 = vsel %vm202, %v2877, 0
  %v2901 = vsel %vm202, %v2878, 0
  %2903 = vmatpush.msra.mxu0 0.0
  %2904 = vmatpush.msra.mxu0 0.0
  %2905 = vmatpush.msra.mxu0 0.0
  %2906 = vmatpush.msra.mxu0 0.0
  %2907 = vmatpush.msra.mxu0 0.0
  %2908 = vmatpush.msra.mxu0 0.0
  %2909 = vmatpush.msra.mxu0 0.0
  %2910 = vmatpush.msra.mxu0 0.0
  %2911 = vmatpush.msra.mxu0 0.0
  %2912 = vmatpush.msra.mxu0 0.0
  %2913 = vmatpush.msra.mxu0 0.0
  %2914 = vmatpush.msra.mxu0 0.0
  %2915 = vmatpush.msra.mxu0 0.0
  %2916 = vmatpush.msra.mxu0 0.0
  %2917 = vmatpush.msra.mxu0 %v2895
  %2918 = vmatpush.msra.mxu0 %v2873
  %2919 = vmatmul.f32.gmra.mxu0 %v2883
  %v2920 = vpop.f32.mrf.mxu0
  %v2921 = vadd.f32 %v2879, %v2920
  %2922 = vmatmul.f32.gmra.mxu0 %v2886
  %v2923 = vpop.f32.mrf.mxu0
  %v2924 = vadd.f32 %v2879, %v2923
  %2925 = vmatmul.f32.gmra.mxu0 %v2889
  %v2926 = vpop.f32.mrf.mxu0
  %v2927 = vadd.f32 %v2879, %v2926
  %2928 = vmatmul.f32.gmra.mxu0 %v2892
  %v2929 = vpop.f32.mrf.mxu0
  %v2930 = vadd.f32 %v2879, %v2929
  %2931 = vdwg.mxu0
  %2932 = vmatpush.msra.mxu0 0.0
  %2933 = vmatpush.msra.mxu0 0.0
  %2934 = vmatpush.msra.mxu0 0.0
  %2935 = vmatpush.msra.mxu0 0.0
  %2936 = vmatpush.msra.mxu0 0.0
  %2937 = vmatpush.msra.mxu0 0.0
  %2938 = vmatpush.msra.mxu0 0.0
  %2939 = vmatpush.msra.mxu0 0.0
  %2940 = vmatpush.msra.mxu0 0.0
  %2941 = vmatpush.msra.mxu0 0.0
  %2942 = vmatpush.msra.mxu0 0.0
  %2943 = vmatpush.msra.mxu0 0.0
  %2944 = vmatpush.msra.mxu0 0.0
  %2945 = vmatpush.msra.mxu0 0.0
  %2946 = vmatpush.msra.mxu0 %v2898
  %2947 = vmatpush.msra.mxu0 %v2874
  %2948 = vmatmul.f32.gmra.mxu0 %v2883
  %v2949 = vpop.f32.mrf.mxu0
  %v2950 = vadd.f32 %v2880, %v2949
  %2951 = vmatmul.f32.gmra.mxu0 %v2886
  %v2952 = vpop.f32.mrf.mxu0
  %v2953 = vadd.f32 %v2880, %v2952
  %2954 = vmatmul.f32.gmra.mxu0 %v2889
  %v2955 = vpop.f32.mrf.mxu0
  %v2956 = vadd.f32 %v2880, %v2955
  %2957 = vmatmul.f32.gmra.mxu0 %v2892
  %v2958 = vpop.f32.mrf.mxu0
  %v2959 = vadd.f32 %v2880, %v2958
  %2960 = vdwg.mxu0
  %2961 = vmatpush.msra.mxu0 0.0
  %2962 = vmatpush.msra.mxu0 0.0
  %2963 = vmatpush.msra.mxu0 0.0
  %2964 = vmatpush.msra.mxu0 0.0
  %2965 = vmatpush.msra.mxu0 0.0
  %2966 = vmatpush.msra.mxu0 0.0
  %2967 = vmatpush.msra.mxu0 0.0
  %2968 = vmatpush.msra.mxu0 0.0
  %2969 = vmatpush.msra.mxu0 0.0
  %2970 = vmatpush.msra.mxu0 0.0
  %2971 = vmatpush.msra.mxu0 0.0
  %2972 = vmatpush.msra.mxu0 0.0
  %2973 = vmatpush.msra.mxu0 0.0
  %2974 = vmatpush.msra.mxu0 0.0
  %2975 = vmatpush.msra.mxu0 %v2901
  %2976 = vmatpush.msra.mxu0 %v2875
  %2977 = vmatmul.f32.gmra.mxu0 %v2883
  %v2978 = vpop.f32.mrf.mxu0
  %v2979 = vadd.f32 %v2881, %v2978
  %2980 = vmatmul.f32.gmra.mxu0 %v2886
  %v2981 = vpop.f32.mrf.mxu0
  %v2982 = vadd.f32 %v2881, %v2981
  %2983 = vmatmul.f32.gmra.mxu0 %v2889
  %v2984 = vpop.f32.mrf.mxu0
  %v2985 = vadd.f32 %v2881, %v2984
  %2986 = vmatmul.f32.gmra.mxu0 %v2892
  %v2987 = vpop.f32.mrf.mxu0
  %v2988 = vadd.f32 %v2881, %v2987
  %2989 = vdwg.mxu0
  %v2990 = vmul.f32 %v2921, 0.5
  %v2991 = vmul.f32 %v2950, 0.5
  %v2992 = vmul.f32 %v2979, 0.5
  %v2993 = vmul.f32 %v2924, 0.5
  %v2994 = vmul.f32 %v2953, 0.5
  %v2995 = vmul.f32 %v2982, 0.5
  %v2996 = vmul.f32 %v2927, 0.5
  %v2997 = vmul.f32 %v2956, 0.5
  %v2998 = vmul.f32 %v2985, 0.5
  %v2999 = vmul.f32 %v2930, 0.5
  %v3000 = vmul.f32 %v2959, 0.5
  %v3001 = vmul.f32 %v2988, 0.5
  %v3002 = vmul.f32 %v2921, 0.044715
  %v3003 = vmul.f32 %v2950, 0.044715
  %v3004 = vmul.f32 %v2979, 0.044715
  %v3005 = vmul.f32 %v2924, 0.044715
  %v3006 = vmul.f32 %v2953, 0.044715
  %v3007 = vmul.f32 %v2982, 0.044715
  %v3008 = vmul.f32 %v2927, 0.044715
  %v3009 = vmul.f32 %v2956, 0.044715
  %v3010 = vmul.f32 %v2985, 0.044715
  %v3011 = vmul.f32 %v2930, 0.044715
  %v3012 = vmul.f32 %v2959, 0.044715
  %v3013 = vmul.f32 %v2988, 0.044715
  %v3014 = vmul.f32 %v3002, %v2921
  %v3015 = vmul.f32 %v3003, %v2950
  %v3016 = vmul.f32 %v3004, %v2979
  %v3017 = vmul.f32 %v3005, %v2924
  %v3018 = vmul.f32 %v3006, %v2953
  %v3019 = vmul.f32 %v3007, %v2982
  %v3020 = vmul.f32 %v3008, %v2927
  %v3021 = vmul.f32 %v3009, %v2956
  %v3022 = vmul.f32 %v3010, %v2985
  %v3023 = vmul.f32 %v3011, %v2930
  %v3024 = vmul.f32 %v3012, %v2959
  %v3025 = vmul.f32 %v3013, %v2988
  %v3026 = vmul.f32 %v3014, %v2921
  %v3027 = vmul.f32 %v3015, %v2950
  %v3028 = vmul.f32 %v3016, %v2979
  %v3029 = vmul.f32 %v3017, %v2924
  %v3030 = vmul.f32 %v3018, %v2953
  %v3031 = vmul.f32 %v3019, %v2982
  %v3032 = vmul.f32 %v3020, %v2927
  %v3033 = vmul.f32 %v3021, %v2956
  %v3034 = vmul.f32 %v3022, %v2985
  %v3035 = vmul.f32 %v3023, %v2930
  %v3036 = vmul.f32 %v3024, %v2959
  %v3037 = vmul.f32 %v3025, %v2988
  %v3038 = vadd.f32 %v2921, %v3026
  %v3039 = vadd.f32 %v2950, %v3027
  %v3040 = vadd.f32 %v2979, %v3028
  %v3041 = vadd.f32 %v2924, %v3029
  %v3042 = vadd.f32 %v2953, %v3030
  %v3043 = vadd.f32 %v2982, %v3031
  %v3044 = vadd.f32 %v2927, %v3032
  %v3045 = vadd.f32 %v2956, %v3033
  %v3046 = vadd.f32 %v2985, %v3034
  %v3047 = vadd.f32 %v2930, %v3035
  %v3048 = vadd.f32 %v2959, %v3036
  %v3049 = vadd.f32 %v2988, %v3037
  %v3050 = vmul.f32 %v3038, 0.7978846
  %v3051 = vmul.f32 %v3039, 0.7978846
  %v3052 = vmul.f32 %v3040, 0.7978846
  %v3053 = vmul.f32 %v3041, 0.7978846
  %v3054 = vmul.f32 %v3042, 0.7978846
  %v3055 = vmul.f32 %v3043, 0.7978846
  %v3056 = vmul.f32 %v3044, 0.7978846
  %v3057 = vmul.f32 %v3045, 0.7978846
  %v3058 = vmul.f32 %v3046, 0.7978846
  %v3059 = vmul.f32 %v3047, 0.7978846
  %v3060 = vmul.f32 %v3048, 0.7978846
  %v3061 = vmul.f32 %v3049, 0.7978846
  %v3062 = vtanh.pop %v3050
  %v3063 = vtanh.pop %v3051
  %v3064 = vtanh.pop %v3052
  %v3065 = vtanh.pop %v3053
  %v3066 = vtanh.pop %v3054
  %v3067 = vtanh.pop %v3055
  %v3068 = vtanh.pop %v3056
  %v3069 = vtanh.pop %v3057
  %v3070 = vtanh.pop %v3058
  %v3071 = vtanh.pop %v3059
  %v3072 = vtanh.pop %v3060
  %v3073 = vtanh.pop %v3061
  %v3074 = vadd.f32 %v3062, 1.0
  %v3075 = vadd.f32 %v3063, 1.0
  %v3076 = vadd.f32 %v3064, 1.0
  %v3077 = vadd.f32 %v3065, 1.0
  %v3078 = vadd.f32 %v3066, 1.0
  %v3079 = vadd.f32 %v3067, 1.0
  %v3080 = vadd.f32 %v3068, 1.0
  %v3081 = vadd.f32 %v3069, 1.0
  %v3082 = vadd.f32 %v3070, 1.0
  %v3083 = vadd.f32 %v3071, 1.0
  %v3084 = vadd.f32 %v3072, 1.0
  %v3085 = vadd.f32 %v3073, 1.0
  %v3086 = vmul.f32 %v2990, %v3074
  %v3087 = vmul.f32 %v2991, %v3075
  %v3088 = vmul.f32 %v2992, %v3076
  %v3089 = vmul.f32 %v2993, %v3077
  %v3090 = vmul.f32 %v2994, %v3078
  %v3091 = vmul.f32 %v2995, %v3079
  %v3092 = vmul.f32 %v2996, %v3080
  %v3093 = vmul.f32 %v2997, %v3081
  %v3094 = vmul.f32 %v2998, %v3082
  %v3095 = vmul.f32 %v2999, %v3083
  %v3096 = vmul.f32 %v3000, %v3084
  %v3097 = vmul.f32 %v3001, %v3085
  %v3098 = vadd.f32 %v3086, %v3087
  %v3099 = vadd.f32 %v3098, %v3088
  %3100 = vadd.xlane.f32.xlu0 %v3099
  %v3101 = vpop.xlane.xlu0 %3100
  %v3102 = vadd.f32 %v3089, %v3090
  %v3103 = vadd.f32 %v3102, %v3091
  %3104 = vadd.xlane.f32.xlu0 %v3103
  %v3105 = vpop.xlane.xlu0 %3104
  %v3106 = vadd.f32 %v3092, %v3093
  %v3107 = vadd.f32 %v3106, %v3094
  %3108 = vadd.xlane.f32.xlu0 %v3107
  %v3109 = vpop.xlane.xlu0 %3108
  %v3110 = vadd.f32 %v3095, %v3096
  %v3111 = vadd.f32 %v3110, %v3097
  %3112 = vadd.xlane.f32.xlu0 %v3111
  %v3113 = vpop.xlane.xlu0 %3112
  %v3114 = vmul.f32 %v3101, 0.0033333334
  %v3115 = vmul.f32 %v3105, 0.0033333334
  %v3116 = vmul.f32 %v3109, 0.0033333334
  %v3117 = vmul.f32 %v3113, 0.0033333334
  %v3118 = vsub.f32 %v3086, %v3114
  %v3119 = vsub.f32 %v3087, %v3114
  %v3120 = vsub.f32 %v3088, %v3114
  %v3121 = vsub.f32 %v3089, %v3115
  %v3122 = vsub.f32 %v3090, %v3115
  %v3123 = vsub.f32 %v3091, %v3115
  %v3124 = vsub.f32 %v3092, %v3116
  %v3125 = vsub.f32 %v3093, %v3116
  %v3126 = vsub.f32 %v3094, %v3116
  %v3127 = vsub.f32 %v3095, %v3117
  %v3128 = vsub.f32 %v3096, %v3117
  %v3129 = vsub.f32 %v3097, %v3117
  %v3130 = vmul.f32 %v3118, %v101
  %v3131 = vmul.f32 %v3119, %v102
  %v3132 = vmul.f32 %v3120, %v103
  %v3133 = vmul.f32 %v3121, %v101
  %v3134 = vmul.f32 %v3122, %v102
  %v3135 = vmul.f32 %v3123, %v103
  %v3136 = vmul.f32 %v3124, %v101
  %v3137 = vmul.f32 %v3125, %v102
  %v3138 = vmul.f32 %v3126, %v103
  %v3139 = vmul.f32 %v3127, %v101
  %v3140 = vmul.f32 %v3128, %v102
  %v3141 = vmul.f32 %v3129, %v103
  %v3142 = vmul.f32 %v3130, %v3130
  %v3143 = vmul.f32 %v3131, %v3131
  %v3144 = vmul.f32 %v3132, %v3132
  %v3145 = vmul.f32 %v3133, %v3133
  %v3146 = vmul.f32 %v3134, %v3134
  %v3147 = vmul.f32 %v3135, %v3135
  %v3148 = vmul.f32 %v3136, %v3136
  %v3149 = vmul.f32 %v3137, %v3137
  %v3150 = vmul.f32 %v3138, %v3138
  %v3151 = vmul.f32 %v3139, %v3139
  %v3152 = vmul.f32 %v3140, %v3140
  %v3153 = vmul.f32 %v3141, %v3141
  %v3154 = vadd.f32 %v3142, %v3143
  %v3155 = vadd.f32 %v3154, %v3144
  %3156 = vadd.xlane.f32.xlu0 %v3155
  %v3157 = vpop.xlane.xlu0 %3156
  %v3158 = vadd.f32 %v3145, %v3146
  %v3159 = vadd.f32 %v3158, %v3147
  %3160 = vadd.xlane.f32.xlu0 %v3159
  %v3161 = vpop.xlane.xlu0 %3160
  %v3162 = vadd.f32 %v3148, %v3149
  %v3163 = vadd.f32 %v3162, %v3150
  %3164 = vadd.xlane.f32.xlu0 %v3163
  %v3165 = vpop.xlane.xlu0 %3164
  %v3166 = vadd.f32 %v3151, %v3152
  %v3167 = vadd.f32 %v3166, %v3153
  %3168 = vadd.xlane.f32.xlu0 %v3167
  %v3169 = vpop.xlane.xlu0 %3168
  %v3170 = vmul.f32 %v3157, 0.0033333334
  %v3171 = vmul.f32 %v3161, 0.0033333334
  %v3172 = vmul.f32 %v3165, 0.0033333334
  %v3173 = vmul.f32 %v3169, 0.0033333334
  %v3174 = vadd.f32 %v3170, 1e-05
  %v3175 = vadd.f32 %v3171, 1e-05
  %v3176 = vadd.f32 %v3172, 1e-05
  %v3177 = vadd.f32 %v3173, 1e-05
  %v3178 = vrsqrt.pop %v3174
  %v3179 = vmul.f32 %v3178, %v3174
  %v3180 = vmul.f32 %v3179, %v3178
  %v3181 = vmul.f32 0.5, %v3180
  %v3182 = vsub.f32 1.5, %v3181
  %v3183 = vmul.f32 %v3178, %v3182
  %vm3184 = vweird.f32 %v3174
  %vm3185 = vweird.f32 %v3178
  %vm3186 = vmor %vm3184, %vm3185
  %v3187 = vsel %vm3186, %v3178, %v3183
  %v3188 = vrsqrt.pop %v3175
  %v3189 = vmul.f32 %v3188, %v3175
  %v3190 = vmul.f32 %v3189, %v3188
  %v3191 = vmul.f32 0.5, %v3190
  %v3192 = vsub.f32 1.5, %v3191
  %v3193 = vmul.f32 %v3188, %v3192
  %vm3194 = vweird.f32 %v3175
  %vm3195 = vweird.f32 %v3188
  %vm3196 = vmor %vm3194, %vm3195
  %v3197 = vsel %vm3196, %v3188, %v3193
  %v3198 = vrsqrt.pop %v3176
  %v3199 = vmul.f32 %v3198, %v3176
  %v3200 = vmul.f32 %v3199, %v3198
  %v3201 = vmul.f32 0.5, %v3200
  %v3202 = vsub.f32 1.5, %v3201
  %v3203 = vmul.f32 %v3198, %v3202
  %vm3204 = vweird.f32 %v3176
  %vm3205 = vweird.f32 %v3198
  %vm3206 = vmor %vm3204, %vm3205
  %v3207 = vsel %vm3206, %v3198, %v3203
  %v3208 = vrsqrt.pop %v3177
  %v3209 = vmul.f32 %v3208, %v3177
  %v3210 = vmul.f32 %v3209, %v3208
  %v3211 = vmul.f32 0.5, %v3210
  %v3212 = vsub.f32 1.5, %v3211
  %v3213 = vmul.f32 %v3208, %v3212
  %vm3214 = vweird.f32 %v3177
  %vm3215 = vweird.f32 %v3208
  %vm3216 = vmor %vm3214, %vm3215
  %v3217 = vsel %vm3216, %v3208, %v3213
  %v3218 = vmul.f32 %v3118, %v3187
  %v3219 = vmul.f32 %v3119, %v3187
  %v3220 = vmul.f32 %v3120, %v3187
  %v3221 = vmul.f32 %v3121, %v3197
  %v3222 = vmul.f32 %v3122, %v3197
  %v3223 = vmul.f32 %v3123, %v3197
  %v3224 = vmul.f32 %v3124, %v3207
  %v3225 = vmul.f32 %v3125, %v3207
  %v3226 = vmul.f32 %v3126, %v3207
  %v3227 = vmul.f32 %v3127, %v3217
  %v3228 = vmul.f32 %v3128, %v3217
  %v3229 = vmul.f32 %v3129, %v3217
  %v3230 = vperm.slane %v1794, 4
  %v3231 = vperm.slane %v1795, 4
  %v3232 = vperm.slane %v1796, 4
  %v3233 = vmul.f32 %v3218, %v3230
  %v3234 = vmul.f32 %v3219, %v3231
  %v3235 = vmul.f32 %v3220, %v3232
  %v3236 = vmul.f32 %v3221, %v3230
  %v3237 = vmul.f32 %v3222, %v3231
  %v3238 = vmul.f32 %v3223, %v3232
  %v3239 = vmul.f32 %v3224, %v3230
  %v3240 = vmul.f32 %v3225, %v3231
  %v3241 = vmul.f32 %v3226, %v3232
  %v3242 = vmul.f32 %v3227, %v3230
  %v3243 = vmul.f32 %v3228, %v3231
  %v3244 = vmul.f32 %v3229, %v3232
  %v3245 = vperm.slane %v1794, 5
  %v3246 = vperm.slane %v1795, 5
  %v3247 = vperm.slane %v1796, 5
  %v3248 = vadd.f32 %v3233, %v3245
  %v3249 = vadd.f32 %v3234, %v3246
  %v3250 = vadd.f32 %v3235, %v3247
  %v3251 = vadd.f32 %v3236, %v3245
  %v3252 = vadd.f32 %v3237, %v3246
  %v3253 = vadd.f32 %v3238, %v3247
  %v3254 = vadd.f32 %v3239, %v3245
  %v3255 = vadd.f32 %v3240, %v3246
  %v3256 = vadd.f32 %v3241, %v3247
  %v3257 = vadd.f32 %v3242, %v3245
  %v3258 = vadd.f32 %v3243, %v3246
  %v3259 = vadd.f32 %v3244, %v3247
  %v3260 = vld [vmem:[%s2743 + $0x18] sm:$0xff]
  %v3261 = vld [vmem:[%s2743 + $0x20] sm:$0xff]
  %v3262 = vld [vmem:[%s2743 + $0x28] sm:$0xff]
  %v3263 = vld [vmem:[%s2743 + $0x30] sm:$0xff]
  %v3264 = vld [vmem:[%s2743 + $0x38] sm:$0xff]
  %v3265 = vld [vmem:[%s2743 + $0x40] sm:$0xff]
  %v3266 = vld [vmem:[%s2743 + $0x48] sm:$0xff]
  %v3267 = vld [vmem:[%s2743 + $0x50] sm:$0xff]
  %v3268 = vld [vmem:[%s2743 + $0x58] sm:$0xff]
  %v3269 = vld [vmem:[%s2743 + $0x60] sm:$0xff]
  %v3270 = vld [vmem:[%s2743 + $0x68] sm:$0xff]
  %v3271 = vld [vmem:[%s2743 + $0x70] sm:$0xff]
  %v3272 = vld [vmem:[%s2743 + $0x78] sm:$0xff]
  %v3273 = vld [vmem:[%s2743 + $0x80] sm:$0xff]
  %v3274 = vld [vmem:[%s2743 + $0x88] sm:$0xff]
  %v3275 = vld [vmem:[%s2743 + $0x90] sm:$0xff]
  %v3276 = vld [vmem:[%s2743 + $0x98] sm:$0xff]
  %v3277 = vld [vmem:[%s2743 + $0xa0] sm:$0xff]
  %v3278 = vld [vmem:[%s2743 + $0xa8] sm:$0xff]
  %v3279 = vld [vmem:[%s2743 + $0xb0] sm:$0xff]
  %v3280 = vld [vmem:[%s2743 + $0xb8] sm:$0xff]
  %v3281 = vld [vmem:[%s2743 + $0xc0] sm:$0xff]
  %v3282 = vld [vmem:[%s2743 + $0xc8] sm:$0xff]
  %v3283 = vld [vmem:[%s2743 + $0xd0] sm:$0xff]
  %v3284 = vld [vmem:[%s2743 + $0xd8] sm:$0xff]
  %v3285 = vld [vmem:[%s2743 + $0xe0] sm:$0xff]
  %v3286 = vld [vmem:[%s2743 + $0xe8] sm:$0xff]
  %v3287 = vld [vmem:[%s2743 + $0xf0] sm:$0xff]
  %v3288 = vld [vmem:[%s2743 + $0xf8] sm:$0xff]
  %v3289 = vld [vmem:[%s2743 + $0x100] sm:$0xff]
  %v3290 = vld [vmem:[%s2743 + $0x108] sm:$0xff]
  %v3291 = vld [vmem:[%s2743 + $0x110] sm:$0xff]
  %v3292 = vld [vmem:[%s2743 + $0x118] sm:$0xff]
  %v3293 = vld [vmem:[%s2743 + $0x120] sm:$0xff]
  %v3294 = vld [vmem:[%s2743 + $0x128] sm:$0xff]
  %v3295 = vld [vmem:[%s2743 + $0x130] sm:$0xff]
  %v3296 = vld [vmem:[%s2743 + $0x138] sm:$0xff]
  %v3297 = vld [vmem:[%s2743 + $0x140] sm:$0xff]
  %v3298 = vld [vmem:[%s2743 + $0x148] sm:$0xff]
  %v3299 = vld [vmem:[%s2743 + $0x150] sm:$0xff]
  %v3300 = vld [vmem:[%s2743 + $0x158] sm:$0xff]
  %v3301 = vld [vmem:[%s2743 + $0x160] sm:$0xff]
  %v3302 = vld [vmem:[%s2743 + $0x168] sm:$0xff]
  %v3303 = vld [vmem:[%s2743 + $0x170] sm:$0xff]
  %v3304 = vld [vmem:[%s2743 + $0x178] sm:$0xff]
  %v3305 = vld [vmem:[%s2743 + $0x180] sm:$0xff]
  %v3306 = vld [vmem:[%s2743 + $0x188] sm:$0xff]
  %v3307 = vld [vmem:[%s2743 + $0x190] sm:$0xff]
  %3308 = vmatpush.msra.mxu0 %v3275
  %3309 = vmatpush.msra.mxu0 %v3274
  %3310 = vmatpush.msra.mxu0 %v3273
  %3311 = vmatpush.msra.mxu0 %v3272
  %3312 = vmatpush.msra.mxu0 %v3271
  %3313 = vmatpush.msra.mxu0 %v3270
  %3314 = vmatpush.msra.mxu0 %v3269
  %3315 = vmatpush.msra.mxu0 %v3268
  %3316 = vmatpush.msra.mxu0 %v3267
  %3317 = vmatpush.msra.mxu0 %v3266
  %3318 = vmatpush.msra.mxu0 %v3265
  %3319 = vmatpush.msra.mxu0 %v3264
  %3320 = vmatpush.msra.mxu0 %v3263
  %3321 = vmatpush.msra.mxu0 %v3262
  %3322 = vmatpush.msra.mxu0 %v3261
  %3323 = vmatpush.msra.mxu0 %v3260
  %3324 = vmatmul.f32.gmra.mxu0 %v3248
  %v3325 = vpop.f32.mrf.mxu0
  %v3326 = vadd.f32 0.0, %v3325
  %3327 = vmatmul.f32.gmra.mxu0 %v3251
  %v3328 = vpop.f32.mrf.mxu0
  %v3329 = vadd.f32 0.0, %v3328
  %3330 = vmatmul.f32.gmra.mxu0 %v3254
  %v3331 = vpop.f32.mrf.mxu0
  %v3332 = vadd.f32 0.0, %v3331
  %3333 = vmatmul.f32.gmra.mxu0 %v3257
  %v3334 = vpop.f32.mrf.mxu0
  %v3335 = vadd.f32 0.0, %v3334
  %3336 = vdwg.mxu0
  %3337 = vmatpush.msra.mxu0 %v3291
  %3338 = vmatpush.msra.mxu0 %v3290
  %3339 = vmatpush.msra.mxu0 %v3289
  %3340 = vmatpush.msra.mxu0 %v3288
  %3341 = vmatpush.msra.mxu0 %v3287
  %3342 = vmatpush.msra.mxu0 %v3286
  %3343 = vmatpush.msra.mxu0 %v3285
  %3344 = vmatpush.msra.mxu0 %v3284
  %3345 = vmatpush.msra.mxu0 %v3283
  %3346 = vmatpush.msra.mxu0 %v3282
  %3347 = vmatpush.msra.mxu0 %v3281
  %3348 = vmatpush.msra.mxu0 %v3280
  %3349 = vmatpush.msra.mxu0 %v3279
  %3350 = vmatpush.msra.mxu0 %v3278
  %3351 = vmatpush.msra.mxu0 %v3277
  %3352 = vmatpush.msra.mxu0 %v3276
  %3353 = vmatmul.f32.gmra.mxu0 %v3249
  %v3354 = vpop.f32.mrf.mxu0
  %v3355 = vadd.f32 %v3326, %v3354
  %3356 = vmatmul.f32.gmra.mxu0 %v3252
  %v3357 = vpop.f32.mrf.mxu0
  %v3358 = vadd.f32 %v3329, %v3357
  %3359 = vmatmul.f32.gmra.mxu0 %v3255
  %v3360 = vpop.f32.mrf.mxu0
  %v3361 = vadd.f32 %v3332, %v3360
  %3362 = vmatmul.f32.gmra.mxu0 %v3258
  %v3363 = vpop.f32.mrf.mxu0
  %v3364 = vadd.f32 %v3335, %v3363
  %3365 = vdwg.mxu0
  %3366 = vmatpush.msra.mxu0 %v3307
  %3367 = vmatpush.msra.mxu0 %v3306
  %3368 = vmatpush.msra.mxu0 %v3305
  %3369 = vmatpush.msra.mxu0 %v3304
  %3370 = vmatpush.msra.mxu0 %v3303
  %3371 = vmatpush.msra.mxu0 %v3302
  %3372 = vmatpush.msra.mxu0 %v3301
  %3373 = vmatpush.msra.mxu0 %v3300
  %3374 = vmatpush.msra.mxu0 %v3299
  %3375 = vmatpush.msra.mxu0 %v3298
  %3376 = vmatpush.msra.mxu0 %v3297
  %3377 = vmatpush.msra.mxu0 %v3296
  %3378 = vmatpush.msra.mxu0 %v3295
  %3379 = vmatpush.msra.mxu0 %v3294
  %3380 = vmatpush.msra.mxu0 %v3293
  %3381 = vmatpush.msra.mxu0 %v3292
  %3382 = vmatmul.f32.gmra.mxu0 %v3250
  %v3383 = vpop.f32.mrf.mxu0
  %v3384 = vadd.f32 %v3355, %v3383
  %3385 = vmatmul.f32.gmra.mxu0 %v3253
  %v3386 = vpop.f32.mrf.mxu0
  %v3387 = vadd.f32 %v3358, %v3386
  %3388 = vmatmul.f32.gmra.mxu0 %v3256
  %v3389 = vpop.f32.mrf.mxu0
  %v3390 = vadd.f32 %v3361, %v3389
  %3391 = vmatmul.f32.gmra.mxu0 %v3259
  %v3392 = vpop.f32.mrf.mxu0
  %v3393 = vadd.f32 %v3364, %v3392
  %3394 = vdwg.mxu0
  %v3395 = vadd.f32 %v2796, %v3384
  %v3396 = vadd.f32 %v2797, %v3387
  %v3397 = vadd.f32 %v2798, %v3390
  %v3398 = vadd.f32 %v2799, %v3393
  %v3399 = vperm.slane %v1794, 2
  %v3400 = vadd.f32 %v3395, %v3399
  %v3401 = vadd.f32 %v3396, %v3399
  %v3402 = vadd.f32 %v3397, %v3399
  %v3403 = vadd.f32 %v3398, %v3399
  %s3404 = scalar_lea.vmem %s7, 48
  %v3405 = vld [vmem:[%s3404] sm:$0x3f]
  %v3406 = vld [vmem:[%s3404 + $0x8] sm:$0x3f]
  %v3407 = vld [vmem:[%s3404 + $0x10] sm:$0x3f]
  %v3408 = vmul.f32 %v3400, %v3400
  %v3409 = vmul.f32 %v3401, %v3401
  %v3410 = vmul.f32 %v3402, %v3402
  %v3411 = vmul.f32 %v3403, %v3403
  %v3412 = vsel %vm111, %v3408, 0.0
  %3413 = vadd.xlane.f32.xlu0 %v3412
  %v3414 = vpop.xlane.xlu0 %3413
  %v3415 = vsel %vm111, %v3409, 0.0
  %3416 = vadd.xlane.f32.xlu0 %v3415
  %v3417 = vpop.xlane.xlu0 %3416
  %v3418 = vsel %vm111, %v3410, 0.0
  %3419 = vadd.xlane.f32.xlu0 %v3418
  %v3420 = vpop.xlane.xlu0 %3419
  %v3421 = vsel %vm111, %v3411, 0.0
  %3422 = vadd.xlane.f32.xlu0 %v3421
  %v3423 = vpop.xlane.xlu0 %3422
  %v3424 = vmul.f32 %v3414, %v130
  %v3425 = vmul.f32 %v3417, %v130
  %v3426 = vmul.f32 %v3420, %v130
  %v3427 = vmul.f32 %v3423, %v130
  %v3428 = vadd.f32 %v3424, 1e-05
  %v3429 = vadd.f32 %v3425, 1e-05
  %v3430 = vadd.f32 %v3426, 1e-05
  %v3431 = vadd.f32 %v3427, 1e-05
  %v3432 = vrsqrt.pop %v3428
  %v3433 = vmul.f32 %v3432, %v3428
  %v3434 = vmul.f32 %v3433, %v3432
  %v3435 = vmul.f32 0.5, %v3434
  %v3436 = vsub.f32 1.5, %v3435
  %v3437 = vmul.f32 %v3432, %v3436
  %vm3438 = vweird.f32 %v3428
  %vm3439 = vweird.f32 %v3432
  %vm3440 = vmor %vm3438, %vm3439
  %v3441 = vsel %vm3440, %v3432, %v3437
  %v3442 = vrsqrt.pop %v3429
  %v3443 = vmul.f32 %v3442, %v3429
  %v3444 = vmul.f32 %v3443, %v3442
  %v3445 = vmul.f32 0.5, %v3444
  %v3446 = vsub.f32 1.5, %v3445
  %v3447 = vmul.f32 %v3442, %v3446
  %vm3448 = vweird.f32 %v3429
  %vm3449 = vweird.f32 %v3442
  %vm3450 = vmor %vm3448, %vm3449
  %v3451 = vsel %vm3450, %v3442, %v3447
  %v3452 = vrsqrt.pop %v3430
  %v3453 = vmul.f32 %v3452, %v3430
  %v3454 = vmul.f32 %v3453, %v3452
  %v3455 = vmul.f32 0.5, %v3454
  %v3456 = vsub.f32 1.5, %v3455
  %v3457 = vmul.f32 %v3452, %v3456
  %vm3458 = vweird.f32 %v3430
  %vm3459 = vweird.f32 %v3452
  %vm3460 = vmor %vm3458, %vm3459
  %v3461 = vsel %vm3460, %v3452, %v3457
  %v3462 = vrsqrt.pop %v3431
  %v3463 = vmul.f32 %v3462, %v3431
  %v3464 = vmul.f32 %v3463, %v3462
  %v3465 = vmul.f32 0.5, %v3464
  %v3466 = vsub.f32 1.5, %v3465
  %v3467 = vmul.f32 %v3462, %v3466
  %vm3468 = vweird.f32 %v3431
  %vm3469 = vweird.f32 %v3462
  %vm3470 = vmor %vm3468, %vm3469
  %v3471 = vsel %vm3470, %v3462, %v3467
  %v3472 = vmul.f32 %v3400, %v3441
  %v3473 = vmul.f32 %v3401, %v3451
  %v3474 = vmul.f32 %v3402, %v3461
  %v3475 = vmul.f32 %v3403, %v3471
  %v3476 = vperm.slane %v3405, 0
  %v3477 = vmul.f32 %v3472, %v3476
  %v3478 = vmul.f32 %v3473, %v3476
  %v3479 = vmul.f32 %v3474, %v3476
  %v3480 = vmul.f32 %v3475, %v3476
  %s3481 = scalar_lea.vmem %s5, 128
  %v3482 = vld [vmem:[%s3481 + $0x18] sm:$0xff]
  %v3483 = vld [vmem:[%s3481 + $0x38] sm:$0xf]
  %v3485 = vsel %vm111, %v3477, 0
  %v3488 = vsel %vm111, %v3478, 0
  %v3491 = vsel %vm111, %v3479, 0
  %v3494 = vsel %vm111, %v3480, 0
  %v3497 = vsel %vm202, %v3483, 0
  %3499 = vmatpush.msra.mxu0 0.0
  %3500 = vmatpush.msra.mxu0 0.0
  %3501 = vmatpush.msra.mxu0 0.0
  %3502 = vmatpush.msra.mxu0 0.0
  %3503 = vmatpush.msra.mxu0 0.0
  %3504 = vmatpush.msra.mxu0 0.0
  %3505 = vmatpush.msra.mxu0 0.0
  %3506 = vmatpush.msra.mxu0 0.0
  %3507 = vmatpush.msra.mxu0 0.0
  %3508 = vmatpush.msra.mxu0 0.0
  %3509 = vmatpush.msra.mxu0 0.0
  %3510 = vmatpush.msra.mxu0 0.0
  %3511 = vmatpush.msra.mxu0 0.0
  %3512 = vmatpush.msra.mxu0 0.0
  %3513 = vmatpush.msra.mxu0 %v3497
  %3514 = vmatpush.msra.mxu0 %v3482
  %3515 = vmatmul.f32.gmra.mxu0 %v3485
  %v3516 = vpop.f32.mrf.mxu0
  %v3517 = vadd.f32 0.0, %v3516
  %3518 = vmatmul.f32.gmra.mxu0 %v3488
  %v3519 = vpop.f32.mrf.mxu0
  %v3520 = vadd.f32 0.0, %v3519
  %3521 = vmatmul.f32.gmra.mxu0 %v3491
  %v3522 = vpop.f32.mrf.mxu0
  %v3523 = vadd.f32 0.0, %v3522
  %3524 = vmatmul.f32.gmra.mxu0 %v3494
  %v3525 = vpop.f32.mrf.mxu0
  %v3526 = vadd.f32 0.0, %v3525
  %3527 = vdwg.mxu0
  %v3528 = vmul.f32 %v3517, %v244
  %v3529 = vmul.f32 %v3520, %v246
  %v3530 = vmul.f32 %v3523, %v248
  %v3531 = vmul.f32 %v3526, %v250
  %v3532 = vmul.f32 %v3517, %v260
  %v3533 = vmul.f32 %v3520, %v262
  %v3534 = vmul.f32 %v3523, %v264
  %v3535 = vmul.f32 %v3526, %v266
  %3540 = vrot.lane.b32.xlu0 %v3532, 116
  %v3541 = vpop.permute.xlu0 %3540
  %3542 = vrot.lane.b32.xlu0 %v3533, 116
  %v3543 = vpop.permute.xlu0 %3542
  %3544 = vrot.lane.b32.xlu0 %v3534, 116
  %v3545 = vpop.permute.xlu0 %3544
  %3546 = vrot.lane.b32.xlu0 %v3535, 116
  %v3547 = vpop.permute.xlu0 %3546
  %v3552 = vadd.f32 %v3528, %v3541
  %v3553 = vadd.f32 %v3529, %v3543
  %v3554 = vadd.f32 %v3530, %v3545
  %v3555 = vadd.f32 %v3531, %v3547
  %v3556 = vmul.f32 %v3517, %v296
  %v3557 = vmul.f32 %v3520, %v298
  %v3558 = vmul.f32 %v3523, %v300
  %v3559 = vmul.f32 %v3526, %v302
  %3564 = vrot.lane.b32.xlu0 %v3556, 116
  %v3565 = vpop.permute.xlu0 %3564
  %3566 = vrot.lane.b32.xlu0 %v3557, 116
  %v3567 = vpop.permute.xlu0 %3566
  %3568 = vrot.lane.b32.xlu0 %v3558, 116
  %v3569 = vpop.permute.xlu0 %3568
  %3570 = vrot.lane.b32.xlu0 %v3559, 116
  %v3571 = vpop.permute.xlu0 %3570
  %v3576 = vadd.f32 %v3532, %v3565
  %v3577 = vadd.f32 %v3533, %v3567
  %v3578 = vadd.f32 %v3534, %v3569
  %v3579 = vadd.f32 %v3535, %v3571
  %v3580 = vmul.f32 %v3552, %v72
  %v3581 = vmul.f32 %v3553, %v72
  %v3582 = vmul.f32 %v3554, %v72
  %v3583 = vmul.f32 %v3555, %v72
  %3588 = vrot.lane.b32.xlu0 %v3576, 104
  %v3589 = vpop.permute.xlu0 %3588
  %3590 = vrot.lane.b32.xlu0 %v3577, 104
  %v3591 = vpop.permute.xlu0 %3590
  %3592 = vrot.lane.b32.xlu0 %v3578, 104
  %v3593 = vpop.permute.xlu0 %3592
  %3594 = vrot.lane.b32.xlu0 %v3579, 104
  %v3595 = vpop.permute.xlu0 %3594
  %v3597 = vsel %vm111, %v3580, 0
  %v3600 = vsel %vm111, %v3581, 0
  %v3603 = vsel %vm111, %v3582, 0
  %v3606 = vsel %vm111, %v3583, 0
  %v3608 = vsel %vm111, %v3589, 0
  %v3610 = vsel %vm111, %v3591, 0
  %v3612 = vsel %vm111, %v3593, 0
  %v3614 = vsel %vm111, %v3595, 0
  %3616 = vmatpush.xpose.msra.mxu0 0.0
  %3617 = vmatpush.xpose.msra.mxu0 0.0
  %3618 = vmatpush.xpose.msra.mxu0 0.0
  %3619 = vmatpush.xpose.msra.mxu0 0.0
  %3620 = vmatpush.xpose.msra.mxu0 0.0
  %3621 = vmatpush.xpose.msra.mxu0 0.0
  %3622 = vmatpush.xpose.msra.mxu0 0.0
  %3623 = vmatpush.xpose.msra.mxu0 0.0
  %3624 = vmatpush.xpose.msra.mxu0 0.0
  %3625 = vmatpush.xpose.msra.mxu0 0.0
  %3626 = vmatpush.xpose.msra.mxu0 0.0
  %3627 = vmatpush.xpose.msra.mxu0 0.0
  %3628 = vmatpush.xpose.msra.mxu0 %v3614
  %3629 = vmatpush.xpose.msra.mxu0 %v3612
  %3630 = vmatpush.xpose.msra.mxu0 %v3610
  %3631 = vmatpush.xpose.msra.mxu0 %v3608
  %3632 = vmatmul.f32.gmra.mxu0 %v3597
  %v3633 = vpop.f32.mrf.mxu0
  %v3634 = vadd.f32 0.0, %v3633
  %3635 = vmatmul.f32.gmra.mxu0 %v3600
  %v3636 = vpop.f32.mrf.mxu0
  %v3637 = vadd.f32 0.0, %v3636
  %3638 = vmatmul.f32.gmra.mxu0 %v3603
  %v3639 = vpop.f32.mrf.mxu0
  %v3640 = vadd.f32 0.0, %v3639
  %3641 = vmatmul.f32.gmra.mxu0 %v3606
  %v3642 = vpop.f32.mrf.mxu0
  %v3643 = vadd.f32 0.0, %v3642
  %3644 = vdwg.mxu0
  %v3645 = vmul.f32 %v3634, %v396
  %v3646 = vmul.f32 %v3637, %v397
  %v3647 = vmul.f32 %v3640, %v398
  %v3648 = vmul.f32 %v3643, %v399
  %v3649 = vand.u32 2147483647, %v3645
  %v3650 = vand.u32 2147483647, %v3646
  %v3651 = vand.u32 2147483647, %v3647
  %v3652 = vand.u32 2147483647, %v3648
  %v3653 = vsel %vm408, %v3649, 0.0
  %3654 = vadd.xlane.f32.xlu0 %v3653
  %v3655 = vpop.xlane.xlu0 %3654
  %v3656 = vsel %vm408, %v3650, 0.0
  %3657 = vadd.xlane.f32.xlu0 %v3656
  %v3658 = vpop.xlane.xlu0 %3657
  %v3659 = vsel %vm408, %v3651, 0.0
  %3660 = vadd.xlane.f32.xlu0 %v3659
  %v3661 = vpop.xlane.xlu0 %3660
  %v3662 = vsel %vm408, %v3652, 0.0
  %3663 = vadd.xlane.f32.xlu0 %v3662
  %v3664 = vpop.xlane.xlu0 %3663
  %v3665 = vmax.f32 %v3655, 1.0
  %v3666 = vmax.f32 %v3658, 1.0
  %v3667 = vmax.f32 %v3661, 1.0
  %v3668 = vmax.f32 %v3664, 1.0
  %v3669 = vmin.f32 %v3665, 50000.0
  %v3670 = vmin.f32 %v3666, 50000.0
  %v3671 = vmin.f32 %v3667, 50000.0
  %v3672 = vmin.f32 %v3668, 50000.0
  %v3673 = vrcp.pop %v3669
  %v3674 = vrcp.pop %v3670
  %v3675 = vrcp.pop %v3671
  %v3676 = vrcp.pop %v3672
  %v3677 = vmul.f32 %v3645, %v3673
  %v3678 = vmul.f32 %v3646, %v3674
  %v3679 = vmul.f32 %v3647, %v3675
  %v3680 = vmul.f32 %v3648, %v3676
  %v3681 = vmul.f32 %v3517, %v439
  %v3682 = vmul.f32 %v3520, %v439
  %v3683 = vmul.f32 %v3523, %v439
  %v3684 = vmul.f32 %v3526, %v439
  %v3685 = vmul.f32 %v3552, %v77
  %v3686 = vmul.f32 %v3553, %v77
  %v3687 = vmul.f32 %v3554, %v77
  %v3688 = vmul.f32 %v3555, %v77
  %v3690 = vsel %vm111, %v3685, 0
  %v3693 = vsel %vm111, %v3686, 0
  %v3696 = vsel %vm111, %v3687, 0
  %v3699 = vsel %vm111, %v3688, 0
  %3701 = vmatpush.xpose.msra.mxu0 0.0
  %3702 = vmatpush.xpose.msra.mxu0 0.0
  %3703 = vmatpush.xpose.msra.mxu0 0.0
  %3704 = vmatpush.xpose.msra.mxu0 0.0
  %3705 = vmatpush.xpose.msra.mxu0 0.0
  %3706 = vmatpush.xpose.msra.mxu0 0.0
  %3707 = vmatpush.xpose.msra.mxu0 0.0
  %3708 = vmatpush.xpose.msra.mxu0 0.0
  %3709 = vmatpush.xpose.msra.mxu0 0.0
  %3710 = vmatpush.xpose.msra.mxu0 0.0
  %3711 = vmatpush.xpose.msra.mxu0 0.0
  %3712 = vmatpush.xpose.msra.mxu0 0.0
  %3713 = vmatpush.xpose.msra.mxu0 %v3614
  %3714 = vmatpush.xpose.msra.mxu0 %v3612
  %3715 = vmatpush.xpose.msra.mxu0 %v3610
  %3716 = vmatpush.xpose.msra.mxu0 %v3608
  %3717 = vmatmul.f32.gmra.mxu0 %v3690
  %v3718 = vpop.f32.mrf.mxu0
  %v3719 = vadd.f32 0.0, %v3718
  %3720 = vmatmul.f32.gmra.mxu0 %v3693
  %v3721 = vpop.f32.mrf.mxu0
  %v3722 = vadd.f32 0.0, %v3721
  %3723 = vmatmul.f32.gmra.mxu0 %v3696
  %v3724 = vpop.f32.mrf.mxu0
  %v3725 = vadd.f32 0.0, %v3724
  %3726 = vmatmul.f32.gmra.mxu0 %v3699
  %v3727 = vpop.f32.mrf.mxu0
  %v3728 = vadd.f32 0.0, %v3727
  %3729 = vdwg.mxu0
  %v3730 = vmul.f32 %v3719, %v491
  %v3731 = vmul.f32 %v3722, %v492
  %v3732 = vmul.f32 %v3725, %v493
  %v3733 = vmul.f32 %v3728, %v494
  %v3734 = vand.u32 2147483647, %v3730
  %v3735 = vand.u32 2147483647, %v3731
  %v3736 = vand.u32 2147483647, %v3732
  %v3737 = vand.u32 2147483647, %v3733
  %v3738 = vsel %vm408, %v3734, 0.0
  %3739 = vadd.xlane.f32.xlu0 %v3738
  %v3740 = vpop.xlane.xlu0 %3739
  %v3741 = vsel %vm408, %v3735, 0.0
  %3742 = vadd.xlane.f32.xlu0 %v3741
  %v3743 = vpop.xlane.xlu0 %3742
  %v3744 = vsel %vm408, %v3736, 0.0
  %3745 = vadd.xlane.f32.xlu0 %v3744
  %v3746 = vpop.xlane.xlu0 %3745
  %v3747 = vsel %vm408, %v3737, 0.0
  %3748 = vadd.xlane.f32.xlu0 %v3747
  %v3749 = vpop.xlane.xlu0 %3748
  %v3750 = vmax.f32 %v3740, 1.0
  %v3751 = vmax.f32 %v3743, 1.0
  %v3752 = vmax.f32 %v3746, 1.0
  %v3753 = vmax.f32 %v3749, 1.0
  %v3754 = vmin.f32 %v3750, 50000.0
  %v3755 = vmin.f32 %v3751, 50000.0
  %v3756 = vmin.f32 %v3752, 50000.0
  %v3757 = vmin.f32 %v3753, 50000.0
  %v3758 = vrcp.pop %v3754
  %v3759 = vrcp.pop %v3755
  %v3760 = vrcp.pop %v3756
  %v3761 = vrcp.pop %v3757
  %v3762 = vmul.f32 %v3730, %v3758
  %v3763 = vmul.f32 %v3731, %v3759
  %v3764 = vmul.f32 %v3732, %v3760
  %v3765 = vmul.f32 %v3733, %v3761
  %v3766 = vmul.f32 %v3517, %v533
  %v3767 = vmul.f32 %v3520, %v533
  %v3768 = vmul.f32 %v3523, %v533
  %v3769 = vmul.f32 %v3526, %v533
  %3774 = vrot.lane.b32.xlu0 %v3766, 80
  %v3775 = vpop.permute.xlu0 %3774
  %3776 = vrot.lane.b32.xlu0 %v3767, 80
  %v3777 = vpop.permute.xlu0 %3776
  %3778 = vrot.lane.b32.xlu0 %v3768, 80
  %v3779 = vpop.permute.xlu0 %3778
  %3780 = vrot.lane.b32.xlu0 %v3769, 80
  %v3781 = vpop.permute.xlu0 %3780
  %v3787 = vsel %vm408, %v3762, 0
  %v3790 = vsel %vm408, %v3763, 0
  %v3793 = vsel %vm408, %v3764, 0
  %v3796 = vsel %vm408, %v3765, 0
  %3798 = vmatpush.msra.mxu0 0.0
  %3799 = vmatpush.msra.mxu0 0.0
  %3800 = vmatpush.msra.mxu0 0.0
  %3801 = vmatpush.msra.mxu0 0.0
  %3802 = vmatpush.msra.mxu0 0.0
  %3803 = vmatpush.msra.mxu0 0.0
  %3804 = vmatpush.msra.mxu0 0.0
  %3805 = vmatpush.msra.mxu0 0.0
  %3806 = vmatpush.msra.mxu0 0.0
  %3807 = vmatpush.msra.mxu0 0.0
  %3808 = vmatpush.msra.mxu0 0.0
  %3809 = vmatpush.msra.mxu0 0.0
  %3810 = vmatpush.msra.mxu0 %v3781
  %3811 = vmatpush.msra.mxu0 %v3779
  %3812 = vmatpush.msra.mxu0 %v3777
  %3813 = vmatpush.msra.mxu0 %v3775
  %3814 = vmatmul.f32.gmra.mxu0 %v3787
  %v3815 = vpop.f32.mrf.mxu0
  %v3816 = vadd.f32 0.0, %v3815
  %3817 = vmatmul.f32.gmra.mxu0 %v3790
  %v3818 = vpop.f32.mrf.mxu0
  %v3819 = vadd.f32 0.0, %v3818
  %3820 = vmatmul.f32.gmra.mxu0 %v3793
  %v3821 = vpop.f32.mrf.mxu0
  %v3822 = vadd.f32 0.0, %v3821
  %3823 = vmatmul.f32.gmra.mxu0 %v3796
  %v3824 = vpop.f32.mrf.mxu0
  %v3825 = vadd.f32 0.0, %v3824
  %3826 = vdwg.mxu0
  %3831 = vrot.lane.b32.xlu0 %v3681, 80
  %v3832 = vpop.permute.xlu0 %3831
  %3833 = vrot.lane.b32.xlu0 %v3682, 80
  %v3834 = vpop.permute.xlu0 %3833
  %3835 = vrot.lane.b32.xlu0 %v3683, 80
  %v3836 = vpop.permute.xlu0 %3835
  %3837 = vrot.lane.b32.xlu0 %v3684, 80
  %v3838 = vpop.permute.xlu0 %3837
  %v3844 = vsel %vm408, %v3677, 0
  %v3847 = vsel %vm408, %v3678, 0
  %v3850 = vsel %vm408, %v3679, 0
  %v3853 = vsel %vm408, %v3680, 0
  %3855 = vmatpush.msra.mxu0 0.0
  %3856 = vmatpush.msra.mxu0 0.0
  %3857 = vmatpush.msra.mxu0 0.0
  %3858 = vmatpush.msra.mxu0 0.0
  %3859 = vmatpush.msra.mxu0 0.0
  %3860 = vmatpush.msra.mxu0 0.0
  %3861 = vmatpush.msra.mxu0 0.0
  %3862 = vmatpush.msra.mxu0 0.0
  %3863 = vmatpush.msra.mxu0 0.0
  %3864 = vmatpush.msra.mxu0 0.0
  %3865 = vmatpush.msra.mxu0 0.0
  %3866 = vmatpush.msra.mxu0 0.0
  %3867 = vmatpush.msra.mxu0 %v3838
  %3868 = vmatpush.msra.mxu0 %v3836
  %3869 = vmatpush.msra.mxu0 %v3834
  %3870 = vmatpush.msra.mxu0 %v3832
  %3871 = vmatmul.f32.gmra.mxu0 %v3844
  %v3872 = vpop.f32.mrf.mxu0
  %v3873 = vadd.f32 %v3816, %v3872
  %3874 = vmatmul.f32.gmra.mxu0 %v3847
  %v3875 = vpop.f32.mrf.mxu0
  %v3876 = vadd.f32 %v3819, %v3875
  %3877 = vmatmul.f32.gmra.mxu0 %v3850
  %v3878 = vpop.f32.mrf.mxu0
  %v3879 = vadd.f32 %v3822, %v3878
  %3880 = vmatmul.f32.gmra.mxu0 %v3853
  %v3881 = vpop.f32.mrf.mxu0
  %v3882 = vadd.f32 %v3825, %v3881
  %3883 = vdwg.mxu0
  %v3884 = vmul.f32 %v3552, %v82
  %v3885 = vmul.f32 %v3553, %v82
  %v3886 = vmul.f32 %v3554, %v82
  %v3887 = vmul.f32 %v3555, %v82
  %v3889 = vsel %vm111, %v3884, 0
  %v3892 = vsel %vm111, %v3885, 0
  %v3895 = vsel %vm111, %v3886, 0
  %v3898 = vsel %vm111, %v3887, 0
  %3900 = vmatpush.xpose.msra.mxu0 0.0
  %3901 = vmatpush.xpose.msra.mxu0 0.0
  %3902 = vmatpush.xpose.msra.mxu0 0.0
  %3903 = vmatpush.xpose.msra.mxu0 0.0
  %3904 = vmatpush.xpose.msra.mxu0 0.0
  %3905 = vmatpush.xpose.msra.mxu0 0.0
  %3906 = vmatpush.xpose.msra.mxu0 0.0
  %3907 = vmatpush.xpose.msra.mxu0 0.0
  %3908 = vmatpush.xpose.msra.mxu0 0.0
  %3909 = vmatpush.xpose.msra.mxu0 0.0
  %3910 = vmatpush.xpose.msra.mxu0 0.0
  %3911 = vmatpush.xpose.msra.mxu0 0.0
  %3912 = vmatpush.xpose.msra.mxu0 %v3614
  %3913 = vmatpush.xpose.msra.mxu0 %v3612
  %3914 = vmatpush.xpose.msra.mxu0 %v3610
  %3915 = vmatpush.xpose.msra.mxu0 %v3608
  %3916 = vmatmul.f32.gmra.mxu0 %v3889
  %v3917 = vpop.f32.mrf.mxu0
  %v3918 = vadd.f32 0.0, %v3917
  %3919 = vmatmul.f32.gmra.mxu0 %v3892
  %v3920 = vpop.f32.mrf.mxu0
  %v3921 = vadd.f32 0.0, %v3920
  %3922 = vmatmul.f32.gmra.mxu0 %v3895
  %v3923 = vpop.f32.mrf.mxu0
  %v3924 = vadd.f32 0.0, %v3923
  %3925 = vmatmul.f32.gmra.mxu0 %v3898
  %v3926 = vpop.f32.mrf.mxu0
  %v3927 = vadd.f32 0.0, %v3926
  %3928 = vdwg.mxu0
  %v3929 = vmul.f32 %v3918, %v699
  %v3930 = vmul.f32 %v3921, %v700
  %v3931 = vmul.f32 %v3924, %v701
  %v3932 = vmul.f32 %v3927, %v702
  %v3933 = vand.u32 2147483647, %v3929
  %v3934 = vand.u32 2147483647, %v3930
  %v3935 = vand.u32 2147483647, %v3931
  %v3936 = vand.u32 2147483647, %v3932
  %v3937 = vsel %vm408, %v3933, 0.0
  %3938 = vadd.xlane.f32.xlu0 %v3937
  %v3939 = vpop.xlane.xlu0 %3938
  %v3940 = vsel %vm408, %v3934, 0.0
  %3941 = vadd.xlane.f32.xlu0 %v3940
  %v3942 = vpop.xlane.xlu0 %3941
  %v3943 = vsel %vm408, %v3935, 0.0
  %3944 = vadd.xlane.f32.xlu0 %v3943
  %v3945 = vpop.xlane.xlu0 %3944
  %v3946 = vsel %vm408, %v3936, 0.0
  %3947 = vadd.xlane.f32.xlu0 %v3946
  %v3948 = vpop.xlane.xlu0 %3947
  %v3949 = vmax.f32 %v3939, 1.0
  %v3950 = vmax.f32 %v3942, 1.0
  %v3951 = vmax.f32 %v3945, 1.0
  %v3952 = vmax.f32 %v3948, 1.0
  %v3953 = vmin.f32 %v3949, 50000.0
  %v3954 = vmin.f32 %v3950, 50000.0
  %v3955 = vmin.f32 %v3951, 50000.0
  %v3956 = vmin.f32 %v3952, 50000.0
  %v3957 = vrcp.pop %v3953
  %v3958 = vrcp.pop %v3954
  %v3959 = vrcp.pop %v3955
  %v3960 = vrcp.pop %v3956
  %v3961 = vmul.f32 %v3929, %v3957
  %v3962 = vmul.f32 %v3930, %v3958
  %v3963 = vmul.f32 %v3931, %v3959
  %v3964 = vmul.f32 %v3932, %v3960
  %v3965 = vmul.f32 %v3517, %v741
  %v3966 = vmul.f32 %v3520, %v741
  %v3967 = vmul.f32 %v3523, %v741
  %v3968 = vmul.f32 %v3526, %v741
  %3973 = vrot.lane.b32.xlu0 %v3965, 80
  %v3974 = vpop.permute.xlu0 %3973
  %3975 = vrot.lane.b32.xlu0 %v3966, 80
  %v3976 = vpop.permute.xlu0 %3975
  %3977 = vrot.lane.b32.xlu0 %v3967, 80
  %v3978 = vpop.permute.xlu0 %3977
  %3979 = vrot.lane.b32.xlu0 %v3968, 80
  %v3980 = vpop.permute.xlu0 %3979
  %v3986 = vsel %vm408, %v3961, 0
  %v3989 = vsel %vm408, %v3962, 0
  %v3992 = vsel %vm408, %v3963, 0
  %v3995 = vsel %vm408, %v3964, 0
  %3997 = vmatpush.msra.mxu0 0.0
  %3998 = vmatpush.msra.mxu0 0.0
  %3999 = vmatpush.msra.mxu0 0.0
  %4000 = vmatpush.msra.mxu0 0.0
  %4001 = vmatpush.msra.mxu0 0.0
  %4002 = vmatpush.msra.mxu0 0.0
  %4003 = vmatpush.msra.mxu0 0.0
  %4004 = vmatpush.msra.mxu0 0.0
  %4005 = vmatpush.msra.mxu0 0.0
  %4006 = vmatpush.msra.mxu0 0.0
  %4007 = vmatpush.msra.mxu0 0.0
  %4008 = vmatpush.msra.mxu0 0.0
  %4009 = vmatpush.msra.mxu0 %v3980
  %4010 = vmatpush.msra.mxu0 %v3978
  %4011 = vmatpush.msra.mxu0 %v3976
  %4012 = vmatpush.msra.mxu0 %v3974
  %4013 = vmatmul.f32.gmra.mxu0 %v3986
  %v4014 = vpop.f32.mrf.mxu0
  %v4015 = vadd.f32 0.0, %v4014
  %4016 = vmatmul.f32.gmra.mxu0 %v3989
  %v4017 = vpop.f32.mrf.mxu0
  %v4018 = vadd.f32 0.0, %v4017
  %4019 = vmatmul.f32.gmra.mxu0 %v3992
  %v4020 = vpop.f32.mrf.mxu0
  %v4021 = vadd.f32 0.0, %v4020
  %4022 = vmatmul.f32.gmra.mxu0 %v3995
  %v4023 = vpop.f32.mrf.mxu0
  %v4024 = vadd.f32 0.0, %v4023
  %4025 = vdwg.mxu0
  %v4026 = vadd.f32 %v3873, %v4015
  %v4027 = vadd.f32 %v3876, %v4018
  %v4028 = vadd.f32 %v3879, %v4021
  %v4029 = vadd.f32 %v3882, %v4024
  %v4030 = vmul.f32 %v4026, %v4026
  %v4031 = vmul.f32 %v4027, %v4027
  %v4032 = vmul.f32 %v4028, %v4028
  %v4033 = vmul.f32 %v4029, %v4029
  %v4034 = vmul.f32 %v4030, %v85
  %v4035 = vmul.f32 %v4031, %v85
  %v4036 = vmul.f32 %v4032, %v85
  %v4037 = vmul.f32 %v4033, %v85
  %v4038 = vsel %vm816, %v4034, 0.0
  %4039 = vadd.xlane.f32.xlu0 %v4038
  %v4040 = vpop.xlane.xlu0 %4039
  %v4041 = vsel %vm816, %v4035, 0.0
  %4042 = vadd.xlane.f32.xlu0 %v4041
  %v4043 = vpop.xlane.xlu0 %4042
  %v4044 = vsel %vm816, %v4036, 0.0
  %4045 = vadd.xlane.f32.xlu0 %v4044
  %v4046 = vpop.xlane.xlu0 %4045
  %v4047 = vsel %vm816, %v4037, 0.0
  %4048 = vadd.xlane.f32.xlu0 %v4047
  %v4049 = vpop.xlane.xlu0 %4048
  %v4050 = vmul.f32 %v4040, 0.125
  %v4051 = vmul.f32 %v4043, 0.125
  %v4052 = vmul.f32 %v4046, 0.125
  %v4053 = vmul.f32 %v4049, 0.125
  %v4054 = vadd.f32 %v4050, 1e-05
  %v4055 = vadd.f32 %v4051, 1e-05
  %v4056 = vadd.f32 %v4052, 1e-05
  %v4057 = vadd.f32 %v4053, 1e-05
  %v4058 = vrsqrt.pop %v4054
  %v4059 = vmul.f32 %v4058, %v4054
  %v4060 = vmul.f32 %v4059, %v4058
  %v4061 = vmul.f32 0.5, %v4060
  %v4062 = vsub.f32 1.5, %v4061
  %v4063 = vmul.f32 %v4058, %v4062
  %vm4064 = vweird.f32 %v4054
  %vm4065 = vweird.f32 %v4058
  %vm4066 = vmor %vm4064, %vm4065
  %v4067 = vsel %vm4066, %v4058, %v4063
  %v4068 = vrsqrt.pop %v4055
  %v4069 = vmul.f32 %v4068, %v4055
  %v4070 = vmul.f32 %v4069, %v4068
  %v4071 = vmul.f32 0.5, %v4070
  %v4072 = vsub.f32 1.5, %v4071
  %v4073 = vmul.f32 %v4068, %v4072
  %vm4074 = vweird.f32 %v4055
  %vm4075 = vweird.f32 %v4068
  %vm4076 = vmor %vm4074, %vm4075
  %v4077 = vsel %vm4076, %v4068, %v4073
  %v4078 = vrsqrt.pop %v4056
  %v4079 = vmul.f32 %v4078, %v4056
  %v4080 = vmul.f32 %v4079, %v4078
  %v4081 = vmul.f32 0.5, %v4080
  %v4082 = vsub.f32 1.5, %v4081
  %v4083 = vmul.f32 %v4078, %v4082
  %vm4084 = vweird.f32 %v4056
  %vm4085 = vweird.f32 %v4078
  %vm4086 = vmor %vm4084, %vm4085
  %v4087 = vsel %vm4086, %v4078, %v4083
  %v4088 = vrsqrt.pop %v4057
  %v4089 = vmul.f32 %v4088, %v4057
  %v4090 = vmul.f32 %v4089, %v4088
  %v4091 = vmul.f32 0.5, %v4090
  %v4092 = vsub.f32 1.5, %v4091
  %v4093 = vmul.f32 %v4088, %v4092
  %vm4094 = vweird.f32 %v4057
  %vm4095 = vweird.f32 %v4088
  %vm4096 = vmor %vm4094, %vm4095
  %v4097 = vsel %vm4096, %v4088, %v4093
  %v4098 = vmul.f32 %v85, %v4067
  %v4099 = vmul.f32 %v85, %v4077
  %v4100 = vmul.f32 %v85, %v4087
  %v4101 = vmul.f32 %v85, %v4097
  %v4102 = vadd.f32 %v4098, 0.0
  %v4103 = vadd.f32 %v4099, 0.0
  %v4104 = vadd.f32 %v4100, 0.0
  %v4105 = vadd.f32 %v4101, 0.0
  %v4106 = vmul.f32 %v4030, %v89
  %v4107 = vmul.f32 %v4031, %v89
  %v4108 = vmul.f32 %v4032, %v89
  %v4109 = vmul.f32 %v4033, %v89
  %v4110 = vsel %vm816, %v4106, 0.0
  %4111 = vadd.xlane.f32.xlu0 %v4110
  %v4112 = vpop.xlane.xlu0 %4111
  %v4113 = vsel %vm816, %v4107, 0.0
  %4114 = vadd.xlane.f32.xlu0 %v4113
  %v4115 = vpop.xlane.xlu0 %4114
  %v4116 = vsel %vm816, %v4108, 0.0
  %4117 = vadd.xlane.f32.xlu0 %v4116
  %v4118 = vpop.xlane.xlu0 %4117
  %v4119 = vsel %vm816, %v4109, 0.0
  %4120 = vadd.xlane.f32.xlu0 %v4119
  %v4121 = vpop.xlane.xlu0 %4120
  %v4122 = vmul.f32 %v4112, 0.125
  %v4123 = vmul.f32 %v4115, 0.125
  %v4124 = vmul.f32 %v4118, 0.125
  %v4125 = vmul.f32 %v4121, 0.125
  %v4126 = vadd.f32 %v4122, 1e-05
  %v4127 = vadd.f32 %v4123, 1e-05
  %v4128 = vadd.f32 %v4124, 1e-05
  %v4129 = vadd.f32 %v4125, 1e-05
  %v4130 = vrsqrt.pop %v4126
  %v4131 = vmul.f32 %v4130, %v4126
  %v4132 = vmul.f32 %v4131, %v4130
  %v4133 = vmul.f32 0.5, %v4132
  %v4134 = vsub.f32 1.5, %v4133
  %v4135 = vmul.f32 %v4130, %v4134
  %vm4136 = vweird.f32 %v4126
  %vm4137 = vweird.f32 %v4130
  %vm4138 = vmor %vm4136, %vm4137
  %v4139 = vsel %vm4138, %v4130, %v4135
  %v4140 = vrsqrt.pop %v4127
  %v4141 = vmul.f32 %v4140, %v4127
  %v4142 = vmul.f32 %v4141, %v4140
  %v4143 = vmul.f32 0.5, %v4142
  %v4144 = vsub.f32 1.5, %v4143
  %v4145 = vmul.f32 %v4140, %v4144
  %vm4146 = vweird.f32 %v4127
  %vm4147 = vweird.f32 %v4140
  %vm4148 = vmor %vm4146, %vm4147
  %v4149 = vsel %vm4148, %v4140, %v4145
  %v4150 = vrsqrt.pop %v4128
  %v4151 = vmul.f32 %v4150, %v4128
  %v4152 = vmul.f32 %v4151, %v4150
  %v4153 = vmul.f32 0.5, %v4152
  %v4154 = vsub.f32 1.5, %v4153
  %v4155 = vmul.f32 %v4150, %v4154
  %vm4156 = vweird.f32 %v4128
  %vm4157 = vweird.f32 %v4150
  %vm4158 = vmor %vm4156, %vm4157
  %v4159 = vsel %vm4158, %v4150, %v4155
  %v4160 = vrsqrt.pop %v4129
  %v4161 = vmul.f32 %v4160, %v4129
  %v4162 = vmul.f32 %v4161, %v4160
  %v4163 = vmul.f32 0.5, %v4162
  %v4164 = vsub.f32 1.5, %v4163
  %v4165 = vmul.f32 %v4160, %v4164
  %vm4166 = vweird.f32 %v4129
  %vm4167 = vweird.f32 %v4160
  %vm4168 = vmor %vm4166, %vm4167
  %v4169 = vsel %vm4168, %v4160, %v4165
  %v4170 = vmul.f32 %v89, %v4139
  %v4171 = vmul.f32 %v89, %v4149
  %v4172 = vmul.f32 %v89, %v4159
  %v4173 = vmul.f32 %v89, %v4169
  %v4174 = vadd.f32 %v4102, %v4170
  %v4175 = vadd.f32 %v4103, %v4171
  %v4176 = vadd.f32 %v4104, %v4172
  %v4177 = vadd.f32 %v4105, %v4173
  %v4178 = vmul.f32 %v4030, %v94
  %v4179 = vmul.f32 %v4031, %v94
  %v4180 = vmul.f32 %v4032, %v94
  %v4181 = vmul.f32 %v4033, %v94
  %v4182 = vsel %vm816, %v4178, 0.0
  %4183 = vadd.xlane.f32.xlu0 %v4182
  %v4184 = vpop.xlane.xlu0 %4183
  %v4185 = vsel %vm816, %v4179, 0.0
  %4186 = vadd.xlane.f32.xlu0 %v4185
  %v4187 = vpop.xlane.xlu0 %4186
  %v4188 = vsel %vm816, %v4180, 0.0
  %4189 = vadd.xlane.f32.xlu0 %v4188
  %v4190 = vpop.xlane.xlu0 %4189
  %v4191 = vsel %vm816, %v4181, 0.0
  %4192 = vadd.xlane.f32.xlu0 %v4191
  %v4193 = vpop.xlane.xlu0 %4192
  %v4194 = vmul.f32 %v4184, 0.125
  %v4195 = vmul.f32 %v4187, 0.125
  %v4196 = vmul.f32 %v4190, 0.125
  %v4197 = vmul.f32 %v4193, 0.125
  %v4198 = vadd.f32 %v4194, 1e-05
  %v4199 = vadd.f32 %v4195, 1e-05
  %v4200 = vadd.f32 %v4196, 1e-05
  %v4201 = vadd.f32 %v4197, 1e-05
  %v4202 = vrsqrt.pop %v4198
  %v4203 = vmul.f32 %v4202, %v4198
  %v4204 = vmul.f32 %v4203, %v4202
  %v4205 = vmul.f32 0.5, %v4204
  %v4206 = vsub.f32 1.5, %v4205
  %v4207 = vmul.f32 %v4202, %v4206
  %vm4208 = vweird.f32 %v4198
  %vm4209 = vweird.f32 %v4202
  %vm4210 = vmor %vm4208, %vm4209
  %v4211 = vsel %vm4210, %v4202, %v4207
  %v4212 = vrsqrt.pop %v4199
  %v4213 = vmul.f32 %v4212, %v4199
  %v4214 = vmul.f32 %v4213, %v4212
  %v4215 = vmul.f32 0.5, %v4214
  %v4216 = vsub.f32 1.5, %v4215
  %v4217 = vmul.f32 %v4212, %v4216
  %vm4218 = vweird.f32 %v4199
  %vm4219 = vweird.f32 %v4212
  %vm4220 = vmor %vm4218, %vm4219
  %v4221 = vsel %vm4220, %v4212, %v4217
  %v4222 = vrsqrt.pop %v4200
  %v4223 = vmul.f32 %v4222, %v4200
  %v4224 = vmul.f32 %v4223, %v4222
  %v4225 = vmul.f32 0.5, %v4224
  %v4226 = vsub.f32 1.5, %v4225
  %v4227 = vmul.f32 %v4222, %v4226
  %vm4228 = vweird.f32 %v4200
  %vm4229 = vweird.f32 %v4222
  %vm4230 = vmor %vm4228, %vm4229
  %v4231 = vsel %vm4230, %v4222, %v4227
  %v4232 = vrsqrt.pop %v4201
  %v4233 = vmul.f32 %v4232, %v4201
  %v4234 = vmul.f32 %v4233, %v4232
  %v4235 = vmul.f32 0.5, %v4234
  %v4236 = vsub.f32 1.5, %v4235
  %v4237 = vmul.f32 %v4232, %v4236
  %vm4238 = vweird.f32 %v4201
  %vm4239 = vweird.f32 %v4232
  %vm4240 = vmor %vm4238, %vm4239
  %v4241 = vsel %vm4240, %v4232, %v4237
  %v4242 = vmul.f32 %v94, %v4211
  %v4243 = vmul.f32 %v94, %v4221
  %v4244 = vmul.f32 %v94, %v4231
  %v4245 = vmul.f32 %v94, %v4241
  %v4246 = vadd.f32 %v4174, %v4242
  %v4247 = vadd.f32 %v4175, %v4243
  %v4248 = vadd.f32 %v4176, %v4244
  %v4249 = vadd.f32 %v4177, %v4245
  %v4250 = vxor.u32 %v3517, 2147483648
  %v4251 = vxor.u32 %v3520, 2147483648
  %v4252 = vxor.u32 %v3523, 2147483648
  %v4253 = vxor.u32 %v3526, 2147483648
  %v4254 = vmul.f32 %v4250, 1.442695
  %v4255 = vpow.pop %v4254
  %v4256 = vmul.f32 %v4251, 1.442695
  %v4257 = vpow.pop %v4256
  %v4258 = vmul.f32 %v4252, 1.442695
  %v4259 = vpow.pop %v4258
  %v4260 = vmul.f32 %v4253, 1.442695
  %v4261 = vpow.pop %v4260
  %v4262 = vadd.f32 %v4255, 1.0
  %v4263 = vadd.f32 %v4257, 1.0
  %v4264 = vadd.f32 %v4259, 1.0
  %v4265 = vadd.f32 %v4261, 1.0
  %v4266 = vrcp.pop %v4262
  %v4267 = vmul.f32 %v4262, %v4266
  %v4268 = vsub.f32 1.0, %v4267
  %v4269 = vmul.f32 %v4266, %v4268
  %v4270 = vadd.f32 %v4266, %v4269
  %vm4271 = vweird.f32 %v4262
  %vm4272 = vweird.f32 %v4266
  %vm4273 = vmor %vm4271, %vm4272
  %v4274 = vsel %vm4273, %v4266, %v4270
  %v4275 = vand.u32 2147483647, %v4262
  %vm4276 = vcmp.eq.f32.partialorder %v4275, 8.507059e+37
  %v4277 = vand.u32 %v4262, 2147483648
  %v4278 = vor.u32 1.1754944e-38, %v4277
  %v4279 = vsel %vm4276, %v4278, %v4274
  %v4280 = vmul.f32 1.0, %v4279
  %v4281 = vrcp.pop %v4263
  %v4282 = vmul.f32 %v4263, %v4281
  %v4283 = vsub.f32 1.0, %v4282
  %v4284 = vmul.f32 %v4281, %v4283
  %v4285 = vadd.f32 %v4281, %v4284
  %vm4286 = vweird.f32 %v4263
  %vm4287 = vweird.f32 %v4281
  %vm4288 = vmor %vm4286, %vm4287
  %v4289 = vsel %vm4288, %v4281, %v4285
  %v4290 = vand.u32 2147483647, %v4263
  %vm4291 = vcmp.eq.f32.partialorder %v4290, 8.507059e+37
  %v4292 = vand.u32 %v4263, 2147483648
  %v4293 = vor.u32 1.1754944e-38, %v4292
  %v4294 = vsel %vm4291, %v4293, %v4289
  %v4295 = vmul.f32 1.0, %v4294
  %v4296 = vrcp.pop %v4264
  %v4297 = vmul.f32 %v4264, %v4296
  %v4298 = vsub.f32 1.0, %v4297
  %v4299 = vmul.f32 %v4296, %v4298
  %v4300 = vadd.f32 %v4296, %v4299
  %vm4301 = vweird.f32 %v4264
  %vm4302 = vweird.f32 %v4296
  %vm4303 = vmor %vm4301, %vm4302
  %v4304 = vsel %vm4303, %v4296, %v4300
  %v4305 = vand.u32 2147483647, %v4264
  %vm4306 = vcmp.eq.f32.partialorder %v4305, 8.507059e+37
  %v4307 = vand.u32 %v4264, 2147483648
  %v4308 = vor.u32 1.1754944e-38, %v4307
  %v4309 = vsel %vm4306, %v4308, %v4304
  %v4310 = vmul.f32 1.0, %v4309
  %v4311 = vrcp.pop %v4265
  %v4312 = vmul.f32 %v4265, %v4311
  %v4313 = vsub.f32 1.0, %v4312
  %v4314 = vmul.f32 %v4311, %v4313
  %v4315 = vadd.f32 %v4311, %v4314
  %vm4316 = vweird.f32 %v4265
  %vm4317 = vweird.f32 %v4311
  %vm4318 = vmor %vm4316, %vm4317
  %v4319 = vsel %vm4318, %v4311, %v4315
  %v4320 = vand.u32 2147483647, %v4265
  %vm4321 = vcmp.eq.f32.partialorder %v4320, 8.507059e+37
  %v4322 = vand.u32 %v4265, 2147483648
  %v4323 = vor.u32 1.1754944e-38, %v4322
  %v4324 = vsel %vm4321, %v4323, %v4319
  %v4325 = vmul.f32 1.0, %v4324
  %v4326 = vmul.f32 %v3517, %v4280
  %v4327 = vmul.f32 %v3520, %v4295
  %v4328 = vmul.f32 %v3523, %v4310
  %v4329 = vmul.f32 %v3526, %v4325
  %v4330 = vmul.f32 %v4026, %v4246
  %v4331 = vmul.f32 %v4027, %v4247
  %v4332 = vmul.f32 %v4028, %v4248
  %v4333 = vmul.f32 %v4029, %v4249
  %4338 = vrot.lane.b32.xlu0 %v4330, 72
  %v4339 = vpop.permute.xlu0 %4338
  %4340 = vrot.lane.b32.xlu0 %v4331, 72
  %v4341 = vpop.permute.xlu0 %4340
  %4342 = vrot.lane.b32.xlu0 %v4332, 72
  %v4343 = vpop.permute.xlu0 %4342
  %4344 = vrot.lane.b32.xlu0 %v4333, 72
  %v4345 = vpop.permute.xlu0 %4344
  %v4350 = vmul.f32 %v4326, %v4339
  %v4351 = vmul.f32 %v4327, %v4341
  %v4352 = vmul.f32 %v4328, %v4343
  %v4353 = vmul.f32 %v4329, %v4345
  %s4354 = scalar_lea.vmem %s6, 816
  %v4355 = vld [vmem:[%s4354] sm:$0xff]
  %v4356 = vld [vmem:[%s4354 + $0x8] sm:$0xff]
  %v4357 = vld [vmem:[%s4354 + $0x10] sm:$0xff]
  %4362 = vrot.lane.b32.xlu0 %v4350, 56
  %v4363 = vpop.permute.xlu0 %4362
  %4364 = vrot.lane.b32.xlu0 %v4351, 56
  %v4365 = vpop.permute.xlu0 %4364
  %4366 = vrot.lane.b32.xlu0 %v4352, 56
  %v4367 = vpop.permute.xlu0 %4366
  %4368 = vrot.lane.b32.xlu0 %v4353, 56
  %v4369 = vpop.permute.xlu0 %4368
  %v4370 = vsel %vm816, %v4363, 0
  %v4372 = vsel %vm816, %v4365, 0
  %v4374 = vsel %vm816, %v4367, 0
  %v4376 = vsel %vm816, %v4369, 0
  %4378 = vmatpush.msra.mxu0 0.0
  %4379 = vmatpush.msra.mxu0 0.0
  %4380 = vmatpush.msra.mxu0 0.0
  %4381 = vmatpush.msra.mxu0 0.0
  %4382 = vmatpush.msra.mxu0 0.0
  %4383 = vmatpush.msra.mxu0 0.0
  %4384 = vmatpush.msra.mxu0 0.0
  %4385 = vmatpush.msra.mxu0 0.0
  %4386 = vmatpush.msra.mxu0 0.0
  %4387 = vmatpush.msra.mxu0 0.0
  %4388 = vmatpush.msra.mxu0 0.0
  %4389 = vmatpush.msra.mxu0 0.0
  %4390 = vmatpush.msra.mxu0 0.0
  %4391 = vmatpush.msra.mxu0 %v4357
  %4392 = vmatpush.msra.mxu0 %v4356
  %4393 = vmatpush.msra.mxu0 %v4355
  %4394 = vmatmul.f32.gmra.mxu0 %v4370
  %v4395 = vpop.f32.mrf.mxu0
  %v4396 = vadd.f32 0.0, %v4395
  %4397 = vmatmul.f32.gmra.mxu0 %v4372
  %v4398 = vpop.f32.mrf.mxu0
  %v4399 = vadd.f32 0.0, %v4398
  %4400 = vmatmul.f32.gmra.mxu0 %v4374
  %v4401 = vpop.f32.mrf.mxu0
  %v4402 = vadd.f32 0.0, %v4401
  %4403 = vmatmul.f32.gmra.mxu0 %v4376
  %v4404 = vpop.f32.mrf.mxu0
  %v4405 = vadd.f32 0.0, %v4404
  %4406 = vdwg.mxu0
  %v4407 = vadd.f32 %v3400, %v4396
  %v4408 = vadd.f32 %v3401, %v4399
  %v4409 = vadd.f32 %v3402, %v4402
  %v4410 = vadd.f32 %v3403, %v4405
  %v4411 = vmul.f32 %v4407, %v4407
  %v4412 = vmul.f32 %v4408, %v4408
  %v4413 = vmul.f32 %v4409, %v4409
  %v4414 = vmul.f32 %v4410, %v4410
  %v4415 = vsel %vm111, %v4411, 0.0
  %4416 = vadd.xlane.f32.xlu0 %v4415
  %v4417 = vpop.xlane.xlu0 %4416
  %v4418 = vsel %vm111, %v4412, 0.0
  %4419 = vadd.xlane.f32.xlu0 %v4418
  %v4420 = vpop.xlane.xlu0 %4419
  %v4421 = vsel %vm111, %v4413, 0.0
  %4422 = vadd.xlane.f32.xlu0 %v4421
  %v4423 = vpop.xlane.xlu0 %4422
  %v4424 = vsel %vm111, %v4414, 0.0
  %4425 = vadd.xlane.f32.xlu0 %v4424
  %v4426 = vpop.xlane.xlu0 %4425
  %v4427 = vmul.f32 %v4417, %v130
  %v4428 = vmul.f32 %v4420, %v130
  %v4429 = vmul.f32 %v4423, %v130
  %v4430 = vmul.f32 %v4426, %v130
  %v4431 = vadd.f32 %v4427, 1e-05
  %v4432 = vadd.f32 %v4428, 1e-05
  %v4433 = vadd.f32 %v4429, 1e-05
  %v4434 = vadd.f32 %v4430, 1e-05
  %v4435 = vrsqrt.pop %v4431
  %v4436 = vmul.f32 %v4435, %v4431
  %v4437 = vmul.f32 %v4436, %v4435
  %v4438 = vmul.f32 0.5, %v4437
  %v4439 = vsub.f32 1.5, %v4438
  %v4440 = vmul.f32 %v4435, %v4439
  %vm4441 = vweird.f32 %v4431
  %vm4442 = vweird.f32 %v4435
  %vm4443 = vmor %vm4441, %vm4442
  %v4444 = vsel %vm4443, %v4435, %v4440
  %v4445 = vrsqrt.pop %v4432
  %v4446 = vmul.f32 %v4445, %v4432
  %v4447 = vmul.f32 %v4446, %v4445
  %v4448 = vmul.f32 0.5, %v4447
  %v4449 = vsub.f32 1.5, %v4448
  %v4450 = vmul.f32 %v4445, %v4449
  %vm4451 = vweird.f32 %v4432
  %vm4452 = vweird.f32 %v4445
  %vm4453 = vmor %vm4451, %vm4452
  %v4454 = vsel %vm4453, %v4445, %v4450
  %v4455 = vrsqrt.pop %v4433
  %v4456 = vmul.f32 %v4455, %v4433
  %v4457 = vmul.f32 %v4456, %v4455
  %v4458 = vmul.f32 0.5, %v4457
  %v4459 = vsub.f32 1.5, %v4458
  %v4460 = vmul.f32 %v4455, %v4459
  %vm4461 = vweird.f32 %v4433
  %vm4462 = vweird.f32 %v4455
  %vm4463 = vmor %vm4461, %vm4462
  %v4464 = vsel %vm4463, %v4455, %v4460
  %v4465 = vrsqrt.pop %v4434
  %v4466 = vmul.f32 %v4465, %v4434
  %v4467 = vmul.f32 %v4466, %v4465
  %v4468 = vmul.f32 0.5, %v4467
  %v4469 = vsub.f32 1.5, %v4468
  %v4470 = vmul.f32 %v4465, %v4469
  %vm4471 = vweird.f32 %v4434
  %vm4472 = vweird.f32 %v4465
  %vm4473 = vmor %vm4471, %vm4472
  %v4474 = vsel %vm4473, %v4465, %v4470
  %v4475 = vmul.f32 %v4407, %v4444
  %v4476 = vmul.f32 %v4408, %v4454
  %v4477 = vmul.f32 %v4409, %v4464
  %v4478 = vmul.f32 %v4410, %v4474
  %v4479 = vperm.slane %v3405, 1
  %v4480 = vmul.f32 %v4475, %v4479
  %v4481 = vmul.f32 %v4476, %v4479
  %v4482 = vmul.f32 %v4477, %v4479
  %v4483 = vmul.f32 %v4478, %v4479
  %v4484 = vld [vmem:[%s3481] sm:$0xff]
  %v4485 = vld [vmem:[%s3481 + $0x8] sm:$0xff]
  %v4486 = vld [vmem:[%s3481 + $0x10] sm:$0xff]
  %v4487 = vld [vmem:[%s3481 + $0x20] sm:$0xf]
  %v4488 = vld [vmem:[%s3481 + $0x28] sm:$0xf]
  %v4489 = vld [vmem:[%s3481 + $0x30] sm:$0xf]
  %v4490 = vperm.slane %v3405, 3
  %v4491 = vperm.slane %v3406, 3
  %v4492 = vperm.slane %v3407, 3
  %v4494 = vsel %vm111, %v4480, 0
  %v4497 = vsel %vm111, %v4481, 0
  %v4500 = vsel %vm111, %v4482, 0
  %v4503 = vsel %vm111, %v4483, 0
  %v4506 = vsel %vm202, %v4487, 0
  %v4509 = vsel %vm202, %v4488, 0
  %v4512 = vsel %vm202, %v4489, 0
  %4514 = vmatpush.msra.mxu0 0.0
  %4515 = vmatpush.msra.mxu0 0.0
  %4516 = vmatpush.msra.mxu0 0.0
  %4517 = vmatpush.msra.mxu0 0.0
  %4518 = vmatpush.msra.mxu0 0.0
  %4519 = vmatpush.msra.mxu0 0.0
  %4520 = vmatpush.msra.mxu0 0.0
  %4521 = vmatpush.msra.mxu0 0.0
  %4522 = vmatpush.msra.mxu0 0.0
  %4523 = vmatpush.msra.mxu0 0.0
  %4524 = vmatpush.msra.mxu0 0.0
  %4525 = vmatpush.msra.mxu0 0.0
  %4526 = vmatpush.msra.mxu0 0.0
  %4527 = vmatpush.msra.mxu0 0.0
  %4528 = vmatpush.msra.mxu0 %v4506
  %4529 = vmatpush.msra.mxu0 %v4484
  %4530 = vmatmul.f32.gmra.mxu0 %v4494
  %v4531 = vpop.f32.mrf.mxu0
  %v4532 = vadd.f32 %v4490, %v4531
  %4533 = vmatmul.f32.gmra.mxu0 %v4497
  %v4534 = vpop.f32.mrf.mxu0
  %v4535 = vadd.f32 %v4490, %v4534
  %4536 = vmatmul.f32.gmra.mxu0 %v4500
  %v4537 = vpop.f32.mrf.mxu0
  %v4538 = vadd.f32 %v4490, %v4537
  %4539 = vmatmul.f32.gmra.mxu0 %v4503
  %v4540 = vpop.f32.mrf.mxu0
  %v4541 = vadd.f32 %v4490, %v4540
  %4542 = vdwg.mxu0
  %4543 = vmatpush.msra.mxu0 0.0
  %4544 = vmatpush.msra.mxu0 0.0
  %4545 = vmatpush.msra.mxu0 0.0
  %4546 = vmatpush.msra.mxu0 0.0
  %4547 = vmatpush.msra.mxu0 0.0
  %4548 = vmatpush.msra.mxu0 0.0
  %4549 = vmatpush.msra.mxu0 0.0
  %4550 = vmatpush.msra.mxu0 0.0
  %4551 = vmatpush.msra.mxu0 0.0
  %4552 = vmatpush.msra.mxu0 0.0
  %4553 = vmatpush.msra.mxu0 0.0
  %4554 = vmatpush.msra.mxu0 0.0
  %4555 = vmatpush.msra.mxu0 0.0
  %4556 = vmatpush.msra.mxu0 0.0
  %4557 = vmatpush.msra.mxu0 %v4509
  %4558 = vmatpush.msra.mxu0 %v4485
  %4559 = vmatmul.f32.gmra.mxu0 %v4494
  %v4560 = vpop.f32.mrf.mxu0
  %v4561 = vadd.f32 %v4491, %v4560
  %4562 = vmatmul.f32.gmra.mxu0 %v4497
  %v4563 = vpop.f32.mrf.mxu0
  %v4564 = vadd.f32 %v4491, %v4563
  %4565 = vmatmul.f32.gmra.mxu0 %v4500
  %v4566 = vpop.f32.mrf.mxu0
  %v4567 = vadd.f32 %v4491, %v4566
  %4568 = vmatmul.f32.gmra.mxu0 %v4503
  %v4569 = vpop.f32.mrf.mxu0
  %v4570 = vadd.f32 %v4491, %v4569
  %4571 = vdwg.mxu0
  %4572 = vmatpush.msra.mxu0 0.0
  %4573 = vmatpush.msra.mxu0 0.0
  %4574 = vmatpush.msra.mxu0 0.0
  %4575 = vmatpush.msra.mxu0 0.0
  %4576 = vmatpush.msra.mxu0 0.0
  %4577 = vmatpush.msra.mxu0 0.0
  %4578 = vmatpush.msra.mxu0 0.0
  %4579 = vmatpush.msra.mxu0 0.0
  %4580 = vmatpush.msra.mxu0 0.0
  %4581 = vmatpush.msra.mxu0 0.0
  %4582 = vmatpush.msra.mxu0 0.0
  %4583 = vmatpush.msra.mxu0 0.0
  %4584 = vmatpush.msra.mxu0 0.0
  %4585 = vmatpush.msra.mxu0 0.0
  %4586 = vmatpush.msra.mxu0 %v4512
  %4587 = vmatpush.msra.mxu0 %v4486
  %4588 = vmatmul.f32.gmra.mxu0 %v4494
  %v4589 = vpop.f32.mrf.mxu0
  %v4590 = vadd.f32 %v4492, %v4589
  %4591 = vmatmul.f32.gmra.mxu0 %v4497
  %v4592 = vpop.f32.mrf.mxu0
  %v4593 = vadd.f32 %v4492, %v4592
  %4594 = vmatmul.f32.gmra.mxu0 %v4500
  %v4595 = vpop.f32.mrf.mxu0
  %v4596 = vadd.f32 %v4492, %v4595
  %4597 = vmatmul.f32.gmra.mxu0 %v4503
  %v4598 = vpop.f32.mrf.mxu0
  %v4599 = vadd.f32 %v4492, %v4598
  %4600 = vdwg.mxu0
  %v4601 = vmul.f32 %v4532, 0.5
  %v4602 = vmul.f32 %v4561, 0.5
  %v4603 = vmul.f32 %v4590, 0.5
  %v4604 = vmul.f32 %v4535, 0.5
  %v4605 = vmul.f32 %v4564, 0.5
  %v4606 = vmul.f32 %v4593, 0.5
  %v4607 = vmul.f32 %v4538, 0.5
  %v4608 = vmul.f32 %v4567, 0.5
  %v4609 = vmul.f32 %v4596, 0.5
  %v4610 = vmul.f32 %v4541, 0.5
  %v4611 = vmul.f32 %v4570, 0.5
  %v4612 = vmul.f32 %v4599, 0.5
  %v4613 = vmul.f32 %v4532, 0.044715
  %v4614 = vmul.f32 %v4561, 0.044715
  %v4615 = vmul.f32 %v4590, 0.044715
  %v4616 = vmul.f32 %v4535, 0.044715
  %v4617 = vmul.f32 %v4564, 0.044715
  %v4618 = vmul.f32 %v4593, 0.044715
  %v4619 = vmul.f32 %v4538, 0.044715
  %v4620 = vmul.f32 %v4567, 0.044715
  %v4621 = vmul.f32 %v4596, 0.044715
  %v4622 = vmul.f32 %v4541, 0.044715
  %v4623 = vmul.f32 %v4570, 0.044715
  %v4624 = vmul.f32 %v4599, 0.044715
  %v4625 = vmul.f32 %v4613, %v4532
  %v4626 = vmul.f32 %v4614, %v4561
  %v4627 = vmul.f32 %v4615, %v4590
  %v4628 = vmul.f32 %v4616, %v4535
  %v4629 = vmul.f32 %v4617, %v4564
  %v4630 = vmul.f32 %v4618, %v4593
  %v4631 = vmul.f32 %v4619, %v4538
  %v4632 = vmul.f32 %v4620, %v4567
  %v4633 = vmul.f32 %v4621, %v4596
  %v4634 = vmul.f32 %v4622, %v4541
  %v4635 = vmul.f32 %v4623, %v4570
  %v4636 = vmul.f32 %v4624, %v4599
  %v4637 = vmul.f32 %v4625, %v4532
  %v4638 = vmul.f32 %v4626, %v4561
  %v4639 = vmul.f32 %v4627, %v4590
  %v4640 = vmul.f32 %v4628, %v4535
  %v4641 = vmul.f32 %v4629, %v4564
  %v4642 = vmul.f32 %v4630, %v4593
  %v4643 = vmul.f32 %v4631, %v4538
  %v4644 = vmul.f32 %v4632, %v4567
  %v4645 = vmul.f32 %v4633, %v4596
  %v4646 = vmul.f32 %v4634, %v4541
  %v4647 = vmul.f32 %v4635, %v4570
  %v4648 = vmul.f32 %v4636, %v4599
  %v4649 = vadd.f32 %v4532, %v4637
  %v4650 = vadd.f32 %v4561, %v4638
  %v4651 = vadd.f32 %v4590, %v4639
  %v4652 = vadd.f32 %v4535, %v4640
  %v4653 = vadd.f32 %v4564, %v4641
  %v4654 = vadd.f32 %v4593, %v4642
  %v4655 = vadd.f32 %v4538, %v4643
  %v4656 = vadd.f32 %v4567, %v4644
  %v4657 = vadd.f32 %v4596, %v4645
  %v4658 = vadd.f32 %v4541, %v4646
  %v4659 = vadd.f32 %v4570, %v4647
  %v4660 = vadd.f32 %v4599, %v4648
  %v4661 = vmul.f32 %v4649, 0.7978846
  %v4662 = vmul.f32 %v4650, 0.7978846
  %v4663 = vmul.f32 %v4651, 0.7978846
  %v4664 = vmul.f32 %v4652, 0.7978846
  %v4665 = vmul.f32 %v4653, 0.7978846
  %v4666 = vmul.f32 %v4654, 0.7978846
  %v4667 = vmul.f32 %v4655, 0.7978846
  %v4668 = vmul.f32 %v4656, 0.7978846
  %v4669 = vmul.f32 %v4657, 0.7978846
  %v4670 = vmul.f32 %v4658, 0.7978846
  %v4671 = vmul.f32 %v4659, 0.7978846
  %v4672 = vmul.f32 %v4660, 0.7978846
  %v4673 = vtanh.pop %v4661
  %v4674 = vtanh.pop %v4662
  %v4675 = vtanh.pop %v4663
  %v4676 = vtanh.pop %v4664
  %v4677 = vtanh.pop %v4665
  %v4678 = vtanh.pop %v4666
  %v4679 = vtanh.pop %v4667
  %v4680 = vtanh.pop %v4668
  %v4681 = vtanh.pop %v4669
  %v4682 = vtanh.pop %v4670
  %v4683 = vtanh.pop %v4671
  %v4684 = vtanh.pop %v4672
  %v4685 = vadd.f32 %v4673, 1.0
  %v4686 = vadd.f32 %v4674, 1.0
  %v4687 = vadd.f32 %v4675, 1.0
  %v4688 = vadd.f32 %v4676, 1.0
  %v4689 = vadd.f32 %v4677, 1.0
  %v4690 = vadd.f32 %v4678, 1.0
  %v4691 = vadd.f32 %v4679, 1.0
  %v4692 = vadd.f32 %v4680, 1.0
  %v4693 = vadd.f32 %v4681, 1.0
  %v4694 = vadd.f32 %v4682, 1.0
  %v4695 = vadd.f32 %v4683, 1.0
  %v4696 = vadd.f32 %v4684, 1.0
  %v4697 = vmul.f32 %v4601, %v4685
  %v4698 = vmul.f32 %v4602, %v4686
  %v4699 = vmul.f32 %v4603, %v4687
  %v4700 = vmul.f32 %v4604, %v4688
  %v4701 = vmul.f32 %v4605, %v4689
  %v4702 = vmul.f32 %v4606, %v4690
  %v4703 = vmul.f32 %v4607, %v4691
  %v4704 = vmul.f32 %v4608, %v4692
  %v4705 = vmul.f32 %v4609, %v4693
  %v4706 = vmul.f32 %v4610, %v4694
  %v4707 = vmul.f32 %v4611, %v4695
  %v4708 = vmul.f32 %v4612, %v4696
  %v4709 = vadd.f32 %v4697, %v4698
  %v4710 = vadd.f32 %v4709, %v4699
  %4711 = vadd.xlane.f32.xlu0 %v4710
  %v4712 = vpop.xlane.xlu0 %4711
  %v4713 = vadd.f32 %v4700, %v4701
  %v4714 = vadd.f32 %v4713, %v4702
  %4715 = vadd.xlane.f32.xlu0 %v4714
  %v4716 = vpop.xlane.xlu0 %4715
  %v4717 = vadd.f32 %v4703, %v4704
  %v4718 = vadd.f32 %v4717, %v4705
  %4719 = vadd.xlane.f32.xlu0 %v4718
  %v4720 = vpop.xlane.xlu0 %4719
  %v4721 = vadd.f32 %v4706, %v4707
  %v4722 = vadd.f32 %v4721, %v4708
  %4723 = vadd.xlane.f32.xlu0 %v4722
  %v4724 = vpop.xlane.xlu0 %4723
  %v4725 = vmul.f32 %v4712, 0.0033333334
  %v4726 = vmul.f32 %v4716, 0.0033333334
  %v4727 = vmul.f32 %v4720, 0.0033333334
  %v4728 = vmul.f32 %v4724, 0.0033333334
  %v4729 = vsub.f32 %v4697, %v4725
  %v4730 = vsub.f32 %v4698, %v4725
  %v4731 = vsub.f32 %v4699, %v4725
  %v4732 = vsub.f32 %v4700, %v4726
  %v4733 = vsub.f32 %v4701, %v4726
  %v4734 = vsub.f32 %v4702, %v4726
  %v4735 = vsub.f32 %v4703, %v4727
  %v4736 = vsub.f32 %v4704, %v4727
  %v4737 = vsub.f32 %v4705, %v4727
  %v4738 = vsub.f32 %v4706, %v4728
  %v4739 = vsub.f32 %v4707, %v4728
  %v4740 = vsub.f32 %v4708, %v4728
  %v4741 = vmul.f32 %v4729, %v101
  %v4742 = vmul.f32 %v4730, %v102
  %v4743 = vmul.f32 %v4731, %v103
  %v4744 = vmul.f32 %v4732, %v101
  %v4745 = vmul.f32 %v4733, %v102
  %v4746 = vmul.f32 %v4734, %v103
  %v4747 = vmul.f32 %v4735, %v101
  %v4748 = vmul.f32 %v4736, %v102
  %v4749 = vmul.f32 %v4737, %v103
  %v4750 = vmul.f32 %v4738, %v101
  %v4751 = vmul.f32 %v4739, %v102
  %v4752 = vmul.f32 %v4740, %v103
  %v4753 = vmul.f32 %v4741, %v4741
  %v4754 = vmul.f32 %v4742, %v4742
  %v4755 = vmul.f32 %v4743, %v4743
  %v4756 = vmul.f32 %v4744, %v4744
  %v4757 = vmul.f32 %v4745, %v4745
  %v4758 = vmul.f32 %v4746, %v4746
  %v4759 = vmul.f32 %v4747, %v4747
  %v4760 = vmul.f32 %v4748, %v4748
  %v4761 = vmul.f32 %v4749, %v4749
  %v4762 = vmul.f32 %v4750, %v4750
  %v4763 = vmul.f32 %v4751, %v4751
  %v4764 = vmul.f32 %v4752, %v4752
  %v4765 = vadd.f32 %v4753, %v4754
  %v4766 = vadd.f32 %v4765, %v4755
  %4767 = vadd.xlane.f32.xlu0 %v4766
  %v4768 = vpop.xlane.xlu0 %4767
  %v4769 = vadd.f32 %v4756, %v4757
  %v4770 = vadd.f32 %v4769, %v4758
  %4771 = vadd.xlane.f32.xlu0 %v4770
  %v4772 = vpop.xlane.xlu0 %4771
  %v4773 = vadd.f32 %v4759, %v4760
  %v4774 = vadd.f32 %v4773, %v4761
  %4775 = vadd.xlane.f32.xlu0 %v4774
  %v4776 = vpop.xlane.xlu0 %4775
  %v4777 = vadd.f32 %v4762, %v4763
  %v4778 = vadd.f32 %v4777, %v4764
  %4779 = vadd.xlane.f32.xlu0 %v4778
  %v4780 = vpop.xlane.xlu0 %4779
  %v4781 = vmul.f32 %v4768, 0.0033333334
  %v4782 = vmul.f32 %v4772, 0.0033333334
  %v4783 = vmul.f32 %v4776, 0.0033333334
  %v4784 = vmul.f32 %v4780, 0.0033333334
  %v4785 = vadd.f32 %v4781, 1e-05
  %v4786 = vadd.f32 %v4782, 1e-05
  %v4787 = vadd.f32 %v4783, 1e-05
  %v4788 = vadd.f32 %v4784, 1e-05
  %v4789 = vrsqrt.pop %v4785
  %v4790 = vmul.f32 %v4789, %v4785
  %v4791 = vmul.f32 %v4790, %v4789
  %v4792 = vmul.f32 0.5, %v4791
  %v4793 = vsub.f32 1.5, %v4792
  %v4794 = vmul.f32 %v4789, %v4793
  %vm4795 = vweird.f32 %v4785
  %vm4796 = vweird.f32 %v4789
  %vm4797 = vmor %vm4795, %vm4796
  %v4798 = vsel %vm4797, %v4789, %v4794
  %v4799 = vrsqrt.pop %v4786
  %v4800 = vmul.f32 %v4799, %v4786
  %v4801 = vmul.f32 %v4800, %v4799
  %v4802 = vmul.f32 0.5, %v4801
  %v4803 = vsub.f32 1.5, %v4802
  %v4804 = vmul.f32 %v4799, %v4803
  %vm4805 = vweird.f32 %v4786
  %vm4806 = vweird.f32 %v4799
  %vm4807 = vmor %vm4805, %vm4806
  %v4808 = vsel %vm4807, %v4799, %v4804
  %v4809 = vrsqrt.pop %v4787
  %v4810 = vmul.f32 %v4809, %v4787
  %v4811 = vmul.f32 %v4810, %v4809
  %v4812 = vmul.f32 0.5, %v4811
  %v4813 = vsub.f32 1.5, %v4812
  %v4814 = vmul.f32 %v4809, %v4813
  %vm4815 = vweird.f32 %v4787
  %vm4816 = vweird.f32 %v4809
  %vm4817 = vmor %vm4815, %vm4816
  %v4818 = vsel %vm4817, %v4809, %v4814
  %v4819 = vrsqrt.pop %v4788
  %v4820 = vmul.f32 %v4819, %v4788
  %v4821 = vmul.f32 %v4820, %v4819
  %v4822 = vmul.f32 0.5, %v4821
  %v4823 = vsub.f32 1.5, %v4822
  %v4824 = vmul.f32 %v4819, %v4823
  %vm4825 = vweird.f32 %v4788
  %vm4826 = vweird.f32 %v4819
  %vm4827 = vmor %vm4825, %vm4826
  %v4828 = vsel %vm4827, %v4819, %v4824
  %v4829 = vmul.f32 %v4729, %v4798
  %v4830 = vmul.f32 %v4730, %v4798
  %v4831 = vmul.f32 %v4731, %v4798
  %v4832 = vmul.f32 %v4732, %v4808
  %v4833 = vmul.f32 %v4733, %v4808
  %v4834 = vmul.f32 %v4734, %v4808
  %v4835 = vmul.f32 %v4735, %v4818
  %v4836 = vmul.f32 %v4736, %v4818
  %v4837 = vmul.f32 %v4737, %v4818
  %v4838 = vmul.f32 %v4738, %v4828
  %v4839 = vmul.f32 %v4739, %v4828
  %v4840 = vmul.f32 %v4740, %v4828
  %v4841 = vperm.slane %v3405, 4
  %v4842 = vperm.slane %v3406, 4
  %v4843 = vperm.slane %v3407, 4
  %v4844 = vmul.f32 %v4829, %v4841
  %v4845 = vmul.f32 %v4830, %v4842
  %v4846 = vmul.f32 %v4831, %v4843
  %v4847 = vmul.f32 %v4832, %v4841
  %v4848 = vmul.f32 %v4833, %v4842
  %v4849 = vmul.f32 %v4834, %v4843
  %v4850 = vmul.f32 %v4835, %v4841
  %v4851 = vmul.f32 %v4836, %v4842
  %v4852 = vmul.f32 %v4837, %v4843
  %v4853 = vmul.f32 %v4838, %v4841
  %v4854 = vmul.f32 %v4839, %v4842
  %v4855 = vmul.f32 %v4840, %v4843
  %v4856 = vperm.slane %v3405, 5
  %v4857 = vperm.slane %v3406, 5
  %v4858 = vperm.slane %v3407, 5
  %v4859 = vadd.f32 %v4844, %v4856
  %v4860 = vadd.f32 %v4845, %v4857
  %v4861 = vadd.f32 %v4846, %v4858
  %v4862 = vadd.f32 %v4847, %v4856
  %v4863 = vadd.f32 %v4848, %v4857
  %v4864 = vadd.f32 %v4849, %v4858
  %v4865 = vadd.f32 %v4850, %v4856
  %v4866 = vadd.f32 %v4851, %v4857
  %v4867 = vadd.f32 %v4852, %v4858
  %v4868 = vadd.f32 %v4853, %v4856
  %v4869 = vadd.f32 %v4854, %v4857
  %v4870 = vadd.f32 %v4855, %v4858
  %v4871 = vld [vmem:[%s4354 + $0x18] sm:$0xff]
  %v4872 = vld [vmem:[%s4354 + $0x20] sm:$0xff]
  %v4873 = vld [vmem:[%s4354 + $0x28] sm:$0xff]
  %v4874 = vld [vmem:[%s4354 + $0x30] sm:$0xff]
  %v4875 = vld [vmem:[%s4354 + $0x38] sm:$0xff]
  %v4876 = vld [vmem:[%s4354 + $0x40] sm:$0xff]
  %v4877 = vld [vmem:[%s4354 + $0x48] sm:$0xff]
  %v4878 = vld [vmem:[%s4354 + $0x50] sm:$0xff]
  %v4879 = vld [vmem:[%s4354 + $0x58] sm:$0xff]
  %v4880 = vld [vmem:[%s4354 + $0x60] sm:$0xff]
  %v4881 = vld [vmem:[%s4354 + $0x68] sm:$0xff]
  %v4882 = vld [vmem:[%s4354 + $0x70] sm:$0xff]
  %v4883 = vld [vmem:[%s4354 + $0x78] sm:$0xff]
  %v4884 = vld [vmem:[%s4354 + $0x80] sm:$0xff]
  %v4885 = vld [vmem:[%s4354 + $0x88] sm:$0xff]
  %v4886 = vld [vmem:[%s4354 + $0x90] sm:$0xff]
  %v4887 = vld [vmem:[%s4354 + $0x98] sm:$0xff]
  %v4888 = vld [vmem:[%s4354 + $0xa0] sm:$0xff]
  %v4889 = vld [vmem:[%s4354 + $0xa8] sm:$0xff]
  %v4890 = vld [vmem:[%s4354 + $0xb0] sm:$0xff]
  %v4891 = vld [vmem:[%s4354 + $0xb8] sm:$0xff]
  %v4892 = vld [vmem:[%s4354 + $0xc0] sm:$0xff]
  %v4893 = vld [vmem:[%s4354 + $0xc8] sm:$0xff]
  %v4894 = vld [vmem:[%s4354 + $0xd0] sm:$0xff]
  %v4895 = vld [vmem:[%s4354 + $0xd8] sm:$0xff]
  %v4896 = vld [vmem:[%s4354 + $0xe0] sm:$0xff]
  %v4897 = vld [vmem:[%s4354 + $0xe8] sm:$0xff]
  %v4898 = vld [vmem:[%s4354 + $0xf0] sm:$0xff]
  %v4899 = vld [vmem:[%s4354 + $0xf8] sm:$0xff]
  %v4900 = vld [vmem:[%s4354 + $0x100] sm:$0xff]
  %v4901 = vld [vmem:[%s4354 + $0x108] sm:$0xff]
  %v4902 = vld [vmem:[%s4354 + $0x110] sm:$0xff]
  %v4903 = vld [vmem:[%s4354 + $0x118] sm:$0xff]
  %v4904 = vld [vmem:[%s4354 + $0x120] sm:$0xff]
  %v4905 = vld [vmem:[%s4354 + $0x128] sm:$0xff]
  %v4906 = vld [vmem:[%s4354 + $0x130] sm:$0xff]
  %v4907 = vld [vmem:[%s4354 + $0x138] sm:$0xff]
  %v4908 = vld [vmem:[%s4354 + $0x140] sm:$0xff]
  %v4909 = vld [vmem:[%s4354 + $0x148] sm:$0xff]
  %v4910 = vld [vmem:[%s4354 + $0x150] sm:$0xff]
  %v4911 = vld [vmem:[%s4354 + $0x158] sm:$0xff]
  %v4912 = vld [vmem:[%s4354 + $0x160] sm:$0xff]
  %v4913 = vld [vmem:[%s4354 + $0x168] sm:$0xff]
  %v4914 = vld [vmem:[%s4354 + $0x170] sm:$0xff]
  %v4915 = vld [vmem:[%s4354 + $0x178] sm:$0xff]
  %v4916 = vld [vmem:[%s4354 + $0x180] sm:$0xff]
  %v4917 = vld [vmem:[%s4354 + $0x188] sm:$0xff]
  %v4918 = vld [vmem:[%s4354 + $0x190] sm:$0xff]
  %4919 = vmatpush.msra.mxu0 %v4886
  %4920 = vmatpush.msra.mxu0 %v4885
  %4921 = vmatpush.msra.mxu0 %v4884
  %4922 = vmatpush.msra.mxu0 %v4883
  %4923 = vmatpush.msra.mxu0 %v4882
  %4924 = vmatpush.msra.mxu0 %v4881
  %4925 = vmatpush.msra.mxu0 %v4880
  %4926 = vmatpush.msra.mxu0 %v4879
  %4927 = vmatpush.msra.mxu0 %v4878
  %4928 = vmatpush.msra.mxu0 %v4877
  %4929 = vmatpush.msra.mxu0 %v4876
  %4930 = vmatpush.msra.mxu0 %v4875
  %4931 = vmatpush.msra.mxu0 %v4874
  %4932 = vmatpush.msra.mxu0 %v4873
  %4933 = vmatpush.msra.mxu0 %v4872
  %4934 = vmatpush.msra.mxu0 %v4871
  %4935 = vmatmul.f32.gmra.mxu0 %v4859
  %v4936 = vpop.f32.mrf.mxu0
  %v4937 = vadd.f32 0.0, %v4936
  %4938 = vmatmul.f32.gmra.mxu0 %v4862
  %v4939 = vpop.f32.mrf.mxu0
  %v4940 = vadd.f32 0.0, %v4939
  %4941 = vmatmul.f32.gmra.mxu0 %v4865
  %v4942 = vpop.f32.mrf.mxu0
  %v4943 = vadd.f32 0.0, %v4942
  %4944 = vmatmul.f32.gmra.mxu0 %v4868
  %v4945 = vpop.f32.mrf.mxu0
  %v4946 = vadd.f32 0.0, %v4945
  %4947 = vdwg.mxu0
  %4948 = vmatpush.msra.mxu0 %v4902
  %4949 = vmatpush.msra.mxu0 %v4901
  %4950 = vmatpush.msra.mxu0 %v4900
  %4951 = vmatpush.msra.mxu0 %v4899
  %4952 = vmatpush.msra.mxu0 %v4898
  %4953 = vmatpush.msra.mxu0 %v4897
  %4954 = vmatpush.msra.mxu0 %v4896
  %4955 = vmatpush.msra.mxu0 %v4895
  %4956 = vmatpush.msra.mxu0 %v4894
  %4957 = vmatpush.msra.mxu0 %v4893
  %4958 = vmatpush.msra.mxu0 %v4892
  %4959 = vmatpush.msra.mxu0 %v4891
  %4960 = vmatpush.msra.mxu0 %v4890
  %4961 = vmatpush.msra.mxu0 %v4889
  %4962 = vmatpush.msra.mxu0 %v4888
  %4963 = vmatpush.msra.mxu0 %v4887
  %4964 = vmatmul.f32.gmra.mxu0 %v4860
  %v4965 = vpop.f32.mrf.mxu0
  %v4966 = vadd.f32 %v4937, %v4965
  %4967 = vmatmul.f32.gmra.mxu0 %v4863
  %v4968 = vpop.f32.mrf.mxu0
  %v4969 = vadd.f32 %v4940, %v4968
  %4970 = vmatmul.f32.gmra.mxu0 %v4866
  %v4971 = vpop.f32.mrf.mxu0
  %v4972 = vadd.f32 %v4943, %v4971
  %4973 = vmatmul.f32.gmra.mxu0 %v4869
  %v4974 = vpop.f32.mrf.mxu0
  %v4975 = vadd.f32 %v4946, %v4974
  %4976 = vdwg.mxu0
  %4977 = vmatpush.msra.mxu0 %v4918
  %4978 = vmatpush.msra.mxu0 %v4917
  %4979 = vmatpush.msra.mxu0 %v4916
  %4980 = vmatpush.msra.mxu0 %v4915
  %4981 = vmatpush.msra.mxu0 %v4914
  %4982 = vmatpush.msra.mxu0 %v4913
  %4983 = vmatpush.msra.mxu0 %v4912
  %4984 = vmatpush.msra.mxu0 %v4911
  %4985 = vmatpush.msra.mxu0 %v4910
  %4986 = vmatpush.msra.mxu0 %v4909
  %4987 = vmatpush.msra.mxu0 %v4908
  %4988 = vmatpush.msra.mxu0 %v4907
  %4989 = vmatpush.msra.mxu0 %v4906
  %4990 = vmatpush.msra.mxu0 %v4905
  %4991 = vmatpush.msra.mxu0 %v4904
  %4992 = vmatpush.msra.mxu0 %v4903
  %4993 = vmatmul.f32.gmra.mxu0 %v4861
  %v4994 = vpop.f32.mrf.mxu0
  %v4995 = vadd.f32 %v4966, %v4994
  %4996 = vmatmul.f32.gmra.mxu0 %v4864
  %v4997 = vpop.f32.mrf.mxu0
  %v4998 = vadd.f32 %v4969, %v4997
  %4999 = vmatmul.f32.gmra.mxu0 %v4867
  %v5000 = vpop.f32.mrf.mxu0
  %v5001 = vadd.f32 %v4972, %v5000
  %5002 = vmatmul.f32.gmra.mxu0 %v4870
  %v5003 = vpop.f32.mrf.mxu0
  %v5004 = vadd.f32 %v4975, %v5003
  %5005 = vdwg.mxu0
  %v5006 = vadd.f32 %v4407, %v4995
  %v5007 = vadd.f32 %v4408, %v4998
  %v5008 = vadd.f32 %v4409, %v5001
  %v5009 = vadd.f32 %v4410, %v5004
  %v5010 = vperm.slane %v3405, 2
  %v5011 = vadd.f32 %v5006, %v5010
  %v5012 = vadd.f32 %v5007, %v5010
  %v5013 = vadd.f32 %v5008, %v5010
  %v5014 = vadd.f32 %v5009, %v5010
  %v5015 = vmul.f32 %v5011, %v5011
  %v5016 = vmul.f32 %v5012, %v5012
  %v5017 = vmul.f32 %v5013, %v5013
  %v5018 = vmul.f32 %v5014, %v5014
  %v5019 = vsel %vm111, %v5015, 0.0
  %5020 = vadd.xlane.f32.xlu0 %v5019
  %v5021 = vpop.xlane.xlu0 %5020
  %v5022 = vsel %vm111, %v5016, 0.0
  %5023 = vadd.xlane.f32.xlu0 %v5022
  %v5024 = vpop.xlane.xlu0 %5023
  %v5025 = vsel %vm111, %v5017, 0.0
  %5026 = vadd.xlane.f32.xlu0 %v5025
  %v5027 = vpop.xlane.xlu0 %5026
  %v5028 = vsel %vm111, %v5018, 0.0
  %5029 = vadd.xlane.f32.xlu0 %v5028
  %v5030 = vpop.xlane.xlu0 %5029
  %v5031 = vmul.f32 %v5021, %v130
  %v5032 = vmul.f32 %v5024, %v130
  %v5033 = vmul.f32 %v5027, %v130
  %v5034 = vmul.f32 %v5030, %v130
  %v5035 = vadd.f32 %v5031, 1e-05
  %v5036 = vadd.f32 %v5032, 1e-05
  %v5037 = vadd.f32 %v5033, 1e-05
  %v5038 = vadd.f32 %v5034, 1e-05
  %v5039 = vrsqrt.pop %v5035
  %v5040 = vmul.f32 %v5039, %v5035
  %v5041 = vmul.f32 %v5040, %v5039
  %v5042 = vmul.f32 0.5, %v5041
  %v5043 = vsub.f32 1.5, %v5042
  %v5044 = vmul.f32 %v5039, %v5043
  %vm5045 = vweird.f32 %v5035
  %vm5046 = vweird.f32 %v5039
  %vm5047 = vmor %vm5045, %vm5046
  %v5048 = vsel %vm5047, %v5039, %v5044
  %v5049 = vrsqrt.pop %v5036
  %v5050 = vmul.f32 %v5049, %v5036
  %v5051 = vmul.f32 %v5050, %v5049
  %v5052 = vmul.f32 0.5, %v5051
  %v5053 = vsub.f32 1.5, %v5052
  %v5054 = vmul.f32 %v5049, %v5053
  %vm5055 = vweird.f32 %v5036
  %vm5056 = vweird.f32 %v5049
  %vm5057 = vmor %vm5055, %vm5056
  %v5058 = vsel %vm5057, %v5049, %v5054
  %v5059 = vrsqrt.pop %v5037
  %v5060 = vmul.f32 %v5059, %v5037
  %v5061 = vmul.f32 %v5060, %v5059
  %v5062 = vmul.f32 0.5, %v5061
  %v5063 = vsub.f32 1.5, %v5062
  %v5064 = vmul.f32 %v5059, %v5063
  %vm5065 = vweird.f32 %v5037
  %vm5066 = vweird.f32 %v5059
  %vm5067 = vmor %vm5065, %vm5066
  %v5068 = vsel %vm5067, %v5059, %v5064
  %v5069 = vrsqrt.pop %v5038
  %v5070 = vmul.f32 %v5069, %v5038
  %v5071 = vmul.f32 %v5070, %v5069
  %v5072 = vmul.f32 0.5, %v5071
  %v5073 = vsub.f32 1.5, %v5072
  %v5074 = vmul.f32 %v5069, %v5073
  %vm5075 = vweird.f32 %v5038
  %vm5076 = vweird.f32 %v5069
  %vm5077 = vmor %vm5075, %vm5076
  %v5078 = vsel %vm5077, %v5069, %v5074
  %v5079 = vmul.f32 %v5011, %v5048
  %v5080 = vmul.f32 %v5012, %v5058
  %v5081 = vmul.f32 %v5013, %v5068
  %v5082 = vmul.f32 %v5014, %v5078
  %v5083 = vperm.slane %v29, 2
  %v5084 = vmul.f32 %v5079, %v5083
  %v5085 = vmul.f32 %v5080, %v5083
  %v5086 = vmul.f32 %v5081, %v5083
  %v5087 = vmul.f32 %v5082, %v5083
  %v5088 = vld [vmem:[%s4] sm:$0xff]
  %v5089 = vld [vmem:[%s4 + $0x8] sm:$0xf]
  %v5091 = vsel %vm111, %v5084, 0
  %v5094 = vsel %vm111, %v5085, 0
  %v5097 = vsel %vm111, %v5086, 0
  %v5100 = vsel %vm111, %v5087, 0
  %v5103 = vsel %vm202, %v5089, 0
  %5105 = vmatpush.msra.mxu0 0.0
  %5106 = vmatpush.msra.mxu0 0.0
  %5107 = vmatpush.msra.mxu0 0.0
  %5108 = vmatpush.msra.mxu0 0.0
  %5109 = vmatpush.msra.mxu0 0.0
  %5110 = vmatpush.msra.mxu0 0.0
  %5111 = vmatpush.msra.mxu0 0.0
  %5112 = vmatpush.msra.mxu0 0.0
  %5113 = vmatpush.msra.mxu0 0.0
  %5114 = vmatpush.msra.mxu0 0.0
  %5115 = vmatpush.msra.mxu0 0.0
  %5116 = vmatpush.msra.mxu0 0.0
  %5117 = vmatpush.msra.mxu0 0.0
  %5118 = vmatpush.msra.mxu0 0.0
  %5119 = vmatpush.msra.mxu0 %v5103
  %5120 = vmatpush.msra.mxu0 %v5088
  %5121 = vmatmul.f32.gmra.mxu0 %v5091
  %v5122 = vpop.f32.mrf.mxu0
  %v5123 = vadd.f32 0.0, %v5122
  %5124 = vmatmul.f32.gmra.mxu0 %v5094
  %v5125 = vpop.f32.mrf.mxu0
  %v5126 = vadd.f32 0.0, %v5125
  %5127 = vmatmul.f32.gmra.mxu0 %v5097
  %v5128 = vpop.f32.mrf.mxu0
  %v5129 = vadd.f32 0.0, %v5128
  %5130 = vmatmul.f32.gmra.mxu0 %v5100
  %v5131 = vpop.f32.mrf.mxu0
  %v5132 = vadd.f32 0.0, %v5131
  %5133 = vdwg.mxu0
  %vm5134 = vcmask 15360
  %v5135 = vsel %vm5134, %v5123, -inf
  %5136 = vmax.xlane.f32.xlu0 %v5135
  %v5137 = vpop.xlane.xlu0 %5136
  %v5138 = vsel %vm5134, %v5126, -inf
  %5139 = vmax.xlane.f32.xlu0 %v5138
  %v5140 = vpop.xlane.xlu0 %5139
  %v5141 = vsel %vm5134, %v5129, -inf
  %5142 = vmax.xlane.f32.xlu0 %v5141
  %v5143 = vpop.xlane.xlu0 %5142
  %v5144 = vsel %vm5134, %v5132, -inf
  %5145 = vmax.xlane.f32.xlu0 %v5144
  %v5146 = vpop.xlane.xlu0 %5145
  %v5147 = vsub.f32 %v5123, %v5137
  %v5148 = vsub.f32 %v5126, %v5140
  %v5149 = vsub.f32 %v5129, %v5143
  %v5150 = vsub.f32 %v5132, %v5146
  %v5151 = vmul.f32 %v5147, 1.442695
  %v5152 = vpow.pop %v5151
  %v5153 = vmul.f32 %v5148, 1.442695
  %v5154 = vpow.pop %v5153
  %v5155 = vmul.f32 %v5149, 1.442695
  %v5156 = vpow.pop %v5155
  %v5157 = vmul.f32 %v5150, 1.442695
  %v5158 = vpow.pop %v5157
  %v5159 = vsel %vm5134, %v5152, 0.0
  %5160 = vadd.xlane.f32.xlu0 %v5159
  %v5161 = vpop.xlane.xlu0 %5160
  %v5162 = vsel %vm5134, %v5154, 0.0
  %5163 = vadd.xlane.f32.xlu0 %v5162
  %v5164 = vpop.xlane.xlu0 %5163
  %v5165 = vsel %vm5134, %v5156, 0.0
  %5166 = vadd.xlane.f32.xlu0 %v5165
  %v5167 = vpop.xlane.xlu0 %5166
  %v5168 = vsel %vm5134, %v5158, 0.0
  %5169 = vadd.xlane.f32.xlu0 %v5168
  %v5170 = vpop.xlane.xlu0 %5169
  %v5171 = vlog2.pop %v5161
  %v5172 = vmul.f32 %v5171, 0.6931472
  %v5173 = vlog2.pop %v5164
  %v5174 = vmul.f32 %v5173, 0.6931472
  %v5175 = vlog2.pop %v5167
  %v5176 = vmul.f32 %v5175, 0.6931472
  %v5177 = vlog2.pop %v5170
  %v5178 = vmul.f32 %v5177, 0.6931472
  %v5179 = vadd.f32 %v5172, %v5137
  %v5180 = vadd.f32 %v5174, %v5140
  %v5181 = vadd.f32 %v5176, %v5143
  %v5182 = vadd.f32 %v5178, %v5146
  %v5183 = vsub.f32 %v5123, %v5179
  %v5184 = vsub.f32 %v5126, %v5180
  %v5185 = vsub.f32 %v5129, %v5181
  %v5186 = vsub.f32 %v5132, %v5182
  %5187 = vst.msk [vmem:[%s8] sm:$0xff] %vm5134, %v5183
  %5188 = vst.msk [vmem:[%s8 + $0x8] sm:$0xff] %vm5134, %v5184
  %5189 = vst.msk [vmem:[%s8 + $0x10] sm:$0xff] %vm5134, %v5185
  %5190 = vst.msk [vmem:[%s8 + $0x18] sm:$0xff] %vm5134, %v5186
  // Predicated region
  $region34: #{tpu_custom_call.1} parent=0 // pred_check
    _
  $region35: #{tpu_custom_call.1} parent=0 // pred_check_branch
    %5192 = sbr.rel (0) target = $region37
  $region36: #{tpu_custom_call.1} parent=0 // pred_region
    _
  $region37: #{tpu_custom_call.1} parent=0 // pred_fallthru
    _
  // Predicated region
  $region38: #{tpu_custom_call.1} parent=0 // pred_check
    _
  $region39: #{tpu_custom_call.1} parent=0 // pred_check_branch
    %5194 = sbr.rel (0) target = $region41
  $region40: #{tpu_custom_call.1} parent=0 // pred_region
    _
  $region41: #{tpu_custom_call.1} parent=0 // pred_fallthru
    _

</llo_original>
